<compile_context>
chip_gen: v5e
topology: v5e:2x2
jax: 0.10.0
libtpu: 0.0.40
codegen_flags: <defaults>
</compile_context>

<pallas_src>
import functools

import jax
import jax.numpy as jnp
from jax import lax
from jax.experimental import pallas as pl
from jax.experimental.pallas import tpu as pltpu


_PADL = 8  # sublane-aligned left padding of the conv scratch along W (f32 tile = 8)


# ------------------------------- Pallas kernel -------------------------------

def _make_block_kernel(Ho, Wo, Cin, Cmid, Cout, Wp, has_transition):
    M = Ho * Wo

    def kernel(x_ref, w1_ref, b1_ref, w2_ref, b2_ref, w3_ref, b3_ref, *rest):
        if has_transition:
            wt_ref, bt_ref, o_ref, hp_ref, acc_ref = rest
        else:
            o_ref, hp_ref, acc_ref = rest

        # Input tile for this batch element (already strided): (Ho, Wo, Cin).
        # Wo % 8 == 0 -> the (Ho, Wo) -> (M,) merge is layout-free (no copy).
        xs = x_ref[...].reshape(M, Cin)            # f32 (kept for identity residual)
        xs_bf = xs.astype(jnp.bfloat16)            # MXU operand

        # ---- layer1: 1x1 conv (stride folded into the input) + BN + ReLU ----
        h1 = jnp.dot(xs_bf, w1_ref[...], preferred_element_type=jnp.float32)
        h1 = jnp.maximum(h1 + b1_ref[...], 0.0)

        # ---- layer2: 3x3 conv, pad=1, stride=1  + BN + ReLU ------------------
        # Zero only the halo of the padded VMEM scratch (interior is fully
        # overwritten each step) -- much less vst traffic than a full clear.
        band = jnp.zeros((Ho + 2, _PADL, Cmid), jnp.float32)
        hp_ref[:, 0:_PADL, :] = band                                   # left pad
        hp_ref[:, _PADL + Wo:Wp, :] = band                             # right pad
        zrow = jnp.zeros((1, Wo, Cmid), jnp.float32)
        hp_ref[0:1, _PADL:_PADL + Wo, :] = zrow                        # top halo
        hp_ref[Ho + 1:Ho + 2, _PADL:_PADL + Wo, :] = zrow              # bottom halo
        # Interior starts at a sublane-aligned column (_PADL) -> unmasked store.
        hp_ref[1:Ho + 1, _PADL:_PADL + Wo, :] = h1.reshape(Ho, Wo, Cmid)

        # 9 shifted taps, each an MXU matmul contracting the channel axis,
        # accumulated into a VMEM f32 scratch (bounded live range, no spills).
        acc_ref[...] = jnp.zeros((M, Cmid), jnp.float32)
        for kh in range(3):
            for kw in range(3):
                c0 = _PADL - 1 + kw
                tap = hp_ref[kh:kh + Ho, c0:c0 + Wo, :].reshape(M, Cmid)
                acc_ref[...] += jnp.dot(tap.astype(jnp.bfloat16),
                                        w2_ref[kh, kw, :, :],
                                        preferred_element_type=jnp.float32)
        h2 = jnp.maximum(acc_ref[...] + b2_ref[...], 0.0)

        # ---- layer3: 1x1 conv + BN (no ReLU) ---------------------------------
        h3 = jnp.dot(h2.astype(jnp.bfloat16), w3_ref[...],
                     preferred_element_type=jnp.float32)
        h3 = h3 + b3_ref[...]

        # ---- residual branch -------------------------------------------------
        if has_transition:
            res = jnp.dot(xs_bf, wt_ref[...], preferred_element_type=jnp.float32)
            res = res + bt_ref[...]
        else:
            res = xs  # identity residual stays f32 (requires Cin == Cout)

        out = jnp.maximum(h3 + res, 0.0)
        o_ref[...] = out.reshape(Ho, Wo, Cout).astype(o_ref.dtype)

    return kernel


# ------------------------------- Host wrapper ---------------------------------

def _fold_bn(w, bn, eps=1e-5):
    """Fold eval-mode BatchNorm into conv weights; weights -> bf16 for the MXU."""
    gamma, beta, mean, var = bn
    scale = gamma / jnp.sqrt(var + eps)
    w_folded = (w * scale).astype(jnp.bfloat16)
    bias = (beta - mean * scale).reshape(1, -1).astype(jnp.float32)
    return w_folded, bias


@functools.partial(jax.jit, static_argnames=("downsample_rate",))
def bottleneck_block(x_nchw, params, downsample_rate=1):
    s = downsample_rate
    # Stride of the 1x1 convs is pure input subsampling; fuse it with the
    # NCHW -> NHWC boundary transpose (single XLA pass under jit).
    xs_nchw = x_nchw[:, :, ::s, ::s] if s > 1 else x_nchw
    x = jnp.transpose(xs_nchw, (0, 2, 3, 1)).astype(jnp.float32)
    N, Ho, Wo, Cin = x.shape

    # Layout-free (Ho, Wo) <-> (M,) merges inside the kernel need W % 8 == 0.
    assert Wo % 8 == 0, "post-stride W must be a multiple of 8"
    # TODO(synk): pad W up to a multiple of 8 for odd spatial sizes (7, 14, ...).

    w1, b1 = _fold_bn(params["w1"], params["bn1"])
    w2, b2 = _fold_bn(params["w2"], params["bn2"])
    w3, b3 = _fold_bn(params["w3"], params["bn3"])
    Cmid = w1.shape[1]
    Cout = w3.shape[1]
    Wp = _PADL + Wo + 8     # interior + 1 needed halo column, rounded to sublanes

    has_transition = (s != 1)
    inputs = [x, w1, b1, w2, b2, w3, b3]
    in_specs = [
        pl.BlockSpec((None, Ho, Wo, Cin), lambda n: (n, 0, 0, 0)),
        pl.BlockSpec((Cin, Cmid), lambda n: (0, 0)),
        pl.BlockSpec((1, Cmid), lambda n: (0, 0)),
        pl.BlockSpec((3, 3, Cmid, Cmid), lambda n: (0, 0, 0, 0)),
        pl.BlockSpec((1, Cmid), lambda n: (0, 0)),
        pl.BlockSpec((Cmid, Cout), lambda n: (0, 0)),
        pl.BlockSpec((1, Cout), lambda n: (0, 0)),
    ]
    if has_transition:
        wt, bt = _fold_bn(params["wt"], params["bnt"])
        inputs += [wt, bt]
        in_specs += [
            pl.BlockSpec((Cin, Cout), lambda n: (0, 0)),
            pl.BlockSpec((1, Cout), lambda n: (0, 0)),
        ]
    else:
        assert Cin == Cout, "identity residual requires in_ch == out_ch"

    kernel = _make_block_kernel(Ho, Wo, Cin, Cmid, Cout, Wp, has_transition)

    out = pl.pallas_call(
        kernel,
        out_shape=jax.ShapeDtypeStruct((N, Ho, Wo, Cout), jnp.float32),
        grid_spec=pltpu.PrefetchScalarGridSpec(
            num_scalar_prefetch=0,
            grid=(N,),
            in_specs=in_specs,
            out_specs=pl.BlockSpec((None, Ho, Wo, Cout), lambda n: (n, 0, 0, 0)),
            scratch_shapes=[
                pltpu.VMEM((Ho + 2, Wp, Cmid), jnp.float32),   # padded 3x3 buffer
                pltpu.VMEM((Ho * Wo, Cmid), jnp.float32),      # 3x3 accumulator
            ],
        ),
        compiler_params=pltpu.CompilerParams(
            dimension_semantics=("parallel",),
            vmem_limit_bytes=48 * 1024 * 1024),
    )(*inputs)

    return jnp.transpose(out, (0, 3, 1, 2))  # NHWC -> NCHW


# ------------------------------ Pure-JAX reference ----------------------------

def ref_block(x_nchw, params, downsample_rate=1, eps=1e-5):
    """f32 reference matching the PyTorch BottleneckBlock (eval-mode BN)."""
    def bn(x, p):
        gamma, beta, mean, var = p
        sh = (1, -1, 1, 1)
        return (x - mean.reshape(sh)) / jnp.sqrt(var.reshape(sh) + eps) \
            * gamma.reshape(sh) + beta.reshape(sh)

    def conv1x1(x, w_io, stride=1):
        w = jnp.transpose(w_io, (1, 0))[:, :, None, None]     # (O, I, 1, 1)
        return lax.conv_general_dilated(
            x, w, (stride, stride), ((0, 0), (0, 0)),
            dimension_numbers=("NCHW", "OIHW", "NCHW"))

    def conv3x3(x, w_kkio):
        w = jnp.transpose(w_kkio, (3, 2, 0, 1))                # (O, I, 3, 3)
        return lax.conv_general_dilated(
            x, w, (1, 1), ((1, 1), (1, 1)),
            dimension_numbers=("NCHW", "OIHW", "NCHW"))

    s = downsample_rate
    h = jax.nn.relu(bn(conv1x1(x_nchw, params["w1"], s), params["bn1"]))
    h = jax.nn.relu(bn(conv3x3(h, params["w2"]), params["bn2"]))
    h = bn(conv1x1(h, params["w3"]), params["bn3"])
    if s != 1:
        xres = bn(conv1x1(x_nchw, params["wt"], s), params["bnt"])
    else:
        xres = x_nchw
    return jax.nn.relu(h + xres)


# ------------------------------------ main ------------------------------------

if __name__ == "__main__":
    key = jax.random.PRNGKey(0)

    def bn_params(k, c):
        k1, k2, k3, k4 = jax.random.split(k, 4)
        gamma = jax.random.uniform(k1, (c,), jnp.float32, 0.9, 1.1)
        beta = jax.random.normal(k2, (c,), jnp.float32) * 0.1
        mean = jax.random.normal(k3, (c,), jnp.float32) * 0.1
        var = jax.random.uniform(k4, (c,), jnp.float32, 0.8, 1.2)
        return (gamma, beta, mean, var)

    def make_params(k, in_ch, out_ch, with_transition):
        cmid = out_ch // 4
        ks = jax.random.split(k, 8)
        p = {
            "w1": jax.random.normal(ks[0], (in_ch, cmid), jnp.float32) * 0.1,
            "bn1": bn_params(ks[1], cmid),
            "w2": jax.random.normal(ks[2], (3, 3, cmid, cmid), jnp.float32) * 0.1,
            "bn2": bn_params(ks[3], cmid),
            "w3": jax.random.normal(ks[4], (cmid, out_ch), jnp.float32) * 0.1,
            "bn3": bn_params(ks[5], out_ch),
        }
        if with_transition:
            p["wt"] = jax.random.normal(ks[6], (in_ch, out_ch), jnp.float32) * 0.1
            p["bnt"] = bn_params(ks[7], out_ch)
        return p

    k1, k2, k3, k4 = jax.random.split(key, 4)

    # Tolerance: matmuls run with bf16 operands on the MXU (f32 accumulation),
    # bounding the error well below 1e-2 at these magnitudes; the f32 reference
    # mirrors the exact PyTorch (f32) semantics.
    TOL = dict(atol=2e-2, rtol=2e-2)

    # Config 1: downsample_rate=1 (identity residual -> in_ch == out_ch).
    N, in_ch, out_ch, H, W = 2, 16, 16, 16, 16
    params1 = make_params(k1, in_ch, out_ch, with_transition=False)
    x1 = jax.random.normal(k2, (N, in_ch, H, W), jnp.float32)
    out1 = jax.block_until_ready(bottleneck_block(x1, params1, downsample_rate=1))
    ref1 = ref_block(x1, params1, downsample_rate=1)
    assert out1.shape == ref1.shape, (out1.shape, ref1.shape)
    assert bool(jnp.allclose(out1, ref1, **TOL)), "mismatch (s=1)"

    # Config 2: downsample_rate=2 (1x1 transition conv on the residual path).
    in_ch2, out_ch2 = 8, 16
    params2 = make_params(k3, in_ch2, out_ch2, with_transition=True)
    x2 = jax.random.normal(k4, (N, in_ch2, H, W), jnp.float32)
    out2 = jax.block_until_ready(bottleneck_block(x2, params2, downsample_rate=2))
    ref2 = ref_block(x2, params2, downsample_rate=2)
    assert out2.shape == ref2.shape, (out2.shape, ref2.shape)
    assert bool(jnp.allclose(out2, ref2, **TOL)), "mismatch (s=2)"

    print("KERNEL_OK")
</pallas_src>

<mosaic_0001>
module attributes {stable_mosaic.version = 11 : i64} {
  func.func @kernel(%arg0: i32, %arg1: memref<1x16x16x16xf32, #tpu.memory_space<vmem>>, %arg2: memref<16x4xbf16, #tpu.memory_space<vmem>>, %arg3: memref<1x4xf32, #tpu.memory_space<vmem>>, %arg4: memref<3x3x4x4xbf16, #tpu.memory_space<vmem>>, %arg5: memref<1x4xf32, #tpu.memory_space<vmem>>, %arg6: memref<4x16xbf16, #tpu.memory_space<vmem>>, %arg7: memref<1x16xf32, #tpu.memory_space<vmem>>, %arg8: memref<1x16x16x16xf32, #tpu.memory_space<vmem>>, %arg9: memref<18x32x4xf32, #tpu.memory_space<vmem>>, %arg10: memref<256x4xf32, #tpu.memory_space<vmem>>) attributes {dimension_semantics = [#tpu.dimension_semantics<parallel>], iteration_bounds = array<i64: 2>, scalar_prefetch = 0 : i64, scratch_operands = 2 : i64, tpu.core_type = #tpu.core_type<tc>, window_params = [{transform_indices = @transform_0, window_bounds = array<i64: 1, 16, 16, 16>}, {pipeline_mode = #tpu.pipeline_mode<synchronous>, transform_indices = @transform_1, window_bounds = array<i64: 16, 4>}, {pipeline_mode = #tpu.pipeline_mode<synchronous>, transform_indices = @transform_2, window_bounds = array<i64: 1, 4>}, {pipeline_mode = #tpu.pipeline_mode<synchronous>, transform_indices = @transform_3, window_bounds = array<i64: 3, 3, 4, 4>}, {pipeline_mode = #tpu.pipeline_mode<synchronous>, transform_indices = @transform_4, window_bounds = array<i64: 1, 4>}, {pipeline_mode = #tpu.pipeline_mode<synchronous>, transform_indices = @transform_5, window_bounds = array<i64: 4, 16>}, {pipeline_mode = #tpu.pipeline_mode<synchronous>, transform_indices = @transform_6, window_bounds = array<i64: 1, 16>}, {transform_indices = @transform_7, window_bounds = array<i64: 1, 16, 16, 16>}]} {
    %c0 = arith.constant 0 : index
    %c0_0 = arith.constant 0 : index
    %c0_1 = arith.constant 0 : index
    %c0_2 = arith.constant 0 : index
    %0 = vector.load %arg1[%c0, %c0_0, %c0_1, %c0_2] : memref<1x16x16x16xf32, #tpu.memory_space<vmem>>, vector<1x16x16x16xf32>
    %1 = vector.shape_cast %0 : vector<1x16x16x16xf32> to vector<16x16x16xf32>
    %2 = vector.shape_cast %1 : vector<16x16x16xf32> to vector<256x16xf32>
    %3 = arith.truncf %2 : vector<256x16xf32> to vector<256x16xbf16>
    %c0_3 = arith.constant 0 : index
    %c0_4 = arith.constant 0 : index
    %4 = vector.load %arg2[%c0_3, %c0_4] : memref<16x4xbf16, #tpu.memory_space<vmem>>, vector<16x4xbf16>
    %cst = arith.constant dense<0.000000e+00> : vector<256x4xf32>
    %5 = tpu.matmul %3, %4, %cst {dimension_numbers = #tpu.dot_dimension_numbers<[1], [0], [0], [1], [0, 0, 1, 1], [], []>} : vector<256x16xbf16>, vector<16x4xbf16>, vector<256x4xf32> -> vector<256x4xf32>
    %c0_5 = arith.constant 0 : index
    %c0_6 = arith.constant 0 : index
    %6 = vector.load %arg3[%c0_5, %c0_6] : memref<1x4xf32, #tpu.memory_space<vmem>>, vector<1x4xf32>
    %7 = vector.broadcast %6 : vector<1x4xf32> to vector<256x4xf32>
    %8 = arith.addf %5, %7 : vector<256x4xf32>
    %cst_7 = arith.constant 0.000000e+00 : f32
    %9 = vector.broadcast %cst_7 : f32 to vector<256x4xf32>
    %10 = arith.maximumf %8, %9 : vector<256x4xf32>
    %cst_8 = arith.constant 0.000000e+00 : f32
    %11 = vector.broadcast %cst_8 : f32 to vector<18x8x4xf32>
    %c0_9 = arith.constant 0 : index
    %c0_10 = arith.constant 0 : index
    %c0_11 = arith.constant 0 : index
    %12 = vector.load %arg9[%c0_9, %c0_10, %c0_11] : memref<18x32x4xf32, #tpu.memory_space<vmem>>, vector<18x8x4xf32>
    tpu.vector_store %arg9[%c0_9, %c0_10, %c0_11], %11 {strides = array<i32>} : memref<18x32x4xf32, #tpu.memory_space<vmem>>, vector<18x8x4xf32>,
    %c0_12 = arith.constant 0 : index
    %c24 = arith.constant 24 : index
    %c0_13 = arith.constant 0 : index
    %13 = vector.load %arg9[%c0_12, %c24, %c0_13] : memref<18x32x4xf32, #tpu.memory_space<vmem>>, vector<18x8x4xf32>
    tpu.vector_store %arg9[%c0_12, %c24, %c0_13], %11 {strides = array<i32>} : memref<18x32x4xf32, #tpu.memory_space<vmem>>, vector<18x8x4xf32>,
    %cst_14 = arith.constant 0.000000e+00 : f32
    %14 = vector.broadcast %cst_14 : f32 to vector<1x16x4xf32>
    %c0_15 = arith.constant 0 : index
    %c8 = arith.constant 8 : index
    %c0_16 = arith.constant 0 : index
    %15 = vector.load %arg9[%c0_15, %c8, %c0_16] : memref<18x32x4xf32, #tpu.memory_space<vmem>>, vector<1x16x4xf32>
    tpu.vector_store %arg9[%c0_15, %c8, %c0_16], %14 {strides = array<i32>} : memref<18x32x4xf32, #tpu.memory_space<vmem>>, vector<1x16x4xf32>,
    %c17 = arith.constant 17 : index
    %c8_17 = arith.constant 8 : index
    %c0_18 = arith.constant 0 : index
    %16 = vector.load %arg9[%c17, %c8_17, %c0_18] : memref<18x32x4xf32, #tpu.memory_space<vmem>>, vector<1x16x4xf32>
    tpu.vector_store %arg9[%c17, %c8_17, %c0_18], %14 {strides = array<i32>} : memref<18x32x4xf32, #tpu.memory_space<vmem>>, vector<1x16x4xf32>,
    %17 = vector.shape_cast %10 : vector<256x4xf32> to vector<16x16x4xf32>
    %c1 = arith.constant 1 : index
    %c8_19 = arith.constant 8 : index
    %c0_20 = arith.constant 0 : index
    %18 = vector.load %arg9[%c1, %c8_19, %c0_20] : memref<18x32x4xf32, #tpu.memory_space<vmem>>, vector<16x16x4xf32>
    tpu.vector_store %arg9[%c1, %c8_19, %c0_20], %17 {strides = array<i32>} : memref<18x32x4xf32, #tpu.memory_space<vmem>>, vector<16x16x4xf32>,
    %cst_21 = arith.constant 0.000000e+00 : f32
    %19 = vector.broadcast %cst_21 : f32 to vector<256x4xf32>
    %c0_22 = arith.constant 0 : index
    %c0_23 = arith.constant 0 : index
    %20 = vector.load %arg10[%c0_22, %c0_23] : memref<256x4xf32, #tpu.memory_space<vmem>>, vector<256x4xf32>
    tpu.vector_store %arg10[%c0_22, %c0_23], %19 {strides = array<i32>} : memref<256x4xf32, #tpu.memory_space<vmem>>, vector<256x4xf32>,
    %c0_24 = arith.constant 0 : index
    %c7 = arith.constant 7 : index
    %c0_25 = arith.constant 0 : index
    %21 = vector.load %arg9[%c0_24, %c7, %c0_25] : memref<18x32x4xf32, #tpu.memory_space<vmem>>, vector<16x16x4xf32>
    %22 = vector.shape_cast %21 : vector<16x16x4xf32> to vector<256x4xf32>
    %c0_26 = arith.constant 0 : index
    %c0_27 = arith.constant 0 : index
    %23 = vector.load %arg10[%c0_26, %c0_27] : memref<256x4xf32, #tpu.memory_space<vmem>>, vector<256x4xf32>
    %24 = arith.truncf %22 : vector<256x4xf32> to vector<256x4xbf16>
    %c0_28 = arith.constant 0 : index
    %c0_29 = arith.constant 0 : index
    %c0_30 = arith.constant 0 : index
    %c0_31 = arith.constant 0 : index
    %25 = vector.load %arg4[%c0_28, %c0_29, %c0_30, %c0_31] : memref<3x3x4x4xbf16, #tpu.memory_space<vmem>>, vector<1x1x4x4xbf16>
    %26 = vector.shape_cast %25 : vector<1x1x4x4xbf16> to vector<4x4xbf16>
    %cst_32 = arith.constant dense<0.000000e+00> : vector<256x4xf32>
    %27 = tpu.matmul %24, %26, %cst_32 {dimension_numbers = #tpu.dot_dimension_numbers<[1], [0], [0], [1], [0, 0, 1, 1], [], []>} : vector<256x4xbf16>, vector<4x4xbf16>, vector<256x4xf32> -> vector<256x4xf32>
    %28 = arith.addf %23, %27 : vector<256x4xf32>
    %c0_33 = arith.constant 0 : index
    %c0_34 = arith.constant 0 : index
    %29 = vector.load %arg10[%c0_33, %c0_34] : memref<256x4xf32, #tpu.memory_space<vmem>>, vector<256x4xf32>
    tpu.vector_store %arg10[%c0_33, %c0_34], %28 {strides = array<i32>} : memref<256x4xf32, #tpu.memory_space<vmem>>, vector<256x4xf32>,
    %c0_35 = arith.constant 0 : index
    %c8_36 = arith.constant 8 : index
    %c0_37 = arith.constant 0 : index
    %30 = vector.load %arg9[%c0_35, %c8_36, %c0_37] : memref<18x32x4xf32, #tpu.memory_space<vmem>>, vector<16x16x4xf32>
    %31 = vector.shape_cast %30 : vector<16x16x4xf32> to vector<256x4xf32>
    %c0_38 = arith.constant 0 : index
    %c0_39 = arith.constant 0 : index
    %32 = vector.load %arg10[%c0_38, %c0_39] : memref<256x4xf32, #tpu.memory_space<vmem>>, vector<256x4xf32>
    %33 = arith.truncf %31 : vector<256x4xf32> to vector<256x4xbf16>
    %c0_40 = arith.constant 0 : index
    %c1_41 = arith.constant 1 : index
    %c0_42 = arith.constant 0 : index
    %c0_43 = arith.constant 0 : index
    %34 = vector.load %arg4[%c0_40, %c1_41, %c0_42, %c0_43] : memref<3x3x4x4xbf16, #tpu.memory_space<vmem>>, vector<1x1x4x4xbf16>
    %35 = vector.shape_cast %34 : vector<1x1x4x4xbf16> to vector<4x4xbf16>
    %cst_44 = arith.constant dense<0.000000e+00> : vector<256x4xf32>
    %36 = tpu.matmul %33, %35, %cst_44 {dimension_numbers = #tpu.dot_dimension_numbers<[1], [0], [0], [1], [0, 0, 1, 1], [], []>} : vector<256x4xbf16>, vector<4x4xbf16>, vector<256x4xf32> -> vector<256x4xf32>
    %37 = arith.addf %32, %36 : vector<256x4xf32>
    %c0_45 = arith.constant 0 : index
    %c0_46 = arith.constant 0 : index
    %38 = vector.load %arg10[%c0_45, %c0_46] : memref<256x4xf32, #tpu.memory_space<vmem>>, vector<256x4xf32>
    tpu.vector_store %arg10[%c0_45, %c0_46], %37 {strides = array<i32>} : memref<256x4xf32, #tpu.memory_space<vmem>>, vector<256x4xf32>,
    %c0_47 = arith.constant 0 : index
    %c9 = arith.constant 9 : index
    %c0_48 = arith.constant 0 : index
    %39 = vector.load %arg9[%c0_47, %c9, %c0_48] : memref<18x32x4xf32, #tpu.memory_space<vmem>>, vector<16x16x4xf32>
    %40 = vector.shape_cast %39 : vector<16x16x4xf32> to vector<256x4xf32>
    %c0_49 = arith.constant 0 : index
    %c0_50 = arith.constant 0 : index
    %41 = vector.load %arg10[%c0_49, %c0_50] : memref<256x4xf32, #tpu.memory_space<vmem>>, vector<256x4xf32>
    %42 = arith.truncf %40 : vector<256x4xf32> to vector<256x4xbf16>
    %c0_51 = arith.constant 0 : index
    %c2 = arith.constant 2 : index
    %c0_52 = arith.constant 0 : index
    %c0_53 = arith.constant 0 : index
    %43 = vector.load %arg4[%c0_51, %c2, %c0_52, %c0_53] : memref<3x3x4x4xbf16, #tpu.memory_space<vmem>>, vector<1x1x4x4xbf16>
    %44 = vector.shape_cast %43 : vector<1x1x4x4xbf16> to vector<4x4xbf16>
    %cst_54 = arith.constant dense<0.000000e+00> : vector<256x4xf32>
    %45 = tpu.matmul %42, %44, %cst_54 {dimension_numbers = #tpu.dot_dimension_numbers<[1], [0], [0], [1], [0, 0, 1, 1], [], []>} : vector<256x4xbf16>, vector<4x4xbf16>, vector<256x4xf32> -> vector<256x4xf32>
    %46 = arith.addf %41, %45 : vector<256x4xf32>
    %c0_55 = arith.constant 0 : index
    %c0_56 = arith.constant 0 : index
    %47 = vector.load %arg10[%c0_55, %c0_56] : memref<256x4xf32, #tpu.memory_space<vmem>>, vector<256x4xf32>
    tpu.vector_store %arg10[%c0_55, %c0_56], %46 {strides = array<i32>} : memref<256x4xf32, #tpu.memory_space<vmem>>, vector<256x4xf32>,
    %c1_57 = arith.constant 1 : index
    %c7_58 = arith.constant 7 : index
    %c0_59 = arith.constant 0 : index
    %48 = vector.load %arg9[%c1_57, %c7_58, %c0_59] : memref<18x32x4xf32, #tpu.memory_space<vmem>>, vector<16x16x4xf32>
    %49 = vector.shape_cast %48 : vector<16x16x4xf32> to vector<256x4xf32>
    %c0_60 = arith.constant 0 : index
    %c0_61 = arith.constant 0 : index
    %50 = vector.load %arg10[%c0_60, %c0_61] : memref<256x4xf32, #tpu.memory_space<vmem>>, vector<256x4xf32>
    %51 = arith.truncf %49 : vector<256x4xf32> to vector<256x4xbf16>
    %c1_62 = arith.constant 1 : index
    %c0_63 = arith.constant 0 : index
    %c0_64 = arith.constant 0 : index
    %c0_65 = arith.constant 0 : index
    %52 = vector.load %arg4[%c1_62, %c0_63, %c0_64, %c0_65] : memref<3x3x4x4xbf16, #tpu.memory_space<vmem>>, vector<1x1x4x4xbf16>
    %53 = vector.shape_cast %52 : vector<1x1x4x4xbf16> to vector<4x4xbf16>
    %cst_66 = arith.constant dense<0.000000e+00> : vector<256x4xf32>
    %54 = tpu.matmul %51, %53, %cst_66 {dimension_numbers = #tpu.dot_dimension_numbers<[1], [0], [0], [1], [0, 0, 1, 1], [], []>} : vector<256x4xbf16>, vector<4x4xbf16>, vector<256x4xf32> -> vector<256x4xf32>
    %55 = arith.addf %50, %54 : vector<256x4xf32>
    %c0_67 = arith.constant 0 : index
    %c0_68 = arith.constant 0 : index
    %56 = vector.load %arg10[%c0_67, %c0_68] : memref<256x4xf32, #tpu.memory_space<vmem>>, vector<256x4xf32>
    tpu.vector_store %arg10[%c0_67, %c0_68], %55 {strides = array<i32>} : memref<256x4xf32, #tpu.memory_space<vmem>>, vector<256x4xf32>,
    %c1_69 = arith.constant 1 : index
    %c8_70 = arith.constant 8 : index
    %c0_71 = arith.constant 0 : index
    %57 = vector.load %arg9[%c1_69, %c8_70, %c0_71] : memref<18x32x4xf32, #tpu.memory_space<vmem>>, vector<16x16x4xf32>
    %58 = vector.shape_cast %57 : vector<16x16x4xf32> to vector<256x4xf32>
    %c0_72 = arith.constant 0 : index
    %c0_73 = arith.constant 0 : index
    %59 = vector.load %arg10[%c0_72, %c0_73] : memref<256x4xf32, #tpu.memory_space<vmem>>, vector<256x4xf32>
    %60 = arith.truncf %58 : vector<256x4xf32> to vector<256x4xbf16>
    %c1_74 = arith.constant 1 : index
    %c1_75 = arith.constant 1 : index
    %c0_76 = arith.constant 0 : index
    %c0_77 = arith.constant 0 : index
    %61 = vector.load %arg4[%c1_74, %c1_75, %c0_76, %c0_77] : memref<3x3x4x4xbf16, #tpu.memory_space<vmem>>, vector<1x1x4x4xbf16>
    %62 = vector.shape_cast %61 : vector<1x1x4x4xbf16> to vector<4x4xbf16>
    %cst_78 = arith.constant dense<0.000000e+00> : vector<256x4xf32>
    %63 = tpu.matmul %60, %62, %cst_78 {dimension_numbers = #tpu.dot_dimension_numbers<[1], [0], [0], [1], [0, 0, 1, 1], [], []>} : vector<256x4xbf16>, vector<4x4xbf16>, vector<256x4xf32> -> vector<256x4xf32>
    %64 = arith.addf %59, %63 : vector<256x4xf32>
    %c0_79 = arith.constant 0 : index
    %c0_80 = arith.constant 0 : index
    %65 = vector.load %arg10[%c0_79, %c0_80] : memref<256x4xf32, #tpu.memory_space<vmem>>, vector<256x4xf32>
    tpu.vector_store %arg10[%c0_79, %c0_80], %64 {strides = array<i32>} : memref<256x4xf32, #tpu.memory_space<vmem>>, vector<256x4xf32>,
    %c1_81 = arith.constant 1 : index
    %c9_82 = arith.constant 9 : index
    %c0_83 = arith.constant 0 : index
    %66 = vector.load %arg9[%c1_81, %c9_82, %c0_83] : memref<18x32x4xf32, #tpu.memory_space<vmem>>, vector<16x16x4xf32>
    %67 = vector.shape_cast %66 : vector<16x16x4xf32> to vector<256x4xf32>
    %c0_84 = arith.constant 0 : index
    %c0_85 = arith.constant 0 : index
    %68 = vector.load %arg10[%c0_84, %c0_85] : memref<256x4xf32, #tpu.memory_space<vmem>>, vector<256x4xf32>
    %69 = arith.truncf %67 : vector<256x4xf32> to vector<256x4xbf16>
    %c1_86 = arith.constant 1 : index
    %c2_87 = arith.constant 2 : index
    %c0_88 = arith.constant 0 : index
    %c0_89 = arith.constant 0 : index
    %70 = vector.load %arg4[%c1_86, %c2_87, %c0_88, %c0_89] : memref<3x3x4x4xbf16, #tpu.memory_space<vmem>>, vector<1x1x4x4xbf16>
    %71 = vector.shape_cast %70 : vector<1x1x4x4xbf16> to vector<4x4xbf16>
    %cst_90 = arith.constant dense<0.000000e+00> : vector<256x4xf32>
    %72 = tpu.matmul %69, %71, %cst_90 {dimension_numbers = #tpu.dot_dimension_numbers<[1], [0], [0], [1], [0, 0, 1, 1], [], []>} : vector<256x4xbf16>, vector<4x4xbf16>, vector<256x4xf32> -> vector<256x4xf32>
    %73 = arith.addf %68, %72 : vector<256x4xf32>
    %c0_91 = arith.constant 0 : index
    %c0_92 = arith.constant 0 : index
    %74 = vector.load %arg10[%c0_91, %c0_92] : memref<256x4xf32, #tpu.memory_space<vmem>>, vector<256x4xf32>
    tpu.vector_store %arg10[%c0_91, %c0_92], %73 {strides = array<i32>} : memref<256x4xf32, #tpu.memory_space<vmem>>, vector<256x4xf32>,
    %c2_93 = arith.constant 2 : index
    %c7_94 = arith.constant 7 : index
    %c0_95 = arith.constant 0 : index
    %75 = vector.load %arg9[%c2_93, %c7_94, %c0_95] : memref<18x32x4xf32, #tpu.memory_space<vmem>>, vector<16x16x4xf32>
    %76 = vector.shape_cast %75 : vector<16x16x4xf32> to vector<256x4xf32>
    %c0_96 = arith.constant 0 : index
    %c0_97 = arith.constant 0 : index
    %77 = vector.load %arg10[%c0_96, %c0_97] : memref<256x4xf32, #tpu.memory_space<vmem>>, vector<256x4xf32>
    %78 = arith.truncf %76 : vector<256x4xf32> to vector<256x4xbf16>
    %c2_98 = arith.constant 2 : index
    %c0_99 = arith.constant 0 : index
    %c0_100 = arith.constant 0 : index
    %c0_101 = arith.constant 0 : index
    %79 = vector.load %arg4[%c2_98, %c0_99, %c0_100, %c0_101] : memref<3x3x4x4xbf16, #tpu.memory_space<vmem>>, vector<1x1x4x4xbf16>
    %80 = vector.shape_cast %79 : vector<1x1x4x4xbf16> to vector<4x4xbf16>
    %cst_102 = arith.constant dense<0.000000e+00> : vector<256x4xf32>
    %81 = tpu.matmul %78, %80, %cst_102 {dimension_numbers = #tpu.dot_dimension_numbers<[1], [0], [0], [1], [0, 0, 1, 1], [], []>} : vector<256x4xbf16>, vector<4x4xbf16>, vector<256x4xf32> -> vector<256x4xf32>
    %82 = arith.addf %77, %81 : vector<256x4xf32>
    %c0_103 = arith.constant 0 : index
    %c0_104 = arith.constant 0 : index
    %83 = vector.load %arg10[%c0_103, %c0_104] : memref<256x4xf32, #tpu.memory_space<vmem>>, vector<256x4xf32>
    tpu.vector_store %arg10[%c0_103, %c0_104], %82 {strides = array<i32>} : memref<256x4xf32, #tpu.memory_space<vmem>>, vector<256x4xf32>,
    %c2_105 = arith.constant 2 : index
    %c8_106 = arith.constant 8 : index
    %c0_107 = arith.constant 0 : index
    %84 = vector.load %arg9[%c2_105, %c8_106, %c0_107] : memref<18x32x4xf32, #tpu.memory_space<vmem>>, vector<16x16x4xf32>
    %85 = vector.shape_cast %84 : vector<16x16x4xf32> to vector<256x4xf32>
    %c0_108 = arith.constant 0 : index
    %c0_109 = arith.constant 0 : index
    %86 = vector.load %arg10[%c0_108, %c0_109] : memref<256x4xf32, #tpu.memory_space<vmem>>, vector<256x4xf32>
    %87 = arith.truncf %85 : vector<256x4xf32> to vector<256x4xbf16>
    %c2_110 = arith.constant 2 : index
    %c1_111 = arith.constant 1 : index
    %c0_112 = arith.constant 0 : index
    %c0_113 = arith.constant 0 : index
    %88 = vector.load %arg4[%c2_110, %c1_111, %c0_112, %c0_113] : memref<3x3x4x4xbf16, #tpu.memory_space<vmem>>, vector<1x1x4x4xbf16>
    %89 = vector.shape_cast %88 : vector<1x1x4x4xbf16> to vector<4x4xbf16>
    %cst_114 = arith.constant dense<0.000000e+00> : vector<256x4xf32>
    %90 = tpu.matmul %87, %89, %cst_114 {dimension_numbers = #tpu.dot_dimension_numbers<[1], [0], [0], [1], [0, 0, 1, 1], [], []>} : vector<256x4xbf16>, vector<4x4xbf16>, vector<256x4xf32> -> vector<256x4xf32>
    %91 = arith.addf %86, %90 : vector<256x4xf32>
    %c0_115 = arith.constant 0 : index
    %c0_116 = arith.constant 0 : index
    %92 = vector.load %arg10[%c0_115, %c0_116] : memref<256x4xf32, #tpu.memory_space<vmem>>, vector<256x4xf32>
    tpu.vector_store %arg10[%c0_115, %c0_116], %91 {strides = array<i32>} : memref<256x4xf32, #tpu.memory_space<vmem>>, vector<256x4xf32>,
    %c2_117 = arith.constant 2 : index
    %c9_118 = arith.constant 9 : index
    %c0_119 = arith.constant 0 : index
    %93 = vector.load %arg9[%c2_117, %c9_118, %c0_119] : memref<18x32x4xf32, #tpu.memory_space<vmem>>, vector<16x16x4xf32>
    %94 = vector.shape_cast %93 : vector<16x16x4xf32> to vector<256x4xf32>
    %c0_120 = arith.constant 0 : index
    %c0_121 = arith.constant 0 : index
    %95 = vector.load %arg10[%c0_120, %c0_121] : memref<256x4xf32, #tpu.memory_space<vmem>>, vector<256x4xf32>
    %96 = arith.truncf %94 : vector<256x4xf32> to vector<256x4xbf16>
    %c2_122 = arith.constant 2 : index
    %c2_123 = arith.constant 2 : index
    %c0_124 = arith.constant 0 : index
    %c0_125 = arith.constant 0 : index
    %97 = vector.load %arg4[%c2_122, %c2_123, %c0_124, %c0_125] : memref<3x3x4x4xbf16, #tpu.memory_space<vmem>>, vector<1x1x4x4xbf16>
    %98 = vector.shape_cast %97 : vector<1x1x4x4xbf16> to vector<4x4xbf16>
    %cst_126 = arith.constant dense<0.000000e+00> : vector<256x4xf32>
    %99 = tpu.matmul %96, %98, %cst_126 {dimension_numbers = #tpu.dot_dimension_numbers<[1], [0], [0], [1], [0, 0, 1, 1], [], []>} : vector<256x4xbf16>, vector<4x4xbf16>, vector<256x4xf32> -> vector<256x4xf32>
    %100 = arith.addf %95, %99 : vector<256x4xf32>
    %c0_127 = arith.constant 0 : index
    %c0_128 = arith.constant 0 : index
    %101 = vector.load %arg10[%c0_127, %c0_128] : memref<256x4xf32, #tpu.memory_space<vmem>>, vector<256x4xf32>
    tpu.vector_store %arg10[%c0_127, %c0_128], %100 {strides = array<i32>} : memref<256x4xf32, #tpu.memory_space<vmem>>, vector<256x4xf32>,
    %c0_129 = arith.constant 0 : index
    %c0_130 = arith.constant 0 : index
    %102 = vector.load %arg10[%c0_129, %c0_130] : memref<256x4xf32, #tpu.memory_space<vmem>>, vector<256x4xf32>
    %c0_131 = arith.constant 0 : index
    %c0_132 = arith.constant 0 : index
    %103 = vector.load %arg5[%c0_131, %c0_132] : memref<1x4xf32, #tpu.memory_space<vmem>>, vector<1x4xf32>
    %104 = vector.broadcast %103 : vector<1x4xf32> to vector<256x4xf32>
    %105 = arith.addf %102, %104 : vector<256x4xf32>
    %cst_133 = arith.constant 0.000000e+00 : f32
    %106 = vector.broadcast %cst_133 : f32 to vector<256x4xf32>
    %107 = arith.maximumf %105, %106 : vector<256x4xf32>
    %108 = arith.truncf %107 : vector<256x4xf32> to vector<256x4xbf16>
    %c0_134 = arith.constant 0 : index
    %c0_135 = arith.constant 0 : index
    %109 = vector.load %arg6[%c0_134, %c0_135] : memref<4x16xbf16, #tpu.memory_space<vmem>>, vector<4x16xbf16>
    %cst_136 = arith.constant dense<0.000000e+00> : vector<256x16xf32>
    %110 = tpu.matmul %108, %109, %cst_136 {dimension_numbers = #tpu.dot_dimension_numbers<[1], [0], [0], [1], [0, 0, 1, 1], [], []>} : vector<256x4xbf16>, vector<4x16xbf16>, vector<256x16xf32> -> vector<256x16xf32>
    %c0_137 = arith.constant 0 : index
    %c0_138 = arith.constant 0 : index
    %111 = vector.load %arg7[%c0_137, %c0_138] : memref<1x16xf32, #tpu.memory_space<vmem>>, vector<1x16xf32>
    %112 = vector.broadcast %111 : vector<1x16xf32> to vector<256x16xf32>
    %113 = arith.addf %110, %112 : vector<256x16xf32>
    %114 = arith.addf %113, %2 : vector<256x16xf32>
    %cst_139 = arith.constant 0.000000e+00 : f32
    %115 = vector.broadcast %cst_139 : f32 to vector<256x16xf32>
    %116 = arith.maximumf %114, %115 : vector<256x16xf32>
    %117 = vector.shape_cast %116 : vector<256x16xf32> to vector<16x16x16xf32>
    %c0_140 = arith.constant 0 : index
    %c0_141 = arith.constant 0 : index
    %c0_142 = arith.constant 0 : index
    %c0_143 = arith.constant 0 : index
    %118 = vector.load %arg8[%c0_140, %c0_141, %c0_142, %c0_143] : memref<1x16x16x16xf32, #tpu.memory_space<vmem>>, vector<1x16x16x16xf32>
    %119 = vector.shape_cast %118 : vector<1x16x16x16xf32> to vector<16x16x16xf32>
    %120 = vector.shape_cast %117 : vector<16x16x16xf32> to vector<1x16x16x16xf32>
    tpu.vector_store %arg8[%c0_140, %c0_141, %c0_142, %c0_143], %120 {strides = array<i32>} : memref<1x16x16x16xf32, #tpu.memory_space<vmem>>, vector<1x16x16x16xf32>,
    return
  }
  func.func @transform_0(%arg0: i32) -> (i32, i32, i32, i32) {
    %c0_i32 = arith.constant 0 : i32
    %c0_i32_0 = arith.constant 0 : i32
    %c0_i32_1 = arith.constant 0 : i32
    %c0_i32_2 = arith.constant 0 : i32
    return %arg0, %c0_i32, %c0_i32_0, %c0_i32_1 : i32, i32, i32, i32
  }
  func.func @transform_1(%arg0: i32) -> (i32, i32) {
    %c0_i32 = arith.constant 0 : i32
    %c0_i32_0 = arith.constant 0 : i32
    %c0_i32_1 = arith.constant 0 : i32
    return %c0_i32, %c0_i32_0 : i32, i32
  }
  func.func @transform_2(%arg0: i32) -> (i32, i32) {
    %c0_i32 = arith.constant 0 : i32
    %c0_i32_0 = arith.constant 0 : i32
    %c0_i32_1 = arith.constant 0 : i32
    return %c0_i32, %c0_i32_0 : i32, i32
  }
  func.func @transform_3(%arg0: i32) -> (i32, i32, i32, i32) {
    %c0_i32 = arith.constant 0 : i32
    %c0_i32_0 = arith.constant 0 : i32
    %c0_i32_1 = arith.constant 0 : i32
    %c0_i32_2 = arith.constant 0 : i32
    %c0_i32_3 = arith.constant 0 : i32
    return %c0_i32, %c0_i32_0, %c0_i32_1, %c0_i32_2 : i32, i32, i32, i32
  }
  func.func @transform_4(%arg0: i32) -> (i32, i32) {
    %c0_i32 = arith.constant 0 : i32
    %c0_i32_0 = arith.constant 0 : i32
    %c0_i32_1 = arith.constant 0 : i32
    return %c0_i32, %c0_i32_0 : i32, i32
  }
  func.func @transform_5(%arg0: i32) -> (i32, i32) {
    %c0_i32 = arith.constant 0 : i32
    %c0_i32_0 = arith.constant 0 : i32
    %c0_i32_1 = arith.constant 0 : i32
    return %c0_i32, %c0_i32_0 : i32, i32
  }
  func.func @transform_6(%arg0: i32) -> (i32, i32) {
    %c0_i32 = arith.constant 0 : i32
    %c0_i32_0 = arith.constant 0 : i32
    %c0_i32_1 = arith.constant 0 : i32
    return %c0_i32, %c0_i32_0 : i32, i32
  }
  func.func @transform_7(%arg0: i32) -> (i32, i32, i32, i32) {
    %c0_i32 = arith.constant 0 : i32
    %c0_i32_0 = arith.constant 0 : i32
    %c0_i32_1 = arith.constant 0 : i32
    %c0_i32_2 = arith.constant 0 : i32
    return %arg0, %c0_i32, %c0_i32_0, %c0_i32_1 : i32, i32, i32, i32
  }
}

</mosaic_0001>

<llo_original>
// kernel: bottleneck_block.1
$region0: #{bottleneck_block.1}
  #allocation0 [shape = 'u32[]', space=smem, size = 0x4, offset = 0x4, fixed_abs, tag = 'smem constant byte address 0x4 - core index']
  #allocation1 [shape = 'u32[72,128]{1,0:T(1,128)}', space=vmem, size = 0x9000, scoped, tag = 'internal scratch']
  #allocation2 [shape = 'f32[18,32,4]{2,1,0:T(8,128)}', space=vmem, size = 0x48000, scoped, tag = 'scratch operand']
  #allocation3 [shape = 'f32[256,4]{1,0:T(8,128)}', space=vmem, size = 0x20000, scoped, tag = 'scratch operand']
  %s0 = inlined_call_operand.vmem [shape: f32[2,16,16,16], index: 0, kind: input, shape index: {}]
  %s1 = inlined_call_operand.vmem [shape: bf16[16,4], index: 1, kind: input, shape index: {}]
  %s2 = inlined_call_operand.vmem [shape: f32[1,4], index: 2, kind: input, shape index: {}]
  %s3 = inlined_call_operand.vmem [shape: bf16[3,3,4,4], index: 3, kind: input, shape index: {}]
  %s4 = inlined_call_operand.vmem [shape: f32[1,4], index: 4, kind: input, shape index: {}]
  %s5 = inlined_call_operand.vmem [shape: bf16[4,16], index: 5, kind: input, shape index: {}]
  %s6 = inlined_call_operand.vmem [shape: f32[1,16], index: 6, kind: input, shape index: {}]
  %s7 = inlined_call_operand.vmem [shape: f32[2,16,16,16], index: 7, kind: output, shape index: {}]
  %s8 = sld [smem:[#allocation0]]
  $region61: #{bottleneck_block.1} parent=0
    _
  %s10 = ssub.s32 1, %s8
  %s11 = scalar_select 0, %s10, %s8
  loop: start=0, step=1, limit=4
  $region2: #{bottleneck_block.1} parent=0 // loop_pre_header
    _
  $region3: #{bottleneck_block.1} parent=0 // loop_header
    %s13 = sphi 0, %s17
    %p14 = scmp.ge.s32.totalorder %s13, 4
    %s23 = sphi 0, %s25
    %s26 = sphi 0, %s23
    %s27 = sphi 0, %s26
    %s43 = sphi 0, %s27
    %s47 = sphi 0, %s47
    %s49 = sphi 0, %s47
    %s50 = sphi 0, %s49
    %s64 = sphi 0, %s50
    %s68 = sphi 0, %s68
    %s70 = sphi 0, %s68
    %s71 = sphi 0, %s70
    %s85 = sphi 0, %s71
    %s89 = sphi 0, %s89
    %s91 = sphi 0, %s89
    %s92 = sphi 0, %s91
    %s106 = sphi 0, %s92
    %s110 = sphi 0, %s110
    %s112 = sphi 0, %s110
    %s113 = sphi 0, %s112
    %s127 = sphi 0, %s113
    %s131 = sphi 0, %s131
    %s133 = sphi 0, %s131
    %s134 = sphi 0, %s133
    %s148 = sphi 0, %s134
    %s152 = sphi 0, %s152
    %s154 = sphi 0, %s152
    %s155 = sphi 0, %s154
    %s169 = sphi 0, %s155
    %s175 = sphi 0, %s177
    %s178 = sphi 0, %s175
    %s179 = sphi 0, %s178
    %s195 = sphi 0, %s179
  $region4: #{bottleneck_block.1} parent=0 // loop_header_branch
    %16 = sbr.rel (%p14) target = $region8
  $region5: #{bottleneck_block.1} parent=0 // loop_body
    %s18 = ssub.s32 %s13, 1
    %s19 = ssub.s32 %s13, 2
    %s20 = sadd.s32 %s13, 1
    %s21 = ssub.s32 %s13, %s20
    %p22 = scmp.eq.s32.totalorder %s21, 0
    %s24 = sadd.s32 %s23, 1
    %s25 = scalar_select %p22, %s23, %s24
    %p28 = pneg %p22
    %p29 = scmp.eq.s32.totalorder %s13, 1
    %p30 = por %p28, %p29
    %p31 = scmp.ne.s32.totalorder %s23, %s26
    %p32 = scmp.eq.s32.totalorder %s13, 0
    %p33 = por %p31, %p32
    %p34 = scmp.ne.s32.totalorder %s23, %s26
    %p35 = scmp.eq.s32.totalorder %s18, 1
    %p36 = por %p34, %p35
    %p37 = scmp.ne.s32.totalorder %s26, %s27
    %p38 = scmp.eq.s32.totalorder %s18, 0
    %p39 = por %p37, %p38
    %p40 = scmp.ne.s32.totalorder %s26, %s27
    %p41 = scmp.eq.s32.totalorder %s19, 1
    %p42 = por %p40, %p41
    %p44 = scmp.ne.s32.totalorder %s27, %s43
    %p45 = scmp.eq.s32.totalorder %s19, 0
    %p46 = por %p44, %p45
    %s48 = sadd.s32 %s47, 1
    %p51 = scmp.eq.s32.totalorder %s13, 1
    %p52 = scmp.ne.s32.totalorder %s47, %s49
    %p53 = scmp.eq.s32.totalorder %s13, 0
    %p54 = por %p52, %p53
    %p55 = scmp.ne.s32.totalorder %s47, %s49
    %p56 = scmp.eq.s32.totalorder %s18, 1
    %p57 = por %p55, %p56
    %p58 = scmp.ne.s32.totalorder %s49, %s50
    %p59 = scmp.eq.s32.totalorder %s18, 0
    %p60 = por %p58, %p59
    %p61 = scmp.ne.s32.totalorder %s49, %s50
    %p62 = scmp.eq.s32.totalorder %s19, 1
    %p63 = por %p61, %p62
    %p65 = scmp.ne.s32.totalorder %s50, %s64
    %p66 = scmp.eq.s32.totalorder %s19, 0
    %p67 = por %p65, %p66
    %s69 = sadd.s32 %s68, 1
    %p72 = scmp.eq.s32.totalorder %s13, 1
    %p73 = scmp.ne.s32.totalorder %s68, %s70
    %p74 = scmp.eq.s32.totalorder %s13, 0
    %p75 = por %p73, %p74
    %p76 = scmp.ne.s32.totalorder %s68, %s70
    %p77 = scmp.eq.s32.totalorder %s18, 1
    %p78 = por %p76, %p77
    %p79 = scmp.ne.s32.totalorder %s70, %s71
    %p80 = scmp.eq.s32.totalorder %s18, 0
    %p81 = por %p79, %p80
    %p82 = scmp.ne.s32.totalorder %s70, %s71
    %p83 = scmp.eq.s32.totalorder %s19, 1
    %p84 = por %p82, %p83
    %p86 = scmp.ne.s32.totalorder %s71, %s85
    %p87 = scmp.eq.s32.totalorder %s19, 0
    %p88 = por %p86, %p87
    %s90 = sadd.s32 %s89, 1
    %p93 = scmp.eq.s32.totalorder %s13, 1
    %p94 = scmp.ne.s32.totalorder %s89, %s91
    %p95 = scmp.eq.s32.totalorder %s13, 0
    %p96 = por %p94, %p95
    %p97 = scmp.ne.s32.totalorder %s89, %s91
    %p98 = scmp.eq.s32.totalorder %s18, 1
    %p99 = por %p97, %p98
    %p100 = scmp.ne.s32.totalorder %s91, %s92
    %p101 = scmp.eq.s32.totalorder %s18, 0
    %p102 = por %p100, %p101
    %p103 = scmp.ne.s32.totalorder %s91, %s92
    %p104 = scmp.eq.s32.totalorder %s19, 1
    %p105 = por %p103, %p104
    %p107 = scmp.ne.s32.totalorder %s92, %s106
    %p108 = scmp.eq.s32.totalorder %s19, 0
    %p109 = por %p107, %p108
    %s111 = sadd.s32 %s110, 1
    %p114 = scmp.eq.s32.totalorder %s13, 1
    %p115 = scmp.ne.s32.totalorder %s110, %s112
    %p116 = scmp.eq.s32.totalorder %s13, 0
    %p117 = por %p115, %p116
    %p118 = scmp.ne.s32.totalorder %s110, %s112
    %p119 = scmp.eq.s32.totalorder %s18, 1
    %p120 = por %p118, %p119
    %p121 = scmp.ne.s32.totalorder %s112, %s113
    %p122 = scmp.eq.s32.totalorder %s18, 0
    %p123 = por %p121, %p122
    %p124 = scmp.ne.s32.totalorder %s112, %s113
    %p125 = scmp.eq.s32.totalorder %s19, 1
    %p126 = por %p124, %p125
    %p128 = scmp.ne.s32.totalorder %s113, %s127
    %p129 = scmp.eq.s32.totalorder %s19, 0
    %p130 = por %p128, %p129
    %s132 = sadd.s32 %s131, 1
    %p135 = scmp.eq.s32.totalorder %s13, 1
    %p136 = scmp.ne.s32.totalorder %s131, %s133
    %p137 = scmp.eq.s32.totalorder %s13, 0
    %p138 = por %p136, %p137
    %p139 = scmp.ne.s32.totalorder %s131, %s133
    %p140 = scmp.eq.s32.totalorder %s18, 1
    %p141 = por %p139, %p140
    %p142 = scmp.ne.s32.totalorder %s133, %s134
    %p143 = scmp.eq.s32.totalorder %s18, 0
    %p144 = por %p142, %p143
    %p145 = scmp.ne.s32.totalorder %s133, %s134
    %p146 = scmp.eq.s32.totalorder %s19, 1
    %p147 = por %p145, %p146
    %p149 = scmp.ne.s32.totalorder %s134, %s148
    %p150 = scmp.eq.s32.totalorder %s19, 0
    %p151 = por %p149, %p150
    %s153 = sadd.s32 %s152, 1
    %p156 = scmp.eq.s32.totalorder %s13, 1
    %p157 = scmp.ne.s32.totalorder %s152, %s154
    %p158 = scmp.eq.s32.totalorder %s13, 0
    %p159 = por %p157, %p158
    %p160 = scmp.ne.s32.totalorder %s152, %s154
    %p161 = scmp.eq.s32.totalorder %s18, 1
    %p162 = por %p160, %p161
    %p163 = scmp.ne.s32.totalorder %s154, %s155
    %p164 = scmp.eq.s32.totalorder %s18, 0
    %p165 = por %p163, %p164
    %p166 = scmp.ne.s32.totalorder %s154, %s155
    %p167 = scmp.eq.s32.totalorder %s19, 1
    %p168 = por %p166, %p167
    %p170 = scmp.ne.s32.totalorder %s155, %s169
    %p171 = scmp.eq.s32.totalorder %s19, 0
    %p172 = por %p170, %p171
    %s173 = ssub.s32 %s13, %s20
    %p174 = scmp.eq.s32.totalorder %s173, 0
    %s176 = sadd.s32 %s175, 1
    %s177 = scalar_select %p174, %s175, %s176
    %p180 = pneg %p174
    %p181 = scmp.eq.s32.totalorder %s13, 1
    %p182 = por %p180, %p181
    %p183 = scmp.ne.s32.totalorder %s175, %s178
    %p184 = scmp.eq.s32.totalorder %s13, 0
    %p185 = por %p183, %p184
    %p186 = scmp.ne.s32.totalorder %s175, %s178
    %p187 = scmp.eq.s32.totalorder %s18, 1
    %p188 = por %p186, %p187
    %p189 = scmp.ne.s32.totalorder %s178, %s179
    %p190 = scmp.eq.s32.totalorder %s18, 0
    %p191 = por %p189, %p190
    %p192 = scmp.ne.s32.totalorder %s178, %s179
    %p193 = scmp.eq.s32.totalorder %s19, 1
    %p194 = por %p192, %p193
    %p196 = scmp.ne.s32.totalorder %s179, %s195
    %p197 = scmp.eq.s32.totalorder %s19, 0
    %p198 = por %p196, %p197
    %p199 = scmp.le.s32.totalorder 1, %s13
    %p200 = scmp.lt.s32.totalorder %s13, 3
    %p201 = pnand %p199, %p200
    %p202 = pneg %p201
    // Predicated region
    $region9: #{bottleneck_block.1} parent=5 // pred_check
      _
    $region10: #{bottleneck_block.1} parent=5 // pred_check_branch
      %204 = sbr.rel (%p201) target = $region12
    $region11: #{bottleneck_block.1} parent=5 // pred_region
      %s205 = ssub.s32 %s13, 1
      // Predicated region
      $region13: #{bottleneck_block.1} parent=11 // pred_check
        %p206 = pneg %p60
      $region14: #{bottleneck_block.1} parent=11 // pred_check_branch
        %208 = sbr.rel (%p206) target = $region16
      $region15: #{bottleneck_block.1} parent=11 // pred_region
        _
      $region16: #{bottleneck_block.1} parent=11 // pred_fallthru
        _
      // Predicated region
      $region17: #{bottleneck_block.1} parent=11 // pred_check
        %p209 = pneg %p81
      $region18: #{bottleneck_block.1} parent=11 // pred_check_branch
        %211 = sbr.rel (%p209) target = $region20
      $region19: #{bottleneck_block.1} parent=11 // pred_region
        _
      $region20: #{bottleneck_block.1} parent=11 // pred_fallthru
        _
      // Predicated region
      $region21: #{bottleneck_block.1} parent=11 // pred_check
        %p212 = pneg %p102
      $region22: #{bottleneck_block.1} parent=11 // pred_check_branch
        %214 = sbr.rel (%p212) target = $region24
      $region23: #{bottleneck_block.1} parent=11 // pred_region
        _
      $region24: #{bottleneck_block.1} parent=11 // pred_fallthru
        _
      // Predicated region
      $region25: #{bottleneck_block.1} parent=11 // pred_check
        %p215 = pneg %p123
      $region26: #{bottleneck_block.1} parent=11 // pred_check_branch
        %217 = sbr.rel (%p215) target = $region28
      $region27: #{bottleneck_block.1} parent=11 // pred_region
        _
      $region28: #{bottleneck_block.1} parent=11 // pred_fallthru
        _
      // Predicated region
      $region29: #{bottleneck_block.1} parent=11 // pred_check
        %p218 = pneg %p144
      $region30: #{bottleneck_block.1} parent=11 // pred_check_branch
        %220 = sbr.rel (%p218) target = $region32
      $region31: #{bottleneck_block.1} parent=11 // pred_region
        _
      $region32: #{bottleneck_block.1} parent=11 // pred_fallthru
        _
      // Predicated region
      $region33: #{bottleneck_block.1} parent=11 // pred_check
        %p221 = pneg %p165
      $region34: #{bottleneck_block.1} parent=11 // pred_check_branch
        %223 = sbr.rel (%p221) target = $region36
      $region35: #{bottleneck_block.1} parent=11 // pred_region
        _
      $region36: #{bottleneck_block.1} parent=11 // pred_fallthru
        _
    $region12: #{bottleneck_block.1} parent=5 // pred_fallthru
      _
    %p224 = scmp.lt.s32.totalorder %s13, 2
    // Predicated region
    $region37: #{bottleneck_block.1} parent=5 // pred_check
      %p225 = pneg %p224
    $region38: #{bottleneck_block.1} parent=5 // pred_check_branch
      %227 = sbr.rel (%p225) target = $region40
    $region39: #{bottleneck_block.1} parent=5 // pred_region
      // Predicated region
      $region41: #{bottleneck_block.1} parent=39 // pred_check
        %p228 = pneg %p33
      $region42: #{bottleneck_block.1} parent=39 // pred_check_branch
        %230 = sbr.rel (%p228) target = $region44
      $region43: #{bottleneck_block.1} parent=39 // pred_region
        %p231 = scmp.lt.s32.totalorder %s13, 1
        %s232 = scalar_select %p231, %s13, 1
        %s233 = smul.addr %s232, 32
        %s234 = smul.addr %s233, 8
        %s235 = scalar_lea.vmem %s0, %s234
      $region44: #{bottleneck_block.1} parent=39 // pred_fallthru
        _
    $region40: #{bottleneck_block.1} parent=5 // pred_fallthru
      _
    %p236 = scmp.le.s32.totalorder 1, %s13
    %p237 = scmp.lt.s32.totalorder %s13, 3
    %p238 = pnand %p236, %p237
    %p239 = pneg %p238
    // Predicated region
    $region45: #{bottleneck_block.1} parent=5 // pred_check
      _
    $region46: #{bottleneck_block.1} parent=5 // pred_check_branch
      %241 = sbr.rel (%p238) target = $region48
    $region47: #{bottleneck_block.1} parent=5 // pred_region
      %s242 = ssub.s32 %s13, 1
      %p243 = scmp.lt.s32.totalorder %s18, 1
      %s244 = scalar_select %p243, %s18, 1
      %s245 = smul.addr %s244, 32
      %s246 = smul.addr %s245, 8
      %s247 = scalar_lea.vmem %s0, %s246
      %p248 = pneg %p39
      %p249 = pneg %p36
      %p250 = pneg %p60
      %p251 = pneg %p57
      %p252 = pneg %p81
      %p253 = pneg %p78
      %p254 = pneg %p102
      %p255 = pneg %p99
      %p256 = pneg %p123
      %p257 = pneg %p120
      %p258 = pneg %p144
      %p259 = pneg %p141
      %p260 = pneg %p165
      %p261 = pneg %p162
      %p262 = pneg %p191
      %p263 = pneg %p188
      %p264 = scmp.lt.s32.totalorder %s18, 1
      %s265 = scalar_select %p264, %s18, 1
      %s266 = smul.addr %s265, 32
      %s267 = smul.addr %s266, 8
      %s268 = scalar_lea.vmem %s7, %s267
      %p269 = scmp.lt.s32.totalorder %s18, 1
      %s270 = scalar_select %p269, %s18, 1
      %s271 = smul.addr %s270, 32
      %s272 = smul.addr %s271, 8
      %s273 = scalar_lea.vmem %s0, %s272
      %p274 = scmp.lt.s32.totalorder %s18, 1
      %s275 = scalar_select %p274, %s18, 1
      %s276 = smul.addr %s275, 32
      %s277 = smul.addr %s276, 8
      %s278 = scalar_lea.vmem %s7, %s277
      %v280 = vld [vmem:[%s273] sm:$0xff]
      %v281 = vld [vmem:[%s273 + $0x8] sm:$0xff]
      %v282 = vld [vmem:[%s273 + $0x10] sm:$0xff]
      %v283 = vld [vmem:[%s273 + $0x18] sm:$0xff]
      %v284 = vld [vmem:[%s273 + $0x20] sm:$0xff]
      %v285 = vld [vmem:[%s273 + $0x28] sm:$0xff]
      %v286 = vld [vmem:[%s273 + $0x30] sm:$0xff]
      %v287 = vld [vmem:[%s273 + $0x38] sm:$0xff]
      %v288 = vld [vmem:[%s273 + $0x40] sm:$0xff]
      %v289 = vld [vmem:[%s273 + $0x48] sm:$0xff]
      %v290 = vld [vmem:[%s273 + $0x50] sm:$0xff]
      %v291 = vld [vmem:[%s273 + $0x58] sm:$0xff]
      %v292 = vld [vmem:[%s273 + $0x60] sm:$0xff]
      %v293 = vld [vmem:[%s273 + $0x68] sm:$0xff]
      %v294 = vld [vmem:[%s273 + $0x70] sm:$0xff]
      %v295 = vld [vmem:[%s273 + $0x78] sm:$0xff]
      %v296 = vld [vmem:[%s273 + $0x80] sm:$0xff]
      %v297 = vld [vmem:[%s273 + $0x88] sm:$0xff]
      %v298 = vld [vmem:[%s273 + $0x90] sm:$0xff]
      %v299 = vld [vmem:[%s273 + $0x98] sm:$0xff]
      %v300 = vld [vmem:[%s273 + $0xa0] sm:$0xff]
      %v301 = vld [vmem:[%s273 + $0xa8] sm:$0xff]
      %v302 = vld [vmem:[%s273 + $0xb0] sm:$0xff]
      %v303 = vld [vmem:[%s273 + $0xb8] sm:$0xff]
      %v304 = vld [vmem:[%s273 + $0xc0] sm:$0xff]
      %v305 = vld [vmem:[%s273 + $0xc8] sm:$0xff]
      %v306 = vld [vmem:[%s273 + $0xd0] sm:$0xff]
      %v307 = vld [vmem:[%s273 + $0xd8] sm:$0xff]
      %v308 = vld [vmem:[%s273 + $0xe0] sm:$0xff]
      %v309 = vld [vmem:[%s273 + $0xe8] sm:$0xff]
      %v310 = vld [vmem:[%s273 + $0xf0] sm:$0xff]
      %v311 = vld [vmem:[%s273 + $0xf8] sm:$0xff]
      %v312 = vpack.c.bf16 %v281, %v280
      %v313 = vpack.c.bf16 %v283, %v282
      %v314 = vpack.c.bf16 %v285, %v284
      %v315 = vpack.c.bf16 %v287, %v286
      %v316 = vpack.c.bf16 %v289, %v288
      %v317 = vpack.c.bf16 %v291, %v290
      %v318 = vpack.c.bf16 %v293, %v292
      %v319 = vpack.c.bf16 %v295, %v294
      %v320 = vpack.c.bf16 %v297, %v296
      %v321 = vpack.c.bf16 %v299, %v298
      %v322 = vpack.c.bf16 %v301, %v300
      %v323 = vpack.c.bf16 %v303, %v302
      %v324 = vpack.c.bf16 %v305, %v304
      %v325 = vpack.c.bf16 %v307, %v306
      %v326 = vpack.c.bf16 %v309, %v308
      %v327 = vpack.c.bf16 %v311, %v310
      %v328 = vld [vmem:[%s1] sm:$0xf]
      %v329 = vld [vmem:[%s1 + $0x4] sm:$0xf]
      %v330 = vld [vmem:[%s2] sm:$0x1]
      %v332 = vperm.slane %v330, 0
      %v336 = vunpack.c.l.b16 %v328
      %v337 = vunpack.c.l.b16 %v329
      %v338 = vpack.c.b16 %v337, %v336
      %vm340 = vcmask 130048
      %v342 = vsel %vm340, %v312, 0
      %v345 = vsel %vm340, %v313, 0
      %v348 = vsel %vm340, %v314, 0
      %v351 = vsel %vm340, %v315, 0
      %v354 = vsel %vm340, %v316, 0
      %v357 = vsel %vm340, %v317, 0
      %v360 = vsel %vm340, %v318, 0
      %v363 = vsel %vm340, %v319, 0
      %v366 = vsel %vm340, %v320, 0
      %v369 = vsel %vm340, %v321, 0
      %v372 = vsel %vm340, %v322, 0
      %v375 = vsel %vm340, %v323, 0
      %v378 = vsel %vm340, %v324, 0
      %v381 = vsel %vm340, %v325, 0
      %v384 = vsel %vm340, %v326, 0
      %v387 = vsel %vm340, %v327, 0
      %389 = vmatpush.bf16.msra.mxu0 0
      %390 = vmatpush.bf16.msra.mxu0 0
      %391 = vmatpush.bf16.msra.mxu0 0
      %392 = vmatpush.bf16.msra.mxu0 0
      %393 = vmatpush.bf16.msra.mxu0 0
      %394 = vmatpush.bf16.msra.mxu0 0
      %395 = vmatpush.bf16.msra.mxu0 0
      %396 = vmatpush.bf16.msra.mxu0 %v338
      %397 = vmatmul.bf16.gmra.mxu0 %v342
      %v398 = vpop.f32.mrf.mxu0
      %v399 = vadd.f32 %v332, %v398
      %v400 = vpop.f32.mrf.mxu0
      %v401 = vadd.f32 %v332, %v400
      %402 = vmatmul.bf16.gmra.mxu0 %v345
      %v403 = vpop.f32.mrf.mxu0
      %v404 = vadd.f32 %v332, %v403
      %v405 = vpop.f32.mrf.mxu0
      %v406 = vadd.f32 %v332, %v405
      %407 = vmatmul.bf16.gmra.mxu0 %v348
      %v408 = vpop.f32.mrf.mxu0
      %v409 = vadd.f32 %v332, %v408
      %v410 = vpop.f32.mrf.mxu0
      %v411 = vadd.f32 %v332, %v410
      %412 = vmatmul.bf16.gmra.mxu0 %v351
      %v413 = vpop.f32.mrf.mxu0
      %v414 = vadd.f32 %v332, %v413
      %v415 = vpop.f32.mrf.mxu0
      %v416 = vadd.f32 %v332, %v415
      %417 = vmatmul.bf16.gmra.mxu0 %v354
      %v418 = vpop.f32.mrf.mxu0
      %v419 = vadd.f32 %v332, %v418
      %v420 = vpop.f32.mrf.mxu0
      %v421 = vadd.f32 %v332, %v420
      %422 = vmatmul.bf16.gmra.mxu0 %v357
      %v423 = vpop.f32.mrf.mxu0
      %v424 = vadd.f32 %v332, %v423
      %v425 = vpop.f32.mrf.mxu0
      %v426 = vadd.f32 %v332, %v425
      %427 = vmatmul.bf16.gmra.mxu0 %v360
      %v428 = vpop.f32.mrf.mxu0
      %v429 = vadd.f32 %v332, %v428
      %v430 = vpop.f32.mrf.mxu0
      %v431 = vadd.f32 %v332, %v430
      %432 = vmatmul.bf16.gmra.mxu0 %v363
      %v433 = vpop.f32.mrf.mxu0
      %v434 = vadd.f32 %v332, %v433
      %v435 = vpop.f32.mrf.mxu0
      %v436 = vadd.f32 %v332, %v435
      %437 = vmatmul.bf16.gmra.mxu0 %v366
      %v438 = vpop.f32.mrf.mxu0
      %v439 = vadd.f32 %v332, %v438
      %v440 = vpop.f32.mrf.mxu0
      %v441 = vadd.f32 %v332, %v440
      %442 = vmatmul.bf16.gmra.mxu0 %v369
      %v443 = vpop.f32.mrf.mxu0
      %v444 = vadd.f32 %v332, %v443
      %v445 = vpop.f32.mrf.mxu0
      %v446 = vadd.f32 %v332, %v445
      %447 = vmatmul.bf16.gmra.mxu0 %v372
      %v448 = vpop.f32.mrf.mxu0
      %v449 = vadd.f32 %v332, %v448
      %v450 = vpop.f32.mrf.mxu0
      %v451 = vadd.f32 %v332, %v450
      %452 = vmatmul.bf16.gmra.mxu0 %v375
      %v453 = vpop.f32.mrf.mxu0
      %v454 = vadd.f32 %v332, %v453
      %v455 = vpop.f32.mrf.mxu0
      %v456 = vadd.f32 %v332, %v455
      %457 = vmatmul.bf16.gmra.mxu0 %v378
      %v458 = vpop.f32.mrf.mxu0
      %v459 = vadd.f32 %v332, %v458
      %v460 = vpop.f32.mrf.mxu0
      %v461 = vadd.f32 %v332, %v460
      %462 = vmatmul.bf16.gmra.mxu0 %v381
      %v463 = vpop.f32.mrf.mxu0
      %v464 = vadd.f32 %v332, %v463
      %v465 = vpop.f32.mrf.mxu0
      %v466 = vadd.f32 %v332, %v465
      %467 = vmatmul.bf16.gmra.mxu0 %v384
      %v468 = vpop.f32.mrf.mxu0
      %v469 = vadd.f32 %v332, %v468
      %v470 = vpop.f32.mrf.mxu0
      %v471 = vadd.f32 %v332, %v470
      %472 = vmatmul.bf16.gmra.mxu0 %v387
      %v473 = vpop.f32.mrf.mxu0
      %v474 = vadd.f32 %v332, %v473
      %v475 = vpop.f32.mrf.mxu0
      %v476 = vadd.f32 %v332, %v475
      %477 = vdwg.mxu0
      %v478 = vmax.f32 %v399, 0.0
      %v479 = vmax.f32 %v401, 0.0
      %v480 = vmax.f32 %v404, 0.0
      %v481 = vmax.f32 %v406, 0.0
      %v482 = vmax.f32 %v409, 0.0
      %v483 = vmax.f32 %v411, 0.0
      %v484 = vmax.f32 %v414, 0.0
      %v485 = vmax.f32 %v416, 0.0
      %v486 = vmax.f32 %v419, 0.0
      %v487 = vmax.f32 %v421, 0.0
      %v488 = vmax.f32 %v424, 0.0
      %v489 = vmax.f32 %v426, 0.0
      %v490 = vmax.f32 %v429, 0.0
      %v491 = vmax.f32 %v431, 0.0
      %v492 = vmax.f32 %v434, 0.0
      %v493 = vmax.f32 %v436, 0.0
      %v494 = vmax.f32 %v439, 0.0
      %v495 = vmax.f32 %v441, 0.0
      %v496 = vmax.f32 %v444, 0.0
      %v497 = vmax.f32 %v446, 0.0
      %v498 = vmax.f32 %v449, 0.0
      %v499 = vmax.f32 %v451, 0.0
      %v500 = vmax.f32 %v454, 0.0
      %v501 = vmax.f32 %v456, 0.0
      %v502 = vmax.f32 %v459, 0.0
      %v503 = vmax.f32 %v461, 0.0
      %v504 = vmax.f32 %v464, 0.0
      %v505 = vmax.f32 %v466, 0.0
      %v506 = vmax.f32 %v469, 0.0
      %v507 = vmax.f32 %v471, 0.0
      %v508 = vmax.f32 %v474, 0.0
      %v509 = vmax.f32 %v476, 0.0
      %vm510 = vcmask 31744
      %511 = vst.msk [vmem:[#allocation2] sm:$0xff] %vm510, 0.0
      %512 = vst.msk [vmem:[#allocation2 + $0x20] sm:$0xff] %vm510, 0.0
      %513 = vst.msk [vmem:[#allocation2 + $0x40] sm:$0xff] %vm510, 0.0
      %514 = vst.msk [vmem:[#allocation2 + $0x60] sm:$0xff] %vm510, 0.0
      %515 = vst.msk [vmem:[#allocation2 + $0x80] sm:$0xff] %vm510, 0.0
      %516 = vst.msk [vmem:[#allocation2 + $0xa0] sm:$0xff] %vm510, 0.0
      %517 = vst.msk [vmem:[#allocation2 + $0xc0] sm:$0xff] %vm510, 0.0
      %518 = vst.msk [vmem:[#allocation2 + $0xe0] sm:$0xff] %vm510, 0.0
      %519 = vst.msk [vmem:[#allocation2 + $0x100] sm:$0xff] %vm510, 0.0
      %520 = vst.msk [vmem:[#allocation2 + $0x120] sm:$0xff] %vm510, 0.0
      %521 = vst.msk [vmem:[#allocation2 + $0x140] sm:$0xff] %vm510, 0.0
      %522 = vst.msk [vmem:[#allocation2 + $0x160] sm:$0xff] %vm510, 0.0
      %523 = vst.msk [vmem:[#allocation2 + $0x180] sm:$0xff] %vm510, 0.0
      %524 = vst.msk [vmem:[#allocation2 + $0x1a0] sm:$0xff] %vm510, 0.0
      %525 = vst.msk [vmem:[#allocation2 + $0x1c0] sm:$0xff] %vm510, 0.0
      %526 = vst.msk [vmem:[#allocation2 + $0x1e0] sm:$0xff] %vm510, 0.0
      %527 = vst.msk [vmem:[#allocation2 + $0x200] sm:$0xff] %vm510, 0.0
      %528 = vst.msk [vmem:[#allocation2 + $0x220] sm:$0xff] %vm510, 0.0
      %529 = vst.msk [vmem:[#allocation2 + $0x18] sm:$0xff] %vm510, 0.0
      %530 = vst.msk [vmem:[#allocation2 + $0x38] sm:$0xff] %vm510, 0.0
      %531 = vst.msk [vmem:[#allocation2 + $0x58] sm:$0xff] %vm510, 0.0
      %532 = vst.msk [vmem:[#allocation2 + $0x78] sm:$0xff] %vm510, 0.0
      %533 = vst.msk [vmem:[#allocation2 + $0x98] sm:$0xff] %vm510, 0.0
      %534 = vst.msk [vmem:[#allocation2 + $0xb8] sm:$0xff] %vm510, 0.0
      %535 = vst.msk [vmem:[#allocation2 + $0xd8] sm:$0xff] %vm510, 0.0
      %536 = vst.msk [vmem:[#allocation2 + $0xf8] sm:$0xff] %vm510, 0.0
      %537 = vst.msk [vmem:[#allocation2 + $0x118] sm:$0xff] %vm510, 0.0
      %538 = vst.msk [vmem:[#allocation2 + $0x138] sm:$0xff] %vm510, 0.0
      %539 = vst.msk [vmem:[#allocation2 + $0x158] sm:$0xff] %vm510, 0.0
      %540 = vst.msk [vmem:[#allocation2 + $0x178] sm:$0xff] %vm510, 0.0
      %541 = vst.msk [vmem:[#allocation2 + $0x198] sm:$0xff] %vm510, 0.0
      %542 = vst.msk [vmem:[#allocation2 + $0x1b8] sm:$0xff] %vm510, 0.0
      %543 = vst.msk [vmem:[#allocation2 + $0x1d8] sm:$0xff] %vm510, 0.0
      %544 = vst.msk [vmem:[#allocation2 + $0x1f8] sm:$0xff] %vm510, 0.0
      %545 = vst.msk [vmem:[#allocation2 + $0x218] sm:$0xff] %vm510, 0.0
      %546 = vst.msk [vmem:[#allocation2 + $0x238] sm:$0xff] %vm510, 0.0
      %547 = vst.msk [vmem:[#allocation2 + $0x8] sm:$0xff] %vm510, 0.0
      %548 = vst.msk [vmem:[#allocation2 + $0x10] sm:$0xff] %vm510, 0.0
      %s549 = scalar_lea.vmem [#allocation2], 544
      %550 = vst.msk [vmem:[%s549 + $0x8] sm:$0xff] %vm510, 0.0
      %551 = vst.msk [vmem:[%s549 + $0x10] sm:$0xff] %vm510, 0.0
      %s552 = scalar_lea.vmem [#allocation2], 32
      %553 = vst.msk [vmem:[%s552 + $0x8] sm:$0xff] %vm510, %v478
      %554 = vst.msk [vmem:[%s552 + $0x10] sm:$0xff] %vm510, %v479
      %555 = vst.msk [vmem:[%s552 + $0x28] sm:$0xff] %vm510, %v480
      %556 = vst.msk [vmem:[%s552 + $0x30] sm:$0xff] %vm510, %v481
      %557 = vst.msk [vmem:[%s552 + $0x48] sm:$0xff] %vm510, %v482
      %558 = vst.msk [vmem:[%s552 + $0x50] sm:$0xff] %vm510, %v483
      %559 = vst.msk [vmem:[%s552 + $0x68] sm:$0xff] %vm510, %v484
      %560 = vst.msk [vmem:[%s552 + $0x70] sm:$0xff] %vm510, %v485
      %561 = vst.msk [vmem:[%s552 + $0x88] sm:$0xff] %vm510, %v486
      %562 = vst.msk [vmem:[%s552 + $0x90] sm:$0xff] %vm510, %v487
      %563 = vst.msk [vmem:[%s552 + $0xa8] sm:$0xff] %vm510, %v488
      %564 = vst.msk [vmem:[%s552 + $0xb0] sm:$0xff] %vm510, %v489
      %565 = vst.msk [vmem:[%s552 + $0xc8] sm:$0xff] %vm510, %v490
      %566 = vst.msk [vmem:[%s552 + $0xd0] sm:$0xff] %vm510, %v491
      %567 = vst.msk [vmem:[%s552 + $0xe8] sm:$0xff] %vm510, %v492
      %568 = vst.msk [vmem:[%s552 + $0xf0] sm:$0xff] %vm510, %v493
      %569 = vst.msk [vmem:[%s552 + $0x108] sm:$0xff] %vm510, %v494
      %570 = vst.msk [vmem:[%s552 + $0x110] sm:$0xff] %vm510, %v495
      %571 = vst.msk [vmem:[%s552 + $0x128] sm:$0xff] %vm510, %v496
      %572 = vst.msk [vmem:[%s552 + $0x130] sm:$0xff] %vm510, %v497
      %573 = vst.msk [vmem:[%s552 + $0x148] sm:$0xff] %vm510, %v498
      %574 = vst.msk [vmem:[%s552 + $0x150] sm:$0xff] %vm510, %v499
      %575 = vst.msk [vmem:[%s552 + $0x168] sm:$0xff] %vm510, %v500
      %576 = vst.msk [vmem:[%s552 + $0x170] sm:$0xff] %vm510, %v501
      %577 = vst.msk [vmem:[%s552 + $0x188] sm:$0xff] %vm510, %v502
      %578 = vst.msk [vmem:[%s552 + $0x190] sm:$0xff] %vm510, %v503
      %579 = vst.msk [vmem:[%s552 + $0x1a8] sm:$0xff] %vm510, %v504
      %580 = vst.msk [vmem:[%s552 + $0x1b0] sm:$0xff] %vm510, %v505
      %581 = vst.msk [vmem:[%s552 + $0x1c8] sm:$0xff] %vm510, %v506
      %582 = vst.msk [vmem:[%s552 + $0x1d0] sm:$0xff] %vm510, %v507
      %583 = vst.msk [vmem:[%s552 + $0x1e8] sm:$0xff] %vm510, %v508
      %584 = vst.msk [vmem:[%s552 + $0x1f0] sm:$0xff] %vm510, %v509
      %585 = vst.msk [vmem:[#allocation3] sm:$0xff] %vm510, 0.0
      %586 = vst.msk [vmem:[#allocation3 + $0x8] sm:$0xff] %vm510, 0.0
      %587 = vst.msk [vmem:[#allocation3 + $0x10] sm:$0xff] %vm510, 0.0
      %588 = vst.msk [vmem:[#allocation3 + $0x18] sm:$0xff] %vm510, 0.0
      %589 = vst.msk [vmem:[#allocation3 + $0x20] sm:$0xff] %vm510, 0.0
      %590 = vst.msk [vmem:[#allocation3 + $0x28] sm:$0xff] %vm510, 0.0
      %591 = vst.msk [vmem:[#allocation3 + $0x30] sm:$0xff] %vm510, 0.0
      %592 = vst.msk [vmem:[#allocation3 + $0x38] sm:$0xff] %vm510, 0.0
      %593 = vst.msk [vmem:[#allocation3 + $0x40] sm:$0xff] %vm510, 0.0
      %594 = vst.msk [vmem:[#allocation3 + $0x48] sm:$0xff] %vm510, 0.0
      %595 = vst.msk [vmem:[#allocation3 + $0x50] sm:$0xff] %vm510, 0.0
      %596 = vst.msk [vmem:[#allocation3 + $0x58] sm:$0xff] %vm510, 0.0
      %597 = vst.msk [vmem:[#allocation3 + $0x60] sm:$0xff] %vm510, 0.0
      %598 = vst.msk [vmem:[#allocation3 + $0x68] sm:$0xff] %vm510, 0.0
      %599 = vst.msk [vmem:[#allocation3 + $0x70] sm:$0xff] %vm510, 0.0
      %600 = vst.msk [vmem:[#allocation3 + $0x78] sm:$0xff] %vm510, 0.0
      %601 = vst.msk [vmem:[#allocation3 + $0x80] sm:$0xff] %vm510, 0.0
      %602 = vst.msk [vmem:[#allocation3 + $0x88] sm:$0xff] %vm510, 0.0
      %603 = vst.msk [vmem:[#allocation3 + $0x90] sm:$0xff] %vm510, 0.0
      %604 = vst.msk [vmem:[#allocation3 + $0x98] sm:$0xff] %vm510, 0.0
      %605 = vst.msk [vmem:[#allocation3 + $0xa0] sm:$0xff] %vm510, 0.0
      %606 = vst.msk [vmem:[#allocation3 + $0xa8] sm:$0xff] %vm510, 0.0
      %607 = vst.msk [vmem:[#allocation3 + $0xb0] sm:$0xff] %vm510, 0.0
      %608 = vst.msk [vmem:[#allocation3 + $0xb8] sm:$0xff] %vm510, 0.0
      %609 = vst.msk [vmem:[#allocation3 + $0xc0] sm:$0xff] %vm510, 0.0
      %610 = vst.msk [vmem:[#allocation3 + $0xc8] sm:$0xff] %vm510, 0.0
      %611 = vst.msk [vmem:[#allocation3 + $0xd0] sm:$0xff] %vm510, 0.0
      %612 = vst.msk [vmem:[#allocation3 + $0xd8] sm:$0xff] %vm510, 0.0
      %613 = vst.msk [vmem:[#allocation3 + $0xe0] sm:$0xff] %vm510, 0.0
      %614 = vst.msk [vmem:[#allocation3 + $0xe8] sm:$0xff] %vm510, 0.0
      %615 = vst.msk [vmem:[#allocation3 + $0xf0] sm:$0xff] %vm510, 0.0
      %616 = vst.msk [vmem:[#allocation3 + $0xf8] sm:$0xff] %vm510, 0.0
      %v617 = vld [vmem:[#allocation2 + $0x7] sm:$0xff]
      %v618 = vld [vmem:[#allocation2 + $0xf] sm:$0xff]
      %v619 = vld [vmem:[#allocation2 + $0x27] sm:$0xff]
      %v620 = vld [vmem:[#allocation2 + $0x2f] sm:$0xff]
      %v621 = vld [vmem:[#allocation2 + $0x47] sm:$0xff]
      %v622 = vld [vmem:[#allocation2 + $0x4f] sm:$0xff]
      %v623 = vld [vmem:[#allocation2 + $0x67] sm:$0xff]
      %v624 = vld [vmem:[#allocation2 + $0x6f] sm:$0xff]
      %v625 = vld [vmem:[#allocation2 + $0x87] sm:$0xff]
      %v626 = vld [vmem:[#allocation2 + $0x8f] sm:$0xff]
      %v627 = vld [vmem:[#allocation2 + $0xa7] sm:$0xff]
      %v628 = vld [vmem:[#allocation2 + $0xaf] sm:$0xff]
      %v629 = vld [vmem:[#allocation2 + $0xc7] sm:$0xff]
      %v630 = vld [vmem:[#allocation2 + $0xcf] sm:$0xff]
      %v631 = vld [vmem:[#allocation2 + $0xe7] sm:$0xff]
      %v632 = vld [vmem:[#allocation2 + $0xef] sm:$0xff]
      %v633 = vld [vmem:[#allocation2 + $0x107] sm:$0xff]
      %v634 = vld [vmem:[#allocation2 + $0x10f] sm:$0xff]
      %v635 = vld [vmem:[#allocation2 + $0x127] sm:$0xff]
      %v636 = vld [vmem:[#allocation2 + $0x12f] sm:$0xff]
      %v637 = vld [vmem:[#allocation2 + $0x147] sm:$0xff]
      %v638 = vld [vmem:[#allocation2 + $0x14f] sm:$0xff]
      %v639 = vld [vmem:[#allocation2 + $0x167] sm:$0xff]
      %v640 = vld [vmem:[#allocation2 + $0x16f] sm:$0xff]
      %v641 = vld [vmem:[#allocation2 + $0x187] sm:$0xff]
      %v642 = vld [vmem:[#allocation2 + $0x18f] sm:$0xff]
      %v643 = vld [vmem:[#allocation2 + $0x1a7] sm:$0xff]
      %v644 = vld [vmem:[#allocation2 + $0x1af] sm:$0xff]
      %v645 = vld [vmem:[#allocation2 + $0x1c7] sm:$0xff]
      %v646 = vld [vmem:[#allocation2 + $0x1cf] sm:$0xff]
      %v647 = vld [vmem:[#allocation2 + $0x1e7] sm:$0xff]
      %v648 = vld [vmem:[#allocation2 + $0x1ef] sm:$0xff]
      %v649 = vld [vmem:[#allocation3] sm:$0xff]
      %v650 = vld [vmem:[#allocation3 + $0x8] sm:$0xff]
      %v651 = vld [vmem:[#allocation3 + $0x10] sm:$0xff]
      %v652 = vld [vmem:[#allocation3 + $0x18] sm:$0xff]
      %v653 = vld [vmem:[#allocation3 + $0x20] sm:$0xff]
      %v654 = vld [vmem:[#allocation3 + $0x28] sm:$0xff]
      %v655 = vld [vmem:[#allocation3 + $0x30] sm:$0xff]
      %v656 = vld [vmem:[#allocation3 + $0x38] sm:$0xff]
      %v657 = vld [vmem:[#allocation3 + $0x40] sm:$0xff]
      %v658 = vld [vmem:[#allocation3 + $0x48] sm:$0xff]
      %v659 = vld [vmem:[#allocation3 + $0x50] sm:$0xff]
      %v660 = vld [vmem:[#allocation3 + $0x58] sm:$0xff]
      %v661 = vld [vmem:[#allocation3 + $0x60] sm:$0xff]
      %v662 = vld [vmem:[#allocation3 + $0x68] sm:$0xff]
      %v663 = vld [vmem:[#allocation3 + $0x70] sm:$0xff]
      %v664 = vld [vmem:[#allocation3 + $0x78] sm:$0xff]
      %v665 = vld [vmem:[#allocation3 + $0x80] sm:$0xff]
      %v666 = vld [vmem:[#allocation3 + $0x88] sm:$0xff]
      %v667 = vld [vmem:[#allocation3 + $0x90] sm:$0xff]
      %v668 = vld [vmem:[#allocation3 + $0x98] sm:$0xff]
      %v669 = vld [vmem:[#allocation3 + $0xa0] sm:$0xff]
      %v670 = vld [vmem:[#allocation3 + $0xa8] sm:$0xff]
      %v671 = vld [vmem:[#allocation3 + $0xb0] sm:$0xff]
      %v672 = vld [vmem:[#allocation3 + $0xb8] sm:$0xff]
      %v673 = vld [vmem:[#allocation3 + $0xc0] sm:$0xff]
      %v674 = vld [vmem:[#allocation3 + $0xc8] sm:$0xff]
      %v675 = vld [vmem:[#allocation3 + $0xd0] sm:$0xff]
      %v676 = vld [vmem:[#allocation3 + $0xd8] sm:$0xff]
      %v677 = vld [vmem:[#allocation3 + $0xe0] sm:$0xff]
      %v678 = vld [vmem:[#allocation3 + $0xe8] sm:$0xff]
      %v679 = vld [vmem:[#allocation3 + $0xf0] sm:$0xff]
      %v680 = vld [vmem:[#allocation3 + $0xf8] sm:$0xff]
      %v681 = vpack.c.bf16 %v618, %v617
      %v682 = vpack.c.bf16 %v620, %v619
      %v683 = vpack.c.bf16 %v622, %v621
      %v684 = vpack.c.bf16 %v624, %v623
      %v685 = vpack.c.bf16 %v626, %v625
      %v686 = vpack.c.bf16 %v628, %v627
      %v687 = vpack.c.bf16 %v630, %v629
      %v688 = vpack.c.bf16 %v632, %v631
      %v689 = vpack.c.bf16 %v634, %v633
      %v690 = vpack.c.bf16 %v636, %v635
      %v691 = vpack.c.bf16 %v638, %v637
      %v692 = vpack.c.bf16 %v640, %v639
      %v693 = vpack.c.bf16 %v642, %v641
      %v694 = vpack.c.bf16 %v644, %v643
      %v695 = vpack.c.bf16 %v646, %v645
      %v696 = vpack.c.bf16 %v648, %v647
      %v697 = vld [vmem:[%s3] sm:$0x3]
      %v699 = vsel %vm510, %v681, 0
      %v702 = vsel %vm510, %v682, 0
      %v705 = vsel %vm510, %v683, 0
      %v708 = vsel %vm510, %v684, 0
      %v711 = vsel %vm510, %v685, 0
      %v714 = vsel %vm510, %v686, 0
      %v717 = vsel %vm510, %v687, 0
      %v720 = vsel %vm510, %v688, 0
      %v723 = vsel %vm510, %v689, 0
      %v726 = vsel %vm510, %v690, 0
      %v729 = vsel %vm510, %v691, 0
      %v732 = vsel %vm510, %v692, 0
      %v735 = vsel %vm510, %v693, 0
      %v738 = vsel %vm510, %v694, 0
      %v741 = vsel %vm510, %v695, 0
      %v744 = vsel %vm510, %v696, 0
      %vm746 = vcmask 1041408
      %v748 = vsel %vm746, %v697, 0
      %750 = vmatpush.bf16.msra.mxu0 0
      %751 = vmatpush.bf16.msra.mxu0 0
      %752 = vmatpush.bf16.msra.mxu0 0
      %753 = vmatpush.bf16.msra.mxu0 0
      %754 = vmatpush.bf16.msra.mxu0 0
      %755 = vmatpush.bf16.msra.mxu0 0
      %756 = vmatpush.bf16.msra.mxu0 0
      %757 = vmatpush.bf16.msra.mxu0 %v748
      %758 = vmatmul.bf16.gmra.mxu0 %v699
      %v759 = vpop.f32.mrf.mxu0
      %v760 = vadd.f32 0.0, %v759
      %v761 = vpop.f32.mrf.mxu0
      %v762 = vadd.f32 0.0, %v761
      %763 = vmatmul.bf16.gmra.mxu0 %v702
      %v764 = vpop.f32.mrf.mxu0
      %v765 = vadd.f32 0.0, %v764
      %v766 = vpop.f32.mrf.mxu0
      %v767 = vadd.f32 0.0, %v766
      %768 = vmatmul.bf16.gmra.mxu0 %v705
      %v769 = vpop.f32.mrf.mxu0
      %v770 = vadd.f32 0.0, %v769
      %v771 = vpop.f32.mrf.mxu0
      %v772 = vadd.f32 0.0, %v771
      %773 = vmatmul.bf16.gmra.mxu0 %v708
      %v774 = vpop.f32.mrf.mxu0
      %v775 = vadd.f32 0.0, %v774
      %v776 = vpop.f32.mrf.mxu0
      %v777 = vadd.f32 0.0, %v776
      %778 = vmatmul.bf16.gmra.mxu0 %v711
      %v779 = vpop.f32.mrf.mxu0
      %v780 = vadd.f32 0.0, %v779
      %v781 = vpop.f32.mrf.mxu0
      %v782 = vadd.f32 0.0, %v781
      %783 = vmatmul.bf16.gmra.mxu0 %v714
      %v784 = vpop.f32.mrf.mxu0
      %v785 = vadd.f32 0.0, %v784
      %v786 = vpop.f32.mrf.mxu0
      %v787 = vadd.f32 0.0, %v786
      %788 = vmatmul.bf16.gmra.mxu0 %v717
      %v789 = vpop.f32.mrf.mxu0
      %v790 = vadd.f32 0.0, %v789
      %v791 = vpop.f32.mrf.mxu0
      %v792 = vadd.f32 0.0, %v791
      %793 = vmatmul.bf16.gmra.mxu0 %v720
      %v794 = vpop.f32.mrf.mxu0
      %v795 = vadd.f32 0.0, %v794
      %v796 = vpop.f32.mrf.mxu0
      %v797 = vadd.f32 0.0, %v796
      %798 = vmatmul.bf16.gmra.mxu0 %v723
      %v799 = vpop.f32.mrf.mxu0
      %v800 = vadd.f32 0.0, %v799
      %v801 = vpop.f32.mrf.mxu0
      %v802 = vadd.f32 0.0, %v801
      %803 = vmatmul.bf16.gmra.mxu0 %v726
      %v804 = vpop.f32.mrf.mxu0
      %v805 = vadd.f32 0.0, %v804
      %v806 = vpop.f32.mrf.mxu0
      %v807 = vadd.f32 0.0, %v806
      %808 = vmatmul.bf16.gmra.mxu0 %v729
      %v809 = vpop.f32.mrf.mxu0
      %v810 = vadd.f32 0.0, %v809
      %v811 = vpop.f32.mrf.mxu0
      %v812 = vadd.f32 0.0, %v811
      %813 = vmatmul.bf16.gmra.mxu0 %v732
      %v814 = vpop.f32.mrf.mxu0
      %v815 = vadd.f32 0.0, %v814
      %v816 = vpop.f32.mrf.mxu0
      %v817 = vadd.f32 0.0, %v816
      %818 = vmatmul.bf16.gmra.mxu0 %v735
      %v819 = vpop.f32.mrf.mxu0
      %v820 = vadd.f32 0.0, %v819
      %v821 = vpop.f32.mrf.mxu0
      %v822 = vadd.f32 0.0, %v821
      %823 = vmatmul.bf16.gmra.mxu0 %v738
      %v824 = vpop.f32.mrf.mxu0
      %v825 = vadd.f32 0.0, %v824
      %v826 = vpop.f32.mrf.mxu0
      %v827 = vadd.f32 0.0, %v826
      %828 = vmatmul.bf16.gmra.mxu0 %v741
      %v829 = vpop.f32.mrf.mxu0
      %v830 = vadd.f32 0.0, %v829
      %v831 = vpop.f32.mrf.mxu0
      %v832 = vadd.f32 0.0, %v831
      %833 = vmatmul.bf16.gmra.mxu0 %v744
      %v834 = vpop.f32.mrf.mxu0
      %v835 = vadd.f32 0.0, %v834
      %v836 = vpop.f32.mrf.mxu0
      %v837 = vadd.f32 0.0, %v836
      %838 = vdwg.mxu0
      %v839 = vadd.f32 %v649, %v760
      %v840 = vadd.f32 %v650, %v762
      %v841 = vadd.f32 %v651, %v765
      %v842 = vadd.f32 %v652, %v767
      %v843 = vadd.f32 %v653, %v770
      %v844 = vadd.f32 %v654, %v772
      %v845 = vadd.f32 %v655, %v775
      %v846 = vadd.f32 %v656, %v777
      %v847 = vadd.f32 %v657, %v780
      %v848 = vadd.f32 %v658, %v782
      %v849 = vadd.f32 %v659, %v785
      %v850 = vadd.f32 %v660, %v787
      %v851 = vadd.f32 %v661, %v790
      %v852 = vadd.f32 %v662, %v792
      %v853 = vadd.f32 %v663, %v795
      %v854 = vadd.f32 %v664, %v797
      %v855 = vadd.f32 %v665, %v800
      %v856 = vadd.f32 %v666, %v802
      %v857 = vadd.f32 %v667, %v805
      %v858 = vadd.f32 %v668, %v807
      %v859 = vadd.f32 %v669, %v810
      %v860 = vadd.f32 %v670, %v812
      %v861 = vadd.f32 %v671, %v815
      %v862 = vadd.f32 %v672, %v817
      %v863 = vadd.f32 %v673, %v820
      %v864 = vadd.f32 %v674, %v822
      %v865 = vadd.f32 %v675, %v825
      %v866 = vadd.f32 %v676, %v827
      %v867 = vadd.f32 %v677, %v830
      %v868 = vadd.f32 %v678, %v832
      %v869 = vadd.f32 %v679, %v835
      %v870 = vadd.f32 %v680, %v837
      %871 = vst.msk [vmem:[#allocation3] sm:$0xff] %vm510, %v839
      %872 = vst.msk [vmem:[#allocation3 + $0x8] sm:$0xff] %vm510, %v840
      %873 = vst.msk [vmem:[#allocation3 + $0x10] sm:$0xff] %vm510, %v841
      %874 = vst.msk [vmem:[#allocation3 + $0x18] sm:$0xff] %vm510, %v842
      %875 = vst.msk [vmem:[#allocation3 + $0x20] sm:$0xff] %vm510, %v843
      %876 = vst.msk [vmem:[#allocation3 + $0x28] sm:$0xff] %vm510, %v844
      %877 = vst.msk [vmem:[#allocation3 + $0x30] sm:$0xff] %vm510, %v845
      %878 = vst.msk [vmem:[#allocation3 + $0x38] sm:$0xff] %vm510, %v846
      %879 = vst.msk [vmem:[#allocation3 + $0x40] sm:$0xff] %vm510, %v847
      %880 = vst.msk [vmem:[#allocation3 + $0x48] sm:$0xff] %vm510, %v848
      %881 = vst.msk [vmem:[#allocation3 + $0x50] sm:$0xff] %vm510, %v849
      %882 = vst.msk [vmem:[#allocation3 + $0x58] sm:$0xff] %vm510, %v850
      %883 = vst.msk [vmem:[#allocation3 + $0x60] sm:$0xff] %vm510, %v851
      %884 = vst.msk [vmem:[#allocation3 + $0x68] sm:$0xff] %vm510, %v852
      %885 = vst.msk [vmem:[#allocation3 + $0x70] sm:$0xff] %vm510, %v853
      %886 = vst.msk [vmem:[#allocation3 + $0x78] sm:$0xff] %vm510, %v854
      %887 = vst.msk [vmem:[#allocation3 + $0x80] sm:$0xff] %vm510, %v855
      %888 = vst.msk [vmem:[#allocation3 + $0x88] sm:$0xff] %vm510, %v856
      %889 = vst.msk [vmem:[#allocation3 + $0x90] sm:$0xff] %vm510, %v857
      %890 = vst.msk [vmem:[#allocation3 + $0x98] sm:$0xff] %vm510, %v858
      %891 = vst.msk [vmem:[#allocation3 + $0xa0] sm:$0xff] %vm510, %v859
      %892 = vst.msk [vmem:[#allocation3 + $0xa8] sm:$0xff] %vm510, %v860
      %893 = vst.msk [vmem:[#allocation3 + $0xb0] sm:$0xff] %vm510, %v861
      %894 = vst.msk [vmem:[#allocation3 + $0xb8] sm:$0xff] %vm510, %v862
      %895 = vst.msk [vmem:[#allocation3 + $0xc0] sm:$0xff] %vm510, %v863
      %896 = vst.msk [vmem:[#allocation3 + $0xc8] sm:$0xff] %vm510, %v864
      %897 = vst.msk [vmem:[#allocation3 + $0xd0] sm:$0xff] %vm510, %v865
      %898 = vst.msk [vmem:[#allocation3 + $0xd8] sm:$0xff] %vm510, %v866
      %899 = vst.msk [vmem:[#allocation3 + $0xe0] sm:$0xff] %vm510, %v867
      %900 = vst.msk [vmem:[#allocation3 + $0xe8] sm:$0xff] %vm510, %v868
      %901 = vst.msk [vmem:[#allocation3 + $0xf0] sm:$0xff] %vm510, %v869
      %902 = vst.msk [vmem:[#allocation3 + $0xf8] sm:$0xff] %vm510, %v870
      %v903 = vld [vmem:[#allocation2 + $0x8] sm:$0xff]
      %v904 = vld [vmem:[#allocation2 + $0x10] sm:$0xff]
      %v905 = vld [vmem:[#allocation2 + $0x28] sm:$0xff]
      %v906 = vld [vmem:[#allocation2 + $0x30] sm:$0xff]
      %v907 = vld [vmem:[#allocation2 + $0x48] sm:$0xff]
      %v908 = vld [vmem:[#allocation2 + $0x50] sm:$0xff]
      %v909 = vld [vmem:[#allocation2 + $0x68] sm:$0xff]
      %v910 = vld [vmem:[#allocation2 + $0x70] sm:$0xff]
      %v911 = vld [vmem:[#allocation2 + $0x88] sm:$0xff]
      %v912 = vld [vmem:[#allocation2 + $0x90] sm:$0xff]
      %v913 = vld [vmem:[#allocation2 + $0xa8] sm:$0xff]
      %v914 = vld [vmem:[#allocation2 + $0xb0] sm:$0xff]
      %v915 = vld [vmem:[#allocation2 + $0xc8] sm:$0xff]
      %v916 = vld [vmem:[#allocation2 + $0xd0] sm:$0xff]
      %v917 = vld [vmem:[#allocation2 + $0xe8] sm:$0xff]
      %v918 = vld [vmem:[#allocation2 + $0xf0] sm:$0xff]
      %v919 = vld [vmem:[#allocation2 + $0x108] sm:$0xff]
      %v920 = vld [vmem:[#allocation2 + $0x110] sm:$0xff]
      %v921 = vld [vmem:[#allocation2 + $0x128] sm:$0xff]
      %v922 = vld [vmem:[#allocation2 + $0x130] sm:$0xff]
      %v923 = vld [vmem:[#allocation2 + $0x148] sm:$0xff]
      %v924 = vld [vmem:[#allocation2 + $0x150] sm:$0xff]
      %v925 = vld [vmem:[#allocation2 + $0x168] sm:$0xff]
      %v926 = vld [vmem:[#allocation2 + $0x170] sm:$0xff]
      %v927 = vld [vmem:[#allocation2 + $0x188] sm:$0xff]
      %v928 = vld [vmem:[#allocation2 + $0x190] sm:$0xff]
      %v929 = vld [vmem:[#allocation2 + $0x1a8] sm:$0xff]
      %v930 = vld [vmem:[#allocation2 + $0x1b0] sm:$0xff]
      %v931 = vld [vmem:[#allocation2 + $0x1c8] sm:$0xff]
      %v932 = vld [vmem:[#allocation2 + $0x1d0] sm:$0xff]
      %v933 = vld [vmem:[#allocation2 + $0x1e8] sm:$0xff]
      %v934 = vld [vmem:[#allocation2 + $0x1f0] sm:$0xff]
      %v935 = vld [vmem:[#allocation3] sm:$0xff]
      %v936 = vld [vmem:[#allocation3 + $0x8] sm:$0xff]
      %v937 = vld [vmem:[#allocation3 + $0x10] sm:$0xff]
      %v938 = vld [vmem:[#allocation3 + $0x18] sm:$0xff]
      %v939 = vld [vmem:[#allocation3 + $0x20] sm:$0xff]
      %v940 = vld [vmem:[#allocation3 + $0x28] sm:$0xff]
      %v941 = vld [vmem:[#allocation3 + $0x30] sm:$0xff]
      %v942 = vld [vmem:[#allocation3 + $0x38] sm:$0xff]
      %v943 = vld [vmem:[#allocation3 + $0x40] sm:$0xff]
      %v944 = vld [vmem:[#allocation3 + $0x48] sm:$0xff]
      %v945 = vld [vmem:[#allocation3 + $0x50] sm:$0xff]
      %v946 = vld [vmem:[#allocation3 + $0x58] sm:$0xff]
      %v947 = vld [vmem:[#allocation3 + $0x60] sm:$0xff]
      %v948 = vld [vmem:[#allocation3 + $0x68] sm:$0xff]
      %v949 = vld [vmem:[#allocation3 + $0x70] sm:$0xff]
      %v950 = vld [vmem:[#allocation3 + $0x78] sm:$0xff]
      %v951 = vld [vmem:[#allocation3 + $0x80] sm:$0xff]
      %v952 = vld [vmem:[#allocation3 + $0x88] sm:$0xff]
      %v953 = vld [vmem:[#allocation3 + $0x90] sm:$0xff]
      %v954 = vld [vmem:[#allocation3 + $0x98] sm:$0xff]
      %v955 = vld [vmem:[#allocation3 + $0xa0] sm:$0xff]
      %v956 = vld [vmem:[#allocation3 + $0xa8] sm:$0xff]
      %v957 = vld [vmem:[#allocation3 + $0xb0] sm:$0xff]
      %v958 = vld [vmem:[#allocation3 + $0xb8] sm:$0xff]
      %v959 = vld [vmem:[#allocation3 + $0xc0] sm:$0xff]
      %v960 = vld [vmem:[#allocation3 + $0xc8] sm:$0xff]
      %v961 = vld [vmem:[#allocation3 + $0xd0] sm:$0xff]
      %v962 = vld [vmem:[#allocation3 + $0xd8] sm:$0xff]
      %v963 = vld [vmem:[#allocation3 + $0xe0] sm:$0xff]
      %v964 = vld [vmem:[#allocation3 + $0xe8] sm:$0xff]
      %v965 = vld [vmem:[#allocation3 + $0xf0] sm:$0xff]
      %v966 = vld [vmem:[#allocation3 + $0xf8] sm:$0xff]
      %v967 = vpack.c.bf16 %v904, %v903
      %v968 = vpack.c.bf16 %v906, %v905
      %v969 = vpack.c.bf16 %v908, %v907
      %v970 = vpack.c.bf16 %v910, %v909
      %v971 = vpack.c.bf16 %v912, %v911
      %v972 = vpack.c.bf16 %v914, %v913
      %v973 = vpack.c.bf16 %v916, %v915
      %v974 = vpack.c.bf16 %v918, %v917
      %v975 = vpack.c.bf16 %v920, %v919
      %v976 = vpack.c.bf16 %v922, %v921
      %v977 = vpack.c.bf16 %v924, %v923
      %v978 = vpack.c.bf16 %v926, %v925
      %v979 = vpack.c.bf16 %v928, %v927
      %v980 = vpack.c.bf16 %v930, %v929
      %v981 = vpack.c.bf16 %v932, %v931
      %v982 = vpack.c.bf16 %v934, %v933
      %s983 = scalar_lea.vmem %s3, 2
      %v984 = vld [vmem:[%s983] sm:$0x3]
      %v986 = vsel %vm510, %v967, 0
      %v989 = vsel %vm510, %v968, 0
      %v992 = vsel %vm510, %v969, 0
      %v995 = vsel %vm510, %v970, 0
      %v998 = vsel %vm510, %v971, 0
      %v1001 = vsel %vm510, %v972, 0
      %v1004 = vsel %vm510, %v973, 0
      %v1007 = vsel %vm510, %v974, 0
      %v1010 = vsel %vm510, %v975, 0
      %v1013 = vsel %vm510, %v976, 0
      %v1016 = vsel %vm510, %v977, 0
      %v1019 = vsel %vm510, %v978, 0
      %v1022 = vsel %vm510, %v979, 0
      %v1025 = vsel %vm510, %v980, 0
      %v1028 = vsel %vm510, %v981, 0
      %v1031 = vsel %vm510, %v982, 0
      %v1034 = vsel %vm746, %v984, 0
      %1036 = vmatpush.bf16.msra.mxu0 0
      %1037 = vmatpush.bf16.msra.mxu0 0
      %1038 = vmatpush.bf16.msra.mxu0 0
      %1039 = vmatpush.bf16.msra.mxu0 0
      %1040 = vmatpush.bf16.msra.mxu0 0
      %1041 = vmatpush.bf16.msra.mxu0 0
      %1042 = vmatpush.bf16.msra.mxu0 0
      %1043 = vmatpush.bf16.msra.mxu0 %v1034
      %1044 = vmatmul.bf16.gmra.mxu0 %v986
      %v1045 = vpop.f32.mrf.mxu0
      %v1046 = vadd.f32 0.0, %v1045
      %v1047 = vpop.f32.mrf.mxu0
      %v1048 = vadd.f32 0.0, %v1047
      %1049 = vmatmul.bf16.gmra.mxu0 %v989
      %v1050 = vpop.f32.mrf.mxu0
      %v1051 = vadd.f32 0.0, %v1050
      %v1052 = vpop.f32.mrf.mxu0
      %v1053 = vadd.f32 0.0, %v1052
      %1054 = vmatmul.bf16.gmra.mxu0 %v992
      %v1055 = vpop.f32.mrf.mxu0
      %v1056 = vadd.f32 0.0, %v1055
      %v1057 = vpop.f32.mrf.mxu0
      %v1058 = vadd.f32 0.0, %v1057
      %1059 = vmatmul.bf16.gmra.mxu0 %v995
      %v1060 = vpop.f32.mrf.mxu0
      %v1061 = vadd.f32 0.0, %v1060
      %v1062 = vpop.f32.mrf.mxu0
      %v1063 = vadd.f32 0.0, %v1062
      %1064 = vmatmul.bf16.gmra.mxu0 %v998
      %v1065 = vpop.f32.mrf.mxu0
      %v1066 = vadd.f32 0.0, %v1065
      %v1067 = vpop.f32.mrf.mxu0
      %v1068 = vadd.f32 0.0, %v1067
      %1069 = vmatmul.bf16.gmra.mxu0 %v1001
      %v1070 = vpop.f32.mrf.mxu0
      %v1071 = vadd.f32 0.0, %v1070
      %v1072 = vpop.f32.mrf.mxu0
      %v1073 = vadd.f32 0.0, %v1072
      %1074 = vmatmul.bf16.gmra.mxu0 %v1004
      %v1075 = vpop.f32.mrf.mxu0
      %v1076 = vadd.f32 0.0, %v1075
      %v1077 = vpop.f32.mrf.mxu0
      %v1078 = vadd.f32 0.0, %v1077
      %1079 = vmatmul.bf16.gmra.mxu0 %v1007
      %v1080 = vpop.f32.mrf.mxu0
      %v1081 = vadd.f32 0.0, %v1080
      %v1082 = vpop.f32.mrf.mxu0
      %v1083 = vadd.f32 0.0, %v1082
      %1084 = vmatmul.bf16.gmra.mxu0 %v1010
      %v1085 = vpop.f32.mrf.mxu0
      %v1086 = vadd.f32 0.0, %v1085
      %v1087 = vpop.f32.mrf.mxu0
      %v1088 = vadd.f32 0.0, %v1087
      %1089 = vmatmul.bf16.gmra.mxu0 %v1013
      %v1090 = vpop.f32.mrf.mxu0
      %v1091 = vadd.f32 0.0, %v1090
      %v1092 = vpop.f32.mrf.mxu0
      %v1093 = vadd.f32 0.0, %v1092
      %1094 = vmatmul.bf16.gmra.mxu0 %v1016
      %v1095 = vpop.f32.mrf.mxu0
      %v1096 = vadd.f32 0.0, %v1095
      %v1097 = vpop.f32.mrf.mxu0
      %v1098 = vadd.f32 0.0, %v1097
      %1099 = vmatmul.bf16.gmra.mxu0 %v1019
      %v1100 = vpop.f32.mrf.mxu0
      %v1101 = vadd.f32 0.0, %v1100
      %v1102 = vpop.f32.mrf.mxu0
      %v1103 = vadd.f32 0.0, %v1102
      %1104 = vmatmul.bf16.gmra.mxu0 %v1022
      %v1105 = vpop.f32.mrf.mxu0
      %v1106 = vadd.f32 0.0, %v1105
      %v1107 = vpop.f32.mrf.mxu0
      %v1108 = vadd.f32 0.0, %v1107
      %1109 = vmatmul.bf16.gmra.mxu0 %v1025
      %v1110 = vpop.f32.mrf.mxu0
      %v1111 = vadd.f32 0.0, %v1110
      %v1112 = vpop.f32.mrf.mxu0
      %v1113 = vadd.f32 0.0, %v1112
      %1114 = vmatmul.bf16.gmra.mxu0 %v1028
      %v1115 = vpop.f32.mrf.mxu0
      %v1116 = vadd.f32 0.0, %v1115
      %v1117 = vpop.f32.mrf.mxu0
      %v1118 = vadd.f32 0.0, %v1117
      %1119 = vmatmul.bf16.gmra.mxu0 %v1031
      %v1120 = vpop.f32.mrf.mxu0
      %v1121 = vadd.f32 0.0, %v1120
      %v1122 = vpop.f32.mrf.mxu0
      %v1123 = vadd.f32 0.0, %v1122
      %1124 = vdwg.mxu0
      %v1125 = vadd.f32 %v935, %v1046
      %v1126 = vadd.f32 %v936, %v1048
      %v1127 = vadd.f32 %v937, %v1051
      %v1128 = vadd.f32 %v938, %v1053
      %v1129 = vadd.f32 %v939, %v1056
      %v1130 = vadd.f32 %v940, %v1058
      %v1131 = vadd.f32 %v941, %v1061
      %v1132 = vadd.f32 %v942, %v1063
      %v1133 = vadd.f32 %v943, %v1066
      %v1134 = vadd.f32 %v944, %v1068
      %v1135 = vadd.f32 %v945, %v1071
      %v1136 = vadd.f32 %v946, %v1073
      %v1137 = vadd.f32 %v947, %v1076
      %v1138 = vadd.f32 %v948, %v1078
      %v1139 = vadd.f32 %v949, %v1081
      %v1140 = vadd.f32 %v950, %v1083
      %v1141 = vadd.f32 %v951, %v1086
      %v1142 = vadd.f32 %v952, %v1088
      %v1143 = vadd.f32 %v953, %v1091
      %v1144 = vadd.f32 %v954, %v1093
      %v1145 = vadd.f32 %v955, %v1096
      %v1146 = vadd.f32 %v956, %v1098
      %v1147 = vadd.f32 %v957, %v1101
      %v1148 = vadd.f32 %v958, %v1103
      %v1149 = vadd.f32 %v959, %v1106
      %v1150 = vadd.f32 %v960, %v1108
      %v1151 = vadd.f32 %v961, %v1111
      %v1152 = vadd.f32 %v962, %v1113
      %v1153 = vadd.f32 %v963, %v1116
      %v1154 = vadd.f32 %v964, %v1118
      %v1155 = vadd.f32 %v965, %v1121
      %v1156 = vadd.f32 %v966, %v1123
      %1157 = vst.msk [vmem:[#allocation3] sm:$0xff] %vm510, %v1125
      %1158 = vst.msk [vmem:[#allocation3 + $0x8] sm:$0xff] %vm510, %v1126
      %1159 = vst.msk [vmem:[#allocation3 + $0x10] sm:$0xff] %vm510, %v1127
      %1160 = vst.msk [vmem:[#allocation3 + $0x18] sm:$0xff] %vm510, %v1128
      %1161 = vst.msk [vmem:[#allocation3 + $0x20] sm:$0xff] %vm510, %v1129
      %1162 = vst.msk [vmem:[#allocation3 + $0x28] sm:$0xff] %vm510, %v1130
      %1163 = vst.msk [vmem:[#allocation3 + $0x30] sm:$0xff] %vm510, %v1131
      %1164 = vst.msk [vmem:[#allocation3 + $0x38] sm:$0xff] %vm510, %v1132
      %1165 = vst.msk [vmem:[#allocation3 + $0x40] sm:$0xff] %vm510, %v1133
      %1166 = vst.msk [vmem:[#allocation3 + $0x48] sm:$0xff] %vm510, %v1134
      %1167 = vst.msk [vmem:[#allocation3 + $0x50] sm:$0xff] %vm510, %v1135
      %1168 = vst.msk [vmem:[#allocation3 + $0x58] sm:$0xff] %vm510, %v1136
      %1169 = vst.msk [vmem:[#allocation3 + $0x60] sm:$0xff] %vm510, %v1137
      %1170 = vst.msk [vmem:[#allocation3 + $0x68] sm:$0xff] %vm510, %v1138
      %1171 = vst.msk [vmem:[#allocation3 + $0x70] sm:$0xff] %vm510, %v1139
      %1172 = vst.msk [vmem:[#allocation3 + $0x78] sm:$0xff] %vm510, %v1140
      %1173 = vst.msk [vmem:[#allocation3 + $0x80] sm:$0xff] %vm510, %v1141
      %1174 = vst.msk [vmem:[#allocation3 + $0x88] sm:$0xff] %vm510, %v1142
      %1175 = vst.msk [vmem:[#allocation3 + $0x90] sm:$0xff] %vm510, %v1143
      %1176 = vst.msk [vmem:[#allocation3 + $0x98] sm:$0xff] %vm510, %v1144
      %1177 = vst.msk [vmem:[#allocation3 + $0xa0] sm:$0xff] %vm510, %v1145
      %1178 = vst.msk [vmem:[#allocation3 + $0xa8] sm:$0xff] %vm510, %v1146
      %1179 = vst.msk [vmem:[#allocation3 + $0xb0] sm:$0xff] %vm510, %v1147
      %1180 = vst.msk [vmem:[#allocation3 + $0xb8] sm:$0xff] %vm510, %v1148
      %1181 = vst.msk [vmem:[#allocation3 + $0xc0] sm:$0xff] %vm510, %v1149
      %1182 = vst.msk [vmem:[#allocation3 + $0xc8] sm:$0xff] %vm510, %v1150
      %1183 = vst.msk [vmem:[#allocation3 + $0xd0] sm:$0xff] %vm510, %v1151
      %1184 = vst.msk [vmem:[#allocation3 + $0xd8] sm:$0xff] %vm510, %v1152
      %1185 = vst.msk [vmem:[#allocation3 + $0xe0] sm:$0xff] %vm510, %v1153
      %1186 = vst.msk [vmem:[#allocation3 + $0xe8] sm:$0xff] %vm510, %v1154
      %1187 = vst.msk [vmem:[#allocation3 + $0xf0] sm:$0xff] %vm510, %v1155
      %1188 = vst.msk [vmem:[#allocation3 + $0xf8] sm:$0xff] %vm510, %v1156
      %v1189 = vld [vmem:[#allocation2 + $0x9] sm:$0xff]
      %v1190 = vld [vmem:[#allocation2 + $0x11] sm:$0xff]
      %v1191 = vld [vmem:[#allocation2 + $0x29] sm:$0xff]
      %v1192 = vld [vmem:[#allocation2 + $0x31] sm:$0xff]
      %v1193 = vld [vmem:[#allocation2 + $0x49] sm:$0xff]
      %v1194 = vld [vmem:[#allocation2 + $0x51] sm:$0xff]
      %v1195 = vld [vmem:[#allocation2 + $0x69] sm:$0xff]
      %v1196 = vld [vmem:[#allocation2 + $0x71] sm:$0xff]
      %v1197 = vld [vmem:[#allocation2 + $0x89] sm:$0xff]
      %v1198 = vld [vmem:[#allocation2 + $0x91] sm:$0xff]
      %v1199 = vld [vmem:[#allocation2 + $0xa9] sm:$0xff]
      %v1200 = vld [vmem:[#allocation2 + $0xb1] sm:$0xff]
      %v1201 = vld [vmem:[#allocation2 + $0xc9] sm:$0xff]
      %v1202 = vld [vmem:[#allocation2 + $0xd1] sm:$0xff]
      %v1203 = vld [vmem:[#allocation2 + $0xe9] sm:$0xff]
      %v1204 = vld [vmem:[#allocation2 + $0xf1] sm:$0xff]
      %v1205 = vld [vmem:[#allocation2 + $0x109] sm:$0xff]
      %v1206 = vld [vmem:[#allocation2 + $0x111] sm:$0xff]
      %v1207 = vld [vmem:[#allocation2 + $0x129] sm:$0xff]
      %v1208 = vld [vmem:[#allocation2 + $0x131] sm:$0xff]
      %v1209 = vld [vmem:[#allocation2 + $0x149] sm:$0xff]
      %v1210 = vld [vmem:[#allocation2 + $0x151] sm:$0xff]
      %v1211 = vld [vmem:[#allocation2 + $0x169] sm:$0xff]
      %v1212 = vld [vmem:[#allocation2 + $0x171] sm:$0xff]
      %v1213 = vld [vmem:[#allocation2 + $0x189] sm:$0xff]
      %v1214 = vld [vmem:[#allocation2 + $0x191] sm:$0xff]
      %v1215 = vld [vmem:[#allocation2 + $0x1a9] sm:$0xff]
      %v1216 = vld [vmem:[#allocation2 + $0x1b1] sm:$0xff]
      %v1217 = vld [vmem:[#allocation2 + $0x1c9] sm:$0xff]
      %v1218 = vld [vmem:[#allocation2 + $0x1d1] sm:$0xff]
      %v1219 = vld [vmem:[#allocation2 + $0x1e9] sm:$0xff]
      %v1220 = vld [vmem:[#allocation2 + $0x1f1] sm:$0xff]
      %v1221 = vld [vmem:[#allocation3] sm:$0xff]
      %v1222 = vld [vmem:[#allocation3 + $0x8] sm:$0xff]
      %v1223 = vld [vmem:[#allocation3 + $0x10] sm:$0xff]
      %v1224 = vld [vmem:[#allocation3 + $0x18] sm:$0xff]
      %v1225 = vld [vmem:[#allocation3 + $0x20] sm:$0xff]
      %v1226 = vld [vmem:[#allocation3 + $0x28] sm:$0xff]
      %v1227 = vld [vmem:[#allocation3 + $0x30] sm:$0xff]
      %v1228 = vld [vmem:[#allocation3 + $0x38] sm:$0xff]
      %v1229 = vld [vmem:[#allocation3 + $0x40] sm:$0xff]
      %v1230 = vld [vmem:[#allocation3 + $0x48] sm:$0xff]
      %v1231 = vld [vmem:[#allocation3 + $0x50] sm:$0xff]
      %v1232 = vld [vmem:[#allocation3 + $0x58] sm:$0xff]
      %v1233 = vld [vmem:[#allocation3 + $0x60] sm:$0xff]
      %v1234 = vld [vmem:[#allocation3 + $0x68] sm:$0xff]
      %v1235 = vld [vmem:[#allocation3 + $0x70] sm:$0xff]
      %v1236 = vld [vmem:[#allocation3 + $0x78] sm:$0xff]
      %v1237 = vld [vmem:[#allocation3 + $0x80] sm:$0xff]
      %v1238 = vld [vmem:[#allocation3 + $0x88] sm:$0xff]
      %v1239 = vld [vmem:[#allocation3 + $0x90] sm:$0xff]
      %v1240 = vld [vmem:[#allocation3 + $0x98] sm:$0xff]
      %v1241 = vld [vmem:[#allocation3 + $0xa0] sm:$0xff]
      %v1242 = vld [vmem:[#allocation3 + $0xa8] sm:$0xff]
      %v1243 = vld [vmem:[#allocation3 + $0xb0] sm:$0xff]
      %v1244 = vld [vmem:[#allocation3 + $0xb8] sm:$0xff]
      %v1245 = vld [vmem:[#allocation3 + $0xc0] sm:$0xff]
      %v1246 = vld [vmem:[#allocation3 + $0xc8] sm:$0xff]
      %v1247 = vld [vmem:[#allocation3 + $0xd0] sm:$0xff]
      %v1248 = vld [vmem:[#allocation3 + $0xd8] sm:$0xff]
      %v1249 = vld [vmem:[#allocation3 + $0xe0] sm:$0xff]
      %v1250 = vld [vmem:[#allocation3 + $0xe8] sm:$0xff]
      %v1251 = vld [vmem:[#allocation3 + $0xf0] sm:$0xff]
      %v1252 = vld [vmem:[#allocation3 + $0xf8] sm:$0xff]
      %v1253 = vpack.c.bf16 %v1190, %v1189
      %v1254 = vpack.c.bf16 %v1192, %v1191
      %v1255 = vpack.c.bf16 %v1194, %v1193
      %v1256 = vpack.c.bf16 %v1196, %v1195
      %v1257 = vpack.c.bf16 %v1198, %v1197
      %v1258 = vpack.c.bf16 %v1200, %v1199
      %v1259 = vpack.c.bf16 %v1202, %v1201
      %v1260 = vpack.c.bf16 %v1204, %v1203
      %v1261 = vpack.c.bf16 %v1206, %v1205
      %v1262 = vpack.c.bf16 %v1208, %v1207
      %v1263 = vpack.c.bf16 %v1210, %v1209
      %v1264 = vpack.c.bf16 %v1212, %v1211
      %v1265 = vpack.c.bf16 %v1214, %v1213
      %v1266 = vpack.c.bf16 %v1216, %v1215
      %v1267 = vpack.c.bf16 %v1218, %v1217
      %v1268 = vpack.c.bf16 %v1220, %v1219
      %s1269 = scalar_lea.vmem %s3, 4
      %v1270 = vld [vmem:[%s1269] sm:$0x3]
      %v1272 = vsel %vm510, %v1253, 0
      %v1275 = vsel %vm510, %v1254, 0
      %v1278 = vsel %vm510, %v1255, 0
      %v1281 = vsel %vm510, %v1256, 0
      %v1284 = vsel %vm510, %v1257, 0
      %v1287 = vsel %vm510, %v1258, 0
      %v1290 = vsel %vm510, %v1259, 0
      %v1293 = vsel %vm510, %v1260, 0
      %v1296 = vsel %vm510, %v1261, 0
      %v1299 = vsel %vm510, %v1262, 0
      %v1302 = vsel %vm510, %v1263, 0
      %v1305 = vsel %vm510, %v1264, 0
      %v1308 = vsel %vm510, %v1265, 0
      %v1311 = vsel %vm510, %v1266, 0
      %v1314 = vsel %vm510, %v1267, 0
      %v1317 = vsel %vm510, %v1268, 0
      %v1320 = vsel %vm746, %v1270, 0
      %1322 = vmatpush.bf16.msra.mxu0 0
      %1323 = vmatpush.bf16.msra.mxu0 0
      %1324 = vmatpush.bf16.msra.mxu0 0
      %1325 = vmatpush.bf16.msra.mxu0 0
      %1326 = vmatpush.bf16.msra.mxu0 0
      %1327 = vmatpush.bf16.msra.mxu0 0
      %1328 = vmatpush.bf16.msra.mxu0 0
      %1329 = vmatpush.bf16.msra.mxu0 %v1320
      %1330 = vmatmul.bf16.gmra.mxu0 %v1272
      %v1331 = vpop.f32.mrf.mxu0
      %v1332 = vadd.f32 0.0, %v1331
      %v1333 = vpop.f32.mrf.mxu0
      %v1334 = vadd.f32 0.0, %v1333
      %1335 = vmatmul.bf16.gmra.mxu0 %v1275
      %v1336 = vpop.f32.mrf.mxu0
      %v1337 = vadd.f32 0.0, %v1336
      %v1338 = vpop.f32.mrf.mxu0
      %v1339 = vadd.f32 0.0, %v1338
      %1340 = vmatmul.bf16.gmra.mxu0 %v1278
      %v1341 = vpop.f32.mrf.mxu0
      %v1342 = vadd.f32 0.0, %v1341
      %v1343 = vpop.f32.mrf.mxu0
      %v1344 = vadd.f32 0.0, %v1343
      %1345 = vmatmul.bf16.gmra.mxu0 %v1281
      %v1346 = vpop.f32.mrf.mxu0
      %v1347 = vadd.f32 0.0, %v1346
      %v1348 = vpop.f32.mrf.mxu0
      %v1349 = vadd.f32 0.0, %v1348
      %1350 = vmatmul.bf16.gmra.mxu0 %v1284
      %v1351 = vpop.f32.mrf.mxu0
      %v1352 = vadd.f32 0.0, %v1351
      %v1353 = vpop.f32.mrf.mxu0
      %v1354 = vadd.f32 0.0, %v1353
      %1355 = vmatmul.bf16.gmra.mxu0 %v1287
      %v1356 = vpop.f32.mrf.mxu0
      %v1357 = vadd.f32 0.0, %v1356
      %v1358 = vpop.f32.mrf.mxu0
      %v1359 = vadd.f32 0.0, %v1358
      %1360 = vmatmul.bf16.gmra.mxu0 %v1290
      %v1361 = vpop.f32.mrf.mxu0
      %v1362 = vadd.f32 0.0, %v1361
      %v1363 = vpop.f32.mrf.mxu0
      %v1364 = vadd.f32 0.0, %v1363
      %1365 = vmatmul.bf16.gmra.mxu0 %v1293
      %v1366 = vpop.f32.mrf.mxu0
      %v1367 = vadd.f32 0.0, %v1366
      %v1368 = vpop.f32.mrf.mxu0
      %v1369 = vadd.f32 0.0, %v1368
      %1370 = vmatmul.bf16.gmra.mxu0 %v1296
      %v1371 = vpop.f32.mrf.mxu0
      %v1372 = vadd.f32 0.0, %v1371
      %v1373 = vpop.f32.mrf.mxu0
      %v1374 = vadd.f32 0.0, %v1373
      %1375 = vmatmul.bf16.gmra.mxu0 %v1299
      %v1376 = vpop.f32.mrf.mxu0
      %v1377 = vadd.f32 0.0, %v1376
      %v1378 = vpop.f32.mrf.mxu0
      %v1379 = vadd.f32 0.0, %v1378
      %1380 = vmatmul.bf16.gmra.mxu0 %v1302
      %v1381 = vpop.f32.mrf.mxu0
      %v1382 = vadd.f32 0.0, %v1381
      %v1383 = vpop.f32.mrf.mxu0
      %v1384 = vadd.f32 0.0, %v1383
      %1385 = vmatmul.bf16.gmra.mxu0 %v1305
      %v1386 = vpop.f32.mrf.mxu0
      %v1387 = vadd.f32 0.0, %v1386
      %v1388 = vpop.f32.mrf.mxu0
      %v1389 = vadd.f32 0.0, %v1388
      %1390 = vmatmul.bf16.gmra.mxu0 %v1308
      %v1391 = vpop.f32.mrf.mxu0
      %v1392 = vadd.f32 0.0, %v1391
      %v1393 = vpop.f32.mrf.mxu0
      %v1394 = vadd.f32 0.0, %v1393
      %1395 = vmatmul.bf16.gmra.mxu0 %v1311
      %v1396 = vpop.f32.mrf.mxu0
      %v1397 = vadd.f32 0.0, %v1396
      %v1398 = vpop.f32.mrf.mxu0
      %v1399 = vadd.f32 0.0, %v1398
      %1400 = vmatmul.bf16.gmra.mxu0 %v1314
      %v1401 = vpop.f32.mrf.mxu0
      %v1402 = vadd.f32 0.0, %v1401
      %v1403 = vpop.f32.mrf.mxu0
      %v1404 = vadd.f32 0.0, %v1403
      %1405 = vmatmul.bf16.gmra.mxu0 %v1317
      %v1406 = vpop.f32.mrf.mxu0
      %v1407 = vadd.f32 0.0, %v1406
      %v1408 = vpop.f32.mrf.mxu0
      %v1409 = vadd.f32 0.0, %v1408
      %1410 = vdwg.mxu0
      %v1411 = vadd.f32 %v1221, %v1332
      %v1412 = vadd.f32 %v1222, %v1334
      %v1413 = vadd.f32 %v1223, %v1337
      %v1414 = vadd.f32 %v1224, %v1339
      %v1415 = vadd.f32 %v1225, %v1342
      %v1416 = vadd.f32 %v1226, %v1344
      %v1417 = vadd.f32 %v1227, %v1347
      %v1418 = vadd.f32 %v1228, %v1349
      %v1419 = vadd.f32 %v1229, %v1352
      %v1420 = vadd.f32 %v1230, %v1354
      %v1421 = vadd.f32 %v1231, %v1357
      %v1422 = vadd.f32 %v1232, %v1359
      %v1423 = vadd.f32 %v1233, %v1362
      %v1424 = vadd.f32 %v1234, %v1364
      %v1425 = vadd.f32 %v1235, %v1367
      %v1426 = vadd.f32 %v1236, %v1369
      %v1427 = vadd.f32 %v1237, %v1372
      %v1428 = vadd.f32 %v1238, %v1374
      %v1429 = vadd.f32 %v1239, %v1377
      %v1430 = vadd.f32 %v1240, %v1379
      %v1431 = vadd.f32 %v1241, %v1382
      %v1432 = vadd.f32 %v1242, %v1384
      %v1433 = vadd.f32 %v1243, %v1387
      %v1434 = vadd.f32 %v1244, %v1389
      %v1435 = vadd.f32 %v1245, %v1392
      %v1436 = vadd.f32 %v1246, %v1394
      %v1437 = vadd.f32 %v1247, %v1397
      %v1438 = vadd.f32 %v1248, %v1399
      %v1439 = vadd.f32 %v1249, %v1402
      %v1440 = vadd.f32 %v1250, %v1404
      %v1441 = vadd.f32 %v1251, %v1407
      %v1442 = vadd.f32 %v1252, %v1409
      %1443 = vst.msk [vmem:[#allocation3] sm:$0xff] %vm510, %v1411
      %1444 = vst.msk [vmem:[#allocation3 + $0x8] sm:$0xff] %vm510, %v1412
      %1445 = vst.msk [vmem:[#allocation3 + $0x10] sm:$0xff] %vm510, %v1413
      %1446 = vst.msk [vmem:[#allocation3 + $0x18] sm:$0xff] %vm510, %v1414
      %1447 = vst.msk [vmem:[#allocation3 + $0x20] sm:$0xff] %vm510, %v1415
      %1448 = vst.msk [vmem:[#allocation3 + $0x28] sm:$0xff] %vm510, %v1416
      %1449 = vst.msk [vmem:[#allocation3 + $0x30] sm:$0xff] %vm510, %v1417
      %1450 = vst.msk [vmem:[#allocation3 + $0x38] sm:$0xff] %vm510, %v1418
      %1451 = vst.msk [vmem:[#allocation3 + $0x40] sm:$0xff] %vm510, %v1419
      %1452 = vst.msk [vmem:[#allocation3 + $0x48] sm:$0xff] %vm510, %v1420
      %1453 = vst.msk [vmem:[#allocation3 + $0x50] sm:$0xff] %vm510, %v1421
      %1454 = vst.msk [vmem:[#allocation3 + $0x58] sm:$0xff] %vm510, %v1422
      %1455 = vst.msk [vmem:[#allocation3 + $0x60] sm:$0xff] %vm510, %v1423
      %1456 = vst.msk [vmem:[#allocation3 + $0x68] sm:$0xff] %vm510, %v1424
      %1457 = vst.msk [vmem:[#allocation3 + $0x70] sm:$0xff] %vm510, %v1425
      %1458 = vst.msk [vmem:[#allocation3 + $0x78] sm:$0xff] %vm510, %v1426
      %1459 = vst.msk [vmem:[#allocation3 + $0x80] sm:$0xff] %vm510, %v1427
      %1460 = vst.msk [vmem:[#allocation3 + $0x88] sm:$0xff] %vm510, %v1428
      %1461 = vst.msk [vmem:[#allocation3 + $0x90] sm:$0xff] %vm510, %v1429
      %1462 = vst.msk [vmem:[#allocation3 + $0x98] sm:$0xff] %vm510, %v1430
      %1463 = vst.msk [vmem:[#allocation3 + $0xa0] sm:$0xff] %vm510, %v1431
      %1464 = vst.msk [vmem:[#allocation3 + $0xa8] sm:$0xff] %vm510, %v1432
      %1465 = vst.msk [vmem:[#allocation3 + $0xb0] sm:$0xff] %vm510, %v1433
      %1466 = vst.msk [vmem:[#allocation3 + $0xb8] sm:$0xff] %vm510, %v1434
      %1467 = vst.msk [vmem:[#allocation3 + $0xc0] sm:$0xff] %vm510, %v1435
      %1468 = vst.msk [vmem:[#allocation3 + $0xc8] sm:$0xff] %vm510, %v1436
      %1469 = vst.msk [vmem:[#allocation3 + $0xd0] sm:$0xff] %vm510, %v1437
      %1470 = vst.msk [vmem:[#allocation3 + $0xd8] sm:$0xff] %vm510, %v1438
      %1471 = vst.msk [vmem:[#allocation3 + $0xe0] sm:$0xff] %vm510, %v1439
      %1472 = vst.msk [vmem:[#allocation3 + $0xe8] sm:$0xff] %vm510, %v1440
      %1473 = vst.msk [vmem:[#allocation3 + $0xf0] sm:$0xff] %vm510, %v1441
      %1474 = vst.msk [vmem:[#allocation3 + $0xf8] sm:$0xff] %vm510, %v1442
      %v1475 = vld [vmem:[%s552 + $0x7] sm:$0xff]
      %v1476 = vld [vmem:[%s552 + $0xf] sm:$0xff]
      %v1477 = vld [vmem:[%s552 + $0x27] sm:$0xff]
      %v1478 = vld [vmem:[%s552 + $0x2f] sm:$0xff]
      %v1479 = vld [vmem:[%s552 + $0x47] sm:$0xff]
      %v1480 = vld [vmem:[%s552 + $0x4f] sm:$0xff]
      %v1481 = vld [vmem:[%s552 + $0x67] sm:$0xff]
      %v1482 = vld [vmem:[%s552 + $0x6f] sm:$0xff]
      %v1483 = vld [vmem:[%s552 + $0x87] sm:$0xff]
      %v1484 = vld [vmem:[%s552 + $0x8f] sm:$0xff]
      %v1485 = vld [vmem:[%s552 + $0xa7] sm:$0xff]
      %v1486 = vld [vmem:[%s552 + $0xaf] sm:$0xff]
      %v1487 = vld [vmem:[%s552 + $0xc7] sm:$0xff]
      %v1488 = vld [vmem:[%s552 + $0xcf] sm:$0xff]
      %v1489 = vld [vmem:[%s552 + $0xe7] sm:$0xff]
      %v1490 = vld [vmem:[%s552 + $0xef] sm:$0xff]
      %v1491 = vld [vmem:[%s552 + $0x107] sm:$0xff]
      %v1492 = vld [vmem:[%s552 + $0x10f] sm:$0xff]
      %v1493 = vld [vmem:[%s552 + $0x127] sm:$0xff]
      %v1494 = vld [vmem:[%s552 + $0x12f] sm:$0xff]
      %v1495 = vld [vmem:[%s552 + $0x147] sm:$0xff]
      %v1496 = vld [vmem:[%s552 + $0x14f] sm:$0xff]
      %v1497 = vld [vmem:[%s552 + $0x167] sm:$0xff]
      %v1498 = vld [vmem:[%s552 + $0x16f] sm:$0xff]
      %v1499 = vld [vmem:[%s552 + $0x187] sm:$0xff]
      %v1500 = vld [vmem:[%s552 + $0x18f] sm:$0xff]
      %v1501 = vld [vmem:[%s552 + $0x1a7] sm:$0xff]
      %v1502 = vld [vmem:[%s552 + $0x1af] sm:$0xff]
      %v1503 = vld [vmem:[%s552 + $0x1c7] sm:$0xff]
      %v1504 = vld [vmem:[%s552 + $0x1cf] sm:$0xff]
      %v1505 = vld [vmem:[%s552 + $0x1e7] sm:$0xff]
      %v1506 = vld [vmem:[%s552 + $0x1ef] sm:$0xff]
      %v1507 = vld [vmem:[#allocation3] sm:$0xff]
      %v1508 = vld [vmem:[#allocation3 + $0x8] sm:$0xff]
      %v1509 = vld [vmem:[#allocation3 + $0x10] sm:$0xff]
      %v1510 = vld [vmem:[#allocation3 + $0x18] sm:$0xff]
      %v1511 = vld [vmem:[#allocation3 + $0x20] sm:$0xff]
      %v1512 = vld [vmem:[#allocation3 + $0x28] sm:$0xff]
      %v1513 = vld [vmem:[#allocation3 + $0x30] sm:$0xff]
      %v1514 = vld [vmem:[#allocation3 + $0x38] sm:$0xff]
      %v1515 = vld [vmem:[#allocation3 + $0x40] sm:$0xff]
      %v1516 = vld [vmem:[#allocation3 + $0x48] sm:$0xff]
      %v1517 = vld [vmem:[#allocation3 + $0x50] sm:$0xff]
      %v1518 = vld [vmem:[#allocation3 + $0x58] sm:$0xff]
      %v1519 = vld [vmem:[#allocation3 + $0x60] sm:$0xff]
      %v1520 = vld [vmem:[#allocation3 + $0x68] sm:$0xff]
      %v1521 = vld [vmem:[#allocation3 + $0x70] sm:$0xff]
      %v1522 = vld [vmem:[#allocation3 + $0x78] sm:$0xff]
      %v1523 = vld [vmem:[#allocation3 + $0x80] sm:$0xff]
      %v1524 = vld [vmem:[#allocation3 + $0x88] sm:$0xff]
      %v1525 = vld [vmem:[#allocation3 + $0x90] sm:$0xff]
      %v1526 = vld [vmem:[#allocation3 + $0x98] sm:$0xff]
      %v1527 = vld [vmem:[#allocation3 + $0xa0] sm:$0xff]
      %v1528 = vld [vmem:[#allocation3 + $0xa8] sm:$0xff]
      %v1529 = vld [vmem:[#allocation3 + $0xb0] sm:$0xff]
      %v1530 = vld [vmem:[#allocation3 + $0xb8] sm:$0xff]
      %v1531 = vld [vmem:[#allocation3 + $0xc0] sm:$0xff]
      %v1532 = vld [vmem:[#allocation3 + $0xc8] sm:$0xff]
      %v1533 = vld [vmem:[#allocation3 + $0xd0] sm:$0xff]
      %v1534 = vld [vmem:[#allocation3 + $0xd8] sm:$0xff]
      %v1535 = vld [vmem:[#allocation3 + $0xe0] sm:$0xff]
      %v1536 = vld [vmem:[#allocation3 + $0xe8] sm:$0xff]
      %v1537 = vld [vmem:[#allocation3 + $0xf0] sm:$0xff]
      %v1538 = vld [vmem:[#allocation3 + $0xf8] sm:$0xff]
      %v1539 = vpack.c.bf16 %v1476, %v1475
      %v1540 = vpack.c.bf16 %v1478, %v1477
      %v1541 = vpack.c.bf16 %v1480, %v1479
      %v1542 = vpack.c.bf16 %v1482, %v1481
      %v1543 = vpack.c.bf16 %v1484, %v1483
      %v1544 = vpack.c.bf16 %v1486, %v1485
      %v1545 = vpack.c.bf16 %v1488, %v1487
      %v1546 = vpack.c.bf16 %v1490, %v1489
      %v1547 = vpack.c.bf16 %v1492, %v1491
      %v1548 = vpack.c.bf16 %v1494, %v1493
      %v1549 = vpack.c.bf16 %v1496, %v1495
      %v1550 = vpack.c.bf16 %v1498, %v1497
      %v1551 = vpack.c.bf16 %v1500, %v1499
      %v1552 = vpack.c.bf16 %v1502, %v1501
      %v1553 = vpack.c.bf16 %v1504, %v1503
      %v1554 = vpack.c.bf16 %v1506, %v1505
      %s1555 = scalar_lea.vmem %s3, 6
      %v1556 = vld [vmem:[%s1555] sm:$0x3]
      %v1558 = vsel %vm510, %v1539, 0
      %v1561 = vsel %vm510, %v1540, 0
      %v1564 = vsel %vm510, %v1541, 0
      %v1567 = vsel %vm510, %v1542, 0
      %v1570 = vsel %vm510, %v1543, 0
      %v1573 = vsel %vm510, %v1544, 0
      %v1576 = vsel %vm510, %v1545, 0
      %v1579 = vsel %vm510, %v1546, 0
      %v1582 = vsel %vm510, %v1547, 0
      %v1585 = vsel %vm510, %v1548, 0
      %v1588 = vsel %vm510, %v1549, 0
      %v1591 = vsel %vm510, %v1550, 0
      %v1594 = vsel %vm510, %v1551, 0
      %v1597 = vsel %vm510, %v1552, 0
      %v1600 = vsel %vm510, %v1553, 0
      %v1603 = vsel %vm510, %v1554, 0
      %v1606 = vsel %vm746, %v1556, 0
      %1608 = vmatpush.bf16.msra.mxu0 0
      %1609 = vmatpush.bf16.msra.mxu0 0
      %1610 = vmatpush.bf16.msra.mxu0 0
      %1611 = vmatpush.bf16.msra.mxu0 0
      %1612 = vmatpush.bf16.msra.mxu0 0
      %1613 = vmatpush.bf16.msra.mxu0 0
      %1614 = vmatpush.bf16.msra.mxu0 0
      %1615 = vmatpush.bf16.msra.mxu0 %v1606
      %1616 = vmatmul.bf16.gmra.mxu0 %v1558
      %v1617 = vpop.f32.mrf.mxu0
      %v1618 = vadd.f32 0.0, %v1617
      %v1619 = vpop.f32.mrf.mxu0
      %v1620 = vadd.f32 0.0, %v1619
      %1621 = vmatmul.bf16.gmra.mxu0 %v1561
      %v1622 = vpop.f32.mrf.mxu0
      %v1623 = vadd.f32 0.0, %v1622
      %v1624 = vpop.f32.mrf.mxu0
      %v1625 = vadd.f32 0.0, %v1624
      %1626 = vmatmul.bf16.gmra.mxu0 %v1564
      %v1627 = vpop.f32.mrf.mxu0
      %v1628 = vadd.f32 0.0, %v1627
      %v1629 = vpop.f32.mrf.mxu0
      %v1630 = vadd.f32 0.0, %v1629
      %1631 = vmatmul.bf16.gmra.mxu0 %v1567
      %v1632 = vpop.f32.mrf.mxu0
      %v1633 = vadd.f32 0.0, %v1632
      %v1634 = vpop.f32.mrf.mxu0
      %v1635 = vadd.f32 0.0, %v1634
      %1636 = vmatmul.bf16.gmra.mxu0 %v1570
      %v1637 = vpop.f32.mrf.mxu0
      %v1638 = vadd.f32 0.0, %v1637
      %v1639 = vpop.f32.mrf.mxu0
      %v1640 = vadd.f32 0.0, %v1639
      %1641 = vmatmul.bf16.gmra.mxu0 %v1573
      %v1642 = vpop.f32.mrf.mxu0
      %v1643 = vadd.f32 0.0, %v1642
      %v1644 = vpop.f32.mrf.mxu0
      %v1645 = vadd.f32 0.0, %v1644
      %1646 = vmatmul.bf16.gmra.mxu0 %v1576
      %v1647 = vpop.f32.mrf.mxu0
      %v1648 = vadd.f32 0.0, %v1647
      %v1649 = vpop.f32.mrf.mxu0
      %v1650 = vadd.f32 0.0, %v1649
      %1651 = vmatmul.bf16.gmra.mxu0 %v1579
      %v1652 = vpop.f32.mrf.mxu0
      %v1653 = vadd.f32 0.0, %v1652
      %v1654 = vpop.f32.mrf.mxu0
      %v1655 = vadd.f32 0.0, %v1654
      %1656 = vmatmul.bf16.gmra.mxu0 %v1582
      %v1657 = vpop.f32.mrf.mxu0
      %v1658 = vadd.f32 0.0, %v1657
      %v1659 = vpop.f32.mrf.mxu0
      %v1660 = vadd.f32 0.0, %v1659
      %1661 = vmatmul.bf16.gmra.mxu0 %v1585
      %v1662 = vpop.f32.mrf.mxu0
      %v1663 = vadd.f32 0.0, %v1662
      %v1664 = vpop.f32.mrf.mxu0
      %v1665 = vadd.f32 0.0, %v1664
      %1666 = vmatmul.bf16.gmra.mxu0 %v1588
      %v1667 = vpop.f32.mrf.mxu0
      %v1668 = vadd.f32 0.0, %v1667
      %v1669 = vpop.f32.mrf.mxu0
      %v1670 = vadd.f32 0.0, %v1669
      %1671 = vmatmul.bf16.gmra.mxu0 %v1591
      %v1672 = vpop.f32.mrf.mxu0
      %v1673 = vadd.f32 0.0, %v1672
      %v1674 = vpop.f32.mrf.mxu0
      %v1675 = vadd.f32 0.0, %v1674
      %1676 = vmatmul.bf16.gmra.mxu0 %v1594
      %v1677 = vpop.f32.mrf.mxu0
      %v1678 = vadd.f32 0.0, %v1677
      %v1679 = vpop.f32.mrf.mxu0
      %v1680 = vadd.f32 0.0, %v1679
      %1681 = vmatmul.bf16.gmra.mxu0 %v1597
      %v1682 = vpop.f32.mrf.mxu0
      %v1683 = vadd.f32 0.0, %v1682
      %v1684 = vpop.f32.mrf.mxu0
      %v1685 = vadd.f32 0.0, %v1684
      %1686 = vmatmul.bf16.gmra.mxu0 %v1600
      %v1687 = vpop.f32.mrf.mxu0
      %v1688 = vadd.f32 0.0, %v1687
      %v1689 = vpop.f32.mrf.mxu0
      %v1690 = vadd.f32 0.0, %v1689
      %1691 = vmatmul.bf16.gmra.mxu0 %v1603
      %v1692 = vpop.f32.mrf.mxu0
      %v1693 = vadd.f32 0.0, %v1692
      %v1694 = vpop.f32.mrf.mxu0
      %v1695 = vadd.f32 0.0, %v1694
      %1696 = vdwg.mxu0
      %v1697 = vadd.f32 %v1507, %v1618
      %v1698 = vadd.f32 %v1508, %v1620
      %v1699 = vadd.f32 %v1509, %v1623
      %v1700 = vadd.f32 %v1510, %v1625
      %v1701 = vadd.f32 %v1511, %v1628
      %v1702 = vadd.f32 %v1512, %v1630
      %v1703 = vadd.f32 %v1513, %v1633
      %v1704 = vadd.f32 %v1514, %v1635
      %v1705 = vadd.f32 %v1515, %v1638
      %v1706 = vadd.f32 %v1516, %v1640
      %v1707 = vadd.f32 %v1517, %v1643
      %v1708 = vadd.f32 %v1518, %v1645
      %v1709 = vadd.f32 %v1519, %v1648
      %v1710 = vadd.f32 %v1520, %v1650
      %v1711 = vadd.f32 %v1521, %v1653
      %v1712 = vadd.f32 %v1522, %v1655
      %v1713 = vadd.f32 %v1523, %v1658
      %v1714 = vadd.f32 %v1524, %v1660
      %v1715 = vadd.f32 %v1525, %v1663
      %v1716 = vadd.f32 %v1526, %v1665
      %v1717 = vadd.f32 %v1527, %v1668
      %v1718 = vadd.f32 %v1528, %v1670
      %v1719 = vadd.f32 %v1529, %v1673
      %v1720 = vadd.f32 %v1530, %v1675
      %v1721 = vadd.f32 %v1531, %v1678
      %v1722 = vadd.f32 %v1532, %v1680
      %v1723 = vadd.f32 %v1533, %v1683
      %v1724 = vadd.f32 %v1534, %v1685
      %v1725 = vadd.f32 %v1535, %v1688
      %v1726 = vadd.f32 %v1536, %v1690
      %v1727 = vadd.f32 %v1537, %v1693
      %v1728 = vadd.f32 %v1538, %v1695
      %1729 = vst.msk [vmem:[#allocation3] sm:$0xff] %vm510, %v1697
      %1730 = vst.msk [vmem:[#allocation3 + $0x8] sm:$0xff] %vm510, %v1698
      %1731 = vst.msk [vmem:[#allocation3 + $0x10] sm:$0xff] %vm510, %v1699
      %1732 = vst.msk [vmem:[#allocation3 + $0x18] sm:$0xff] %vm510, %v1700
      %1733 = vst.msk [vmem:[#allocation3 + $0x20] sm:$0xff] %vm510, %v1701
      %1734 = vst.msk [vmem:[#allocation3 + $0x28] sm:$0xff] %vm510, %v1702
      %1735 = vst.msk [vmem:[#allocation3 + $0x30] sm:$0xff] %vm510, %v1703
      %1736 = vst.msk [vmem:[#allocation3 + $0x38] sm:$0xff] %vm510, %v1704
      %1737 = vst.msk [vmem:[#allocation3 + $0x40] sm:$0xff] %vm510, %v1705
      %1738 = vst.msk [vmem:[#allocation3 + $0x48] sm:$0xff] %vm510, %v1706
      %1739 = vst.msk [vmem:[#allocation3 + $0x50] sm:$0xff] %vm510, %v1707
      %1740 = vst.msk [vmem:[#allocation3 + $0x58] sm:$0xff] %vm510, %v1708
      %1741 = vst.msk [vmem:[#allocation3 + $0x60] sm:$0xff] %vm510, %v1709
      %1742 = vst.msk [vmem:[#allocation3 + $0x68] sm:$0xff] %vm510, %v1710
      %1743 = vst.msk [vmem:[#allocation3 + $0x70] sm:$0xff] %vm510, %v1711
      %1744 = vst.msk [vmem:[#allocation3 + $0x78] sm:$0xff] %vm510, %v1712
      %1745 = vst.msk [vmem:[#allocation3 + $0x80] sm:$0xff] %vm510, %v1713
      %1746 = vst.msk [vmem:[#allocation3 + $0x88] sm:$0xff] %vm510, %v1714
      %1747 = vst.msk [vmem:[#allocation3 + $0x90] sm:$0xff] %vm510, %v1715
      %1748 = vst.msk [vmem:[#allocation3 + $0x98] sm:$0xff] %vm510, %v1716
      %1749 = vst.msk [vmem:[#allocation3 + $0xa0] sm:$0xff] %vm510, %v1717
      %1750 = vst.msk [vmem:[#allocation3 + $0xa8] sm:$0xff] %vm510, %v1718
      %1751 = vst.msk [vmem:[#allocation3 + $0xb0] sm:$0xff] %vm510, %v1719
      %1752 = vst.msk [vmem:[#allocation3 + $0xb8] sm:$0xff] %vm510, %v1720
      %1753 = vst.msk [vmem:[#allocation3 + $0xc0] sm:$0xff] %vm510, %v1721
      %1754 = vst.msk [vmem:[#allocation3 + $0xc8] sm:$0xff] %vm510, %v1722
      %1755 = vst.msk [vmem:[#allocation3 + $0xd0] sm:$0xff] %vm510, %v1723
      %1756 = vst.msk [vmem:[#allocation3 + $0xd8] sm:$0xff] %vm510, %v1724
      %1757 = vst.msk [vmem:[#allocation3 + $0xe0] sm:$0xff] %vm510, %v1725
      %1758 = vst.msk [vmem:[#allocation3 + $0xe8] sm:$0xff] %vm510, %v1726
      %1759 = vst.msk [vmem:[#allocation3 + $0xf0] sm:$0xff] %vm510, %v1727
      %1760 = vst.msk [vmem:[#allocation3 + $0xf8] sm:$0xff] %vm510, %v1728
      %v1761 = vld [vmem:[%s552 + $0x8] sm:$0xff]
      %v1762 = vld [vmem:[%s552 + $0x10] sm:$0xff]
      %v1763 = vld [vmem:[%s552 + $0x28] sm:$0xff]
      %v1764 = vld [vmem:[%s552 + $0x30] sm:$0xff]
      %v1765 = vld [vmem:[%s552 + $0x48] sm:$0xff]
      %v1766 = vld [vmem:[%s552 + $0x50] sm:$0xff]
      %v1767 = vld [vmem:[%s552 + $0x68] sm:$0xff]
      %v1768 = vld [vmem:[%s552 + $0x70] sm:$0xff]
      %v1769 = vld [vmem:[%s552 + $0x88] sm:$0xff]
      %v1770 = vld [vmem:[%s552 + $0x90] sm:$0xff]
      %v1771 = vld [vmem:[%s552 + $0xa8] sm:$0xff]
      %v1772 = vld [vmem:[%s552 + $0xb0] sm:$0xff]
      %v1773 = vld [vmem:[%s552 + $0xc8] sm:$0xff]
      %v1774 = vld [vmem:[%s552 + $0xd0] sm:$0xff]
      %v1775 = vld [vmem:[%s552 + $0xe8] sm:$0xff]
      %v1776 = vld [vmem:[%s552 + $0xf0] sm:$0xff]
      %v1777 = vld [vmem:[%s552 + $0x108] sm:$0xff]
      %v1778 = vld [vmem:[%s552 + $0x110] sm:$0xff]
      %v1779 = vld [vmem:[%s552 + $0x128] sm:$0xff]
      %v1780 = vld [vmem:[%s552 + $0x130] sm:$0xff]
      %v1781 = vld [vmem:[%s552 + $0x148] sm:$0xff]
      %v1782 = vld [vmem:[%s552 + $0x150] sm:$0xff]
      %v1783 = vld [vmem:[%s552 + $0x168] sm:$0xff]
      %v1784 = vld [vmem:[%s552 + $0x170] sm:$0xff]
      %v1785 = vld [vmem:[%s552 + $0x188] sm:$0xff]
      %v1786 = vld [vmem:[%s552 + $0x190] sm:$0xff]
      %v1787 = vld [vmem:[%s552 + $0x1a8] sm:$0xff]
      %v1788 = vld [vmem:[%s552 + $0x1b0] sm:$0xff]
      %v1789 = vld [vmem:[%s552 + $0x1c8] sm:$0xff]
      %v1790 = vld [vmem:[%s552 + $0x1d0] sm:$0xff]
      %v1791 = vld [vmem:[%s552 + $0x1e8] sm:$0xff]
      %v1792 = vld [vmem:[%s552 + $0x1f0] sm:$0xff]
      %v1793 = vld [vmem:[#allocation3] sm:$0xff]
      %v1794 = vld [vmem:[#allocation3 + $0x8] sm:$0xff]
      %v1795 = vld [vmem:[#allocation3 + $0x10] sm:$0xff]
      %v1796 = vld [vmem:[#allocation3 + $0x18] sm:$0xff]
      %v1797 = vld [vmem:[#allocation3 + $0x20] sm:$0xff]
      %v1798 = vld [vmem:[#allocation3 + $0x28] sm:$0xff]
      %v1799 = vld [vmem:[#allocation3 + $0x30] sm:$0xff]
      %v1800 = vld [vmem:[#allocation3 + $0x38] sm:$0xff]
      %v1801 = vld [vmem:[#allocation3 + $0x40] sm:$0xff]
      %v1802 = vld [vmem:[#allocation3 + $0x48] sm:$0xff]
      %v1803 = vld [vmem:[#allocation3 + $0x50] sm:$0xff]
      %v1804 = vld [vmem:[#allocation3 + $0x58] sm:$0xff]
      %v1805 = vld [vmem:[#allocation3 + $0x60] sm:$0xff]
      %v1806 = vld [vmem:[#allocation3 + $0x68] sm:$0xff]
      %v1807 = vld [vmem:[#allocation3 + $0x70] sm:$0xff]
      %v1808 = vld [vmem:[#allocation3 + $0x78] sm:$0xff]
      %v1809 = vld [vmem:[#allocation3 + $0x80] sm:$0xff]
      %v1810 = vld [vmem:[#allocation3 + $0x88] sm:$0xff]
      %v1811 = vld [vmem:[#allocation3 + $0x90] sm:$0xff]
      %v1812 = vld [vmem:[#allocation3 + $0x98] sm:$0xff]
      %v1813 = vld [vmem:[#allocation3 + $0xa0] sm:$0xff]
      %v1814 = vld [vmem:[#allocation3 + $0xa8] sm:$0xff]
      %v1815 = vld [vmem:[#allocation3 + $0xb0] sm:$0xff]
      %v1816 = vld [vmem:[#allocation3 + $0xb8] sm:$0xff]
      %v1817 = vld [vmem:[#allocation3 + $0xc0] sm:$0xff]
      %v1818 = vld [vmem:[#allocation3 + $0xc8] sm:$0xff]
      %v1819 = vld [vmem:[#allocation3 + $0xd0] sm:$0xff]
      %v1820 = vld [vmem:[#allocation3 + $0xd8] sm:$0xff]
      %v1821 = vld [vmem:[#allocation3 + $0xe0] sm:$0xff]
      %v1822 = vld [vmem:[#allocation3 + $0xe8] sm:$0xff]
      %v1823 = vld [vmem:[#allocation3 + $0xf0] sm:$0xff]
      %v1824 = vld [vmem:[#allocation3 + $0xf8] sm:$0xff]
      %v1825 = vpack.c.bf16 %v1762, %v1761
      %v1826 = vpack.c.bf16 %v1764, %v1763
      %v1827 = vpack.c.bf16 %v1766, %v1765
      %v1828 = vpack.c.bf16 %v1768, %v1767
      %v1829 = vpack.c.bf16 %v1770, %v1769
      %v1830 = vpack.c.bf16 %v1772, %v1771
      %v1831 = vpack.c.bf16 %v1774, %v1773
      %v1832 = vpack.c.bf16 %v1776, %v1775
      %v1833 = vpack.c.bf16 %v1778, %v1777
      %v1834 = vpack.c.bf16 %v1780, %v1779
      %v1835 = vpack.c.bf16 %v1782, %v1781
      %v1836 = vpack.c.bf16 %v1784, %v1783
      %v1837 = vpack.c.bf16 %v1786, %v1785
      %v1838 = vpack.c.bf16 %v1788, %v1787
      %v1839 = vpack.c.bf16 %v1790, %v1789
      %v1840 = vpack.c.bf16 %v1792, %v1791
      %s1841 = scalar_lea.vmem %s3, 8
      %v1842 = vld [vmem:[%s1841] sm:$0x3]
      %v1844 = vsel %vm510, %v1825, 0
      %v1847 = vsel %vm510, %v1826, 0
      %v1850 = vsel %vm510, %v1827, 0
      %v1853 = vsel %vm510, %v1828, 0
      %v1856 = vsel %vm510, %v1829, 0
      %v1859 = vsel %vm510, %v1830, 0
      %v1862 = vsel %vm510, %v1831, 0
      %v1865 = vsel %vm510, %v1832, 0
      %v1868 = vsel %vm510, %v1833, 0
      %v1871 = vsel %vm510, %v1834, 0
      %v1874 = vsel %vm510, %v1835, 0
      %v1877 = vsel %vm510, %v1836, 0
      %v1880 = vsel %vm510, %v1837, 0
      %v1883 = vsel %vm510, %v1838, 0
      %v1886 = vsel %vm510, %v1839, 0
      %v1889 = vsel %vm510, %v1840, 0
      %v1892 = vsel %vm746, %v1842, 0
      %1894 = vmatpush.bf16.msra.mxu0 0
      %1895 = vmatpush.bf16.msra.mxu0 0
      %1896 = vmatpush.bf16.msra.mxu0 0
      %1897 = vmatpush.bf16.msra.mxu0 0
      %1898 = vmatpush.bf16.msra.mxu0 0
      %1899 = vmatpush.bf16.msra.mxu0 0
      %1900 = vmatpush.bf16.msra.mxu0 0
      %1901 = vmatpush.bf16.msra.mxu0 %v1892
      %1902 = vmatmul.bf16.gmra.mxu0 %v1844
      %v1903 = vpop.f32.mrf.mxu0
      %v1904 = vadd.f32 0.0, %v1903
      %v1905 = vpop.f32.mrf.mxu0
      %v1906 = vadd.f32 0.0, %v1905
      %1907 = vmatmul.bf16.gmra.mxu0 %v1847
      %v1908 = vpop.f32.mrf.mxu0
      %v1909 = vadd.f32 0.0, %v1908
      %v1910 = vpop.f32.mrf.mxu0
      %v1911 = vadd.f32 0.0, %v1910
      %1912 = vmatmul.bf16.gmra.mxu0 %v1850
      %v1913 = vpop.f32.mrf.mxu0
      %v1914 = vadd.f32 0.0, %v1913
      %v1915 = vpop.f32.mrf.mxu0
      %v1916 = vadd.f32 0.0, %v1915
      %1917 = vmatmul.bf16.gmra.mxu0 %v1853
      %v1918 = vpop.f32.mrf.mxu0
      %v1919 = vadd.f32 0.0, %v1918
      %v1920 = vpop.f32.mrf.mxu0
      %v1921 = vadd.f32 0.0, %v1920
      %1922 = vmatmul.bf16.gmra.mxu0 %v1856
      %v1923 = vpop.f32.mrf.mxu0
      %v1924 = vadd.f32 0.0, %v1923
      %v1925 = vpop.f32.mrf.mxu0
      %v1926 = vadd.f32 0.0, %v1925
      %1927 = vmatmul.bf16.gmra.mxu0 %v1859
      %v1928 = vpop.f32.mrf.mxu0
      %v1929 = vadd.f32 0.0, %v1928
      %v1930 = vpop.f32.mrf.mxu0
      %v1931 = vadd.f32 0.0, %v1930
      %1932 = vmatmul.bf16.gmra.mxu0 %v1862
      %v1933 = vpop.f32.mrf.mxu0
      %v1934 = vadd.f32 0.0, %v1933
      %v1935 = vpop.f32.mrf.mxu0
      %v1936 = vadd.f32 0.0, %v1935
      %1937 = vmatmul.bf16.gmra.mxu0 %v1865
      %v1938 = vpop.f32.mrf.mxu0
      %v1939 = vadd.f32 0.0, %v1938
      %v1940 = vpop.f32.mrf.mxu0
      %v1941 = vadd.f32 0.0, %v1940
      %1942 = vmatmul.bf16.gmra.mxu0 %v1868
      %v1943 = vpop.f32.mrf.mxu0
      %v1944 = vadd.f32 0.0, %v1943
      %v1945 = vpop.f32.mrf.mxu0
      %v1946 = vadd.f32 0.0, %v1945
      %1947 = vmatmul.bf16.gmra.mxu0 %v1871
      %v1948 = vpop.f32.mrf.mxu0
      %v1949 = vadd.f32 0.0, %v1948
      %v1950 = vpop.f32.mrf.mxu0
      %v1951 = vadd.f32 0.0, %v1950
      %1952 = vmatmul.bf16.gmra.mxu0 %v1874
      %v1953 = vpop.f32.mrf.mxu0
      %v1954 = vadd.f32 0.0, %v1953
      %v1955 = vpop.f32.mrf.mxu0
      %v1956 = vadd.f32 0.0, %v1955
      %1957 = vmatmul.bf16.gmra.mxu0 %v1877
      %v1958 = vpop.f32.mrf.mxu0
      %v1959 = vadd.f32 0.0, %v1958
      %v1960 = vpop.f32.mrf.mxu0
      %v1961 = vadd.f32 0.0, %v1960
      %1962 = vmatmul.bf16.gmra.mxu0 %v1880
      %v1963 = vpop.f32.mrf.mxu0
      %v1964 = vadd.f32 0.0, %v1963
      %v1965 = vpop.f32.mrf.mxu0
      %v1966 = vadd.f32 0.0, %v1965
      %1967 = vmatmul.bf16.gmra.mxu0 %v1883
      %v1968 = vpop.f32.mrf.mxu0
      %v1969 = vadd.f32 0.0, %v1968
      %v1970 = vpop.f32.mrf.mxu0
      %v1971 = vadd.f32 0.0, %v1970
      %1972 = vmatmul.bf16.gmra.mxu0 %v1886
      %v1973 = vpop.f32.mrf.mxu0
      %v1974 = vadd.f32 0.0, %v1973
      %v1975 = vpop.f32.mrf.mxu0
      %v1976 = vadd.f32 0.0, %v1975
      %1977 = vmatmul.bf16.gmra.mxu0 %v1889
      %v1978 = vpop.f32.mrf.mxu0
      %v1979 = vadd.f32 0.0, %v1978
      %v1980 = vpop.f32.mrf.mxu0
      %v1981 = vadd.f32 0.0, %v1980
      %1982 = vdwg.mxu0
      %v1983 = vadd.f32 %v1793, %v1904
      %v1984 = vadd.f32 %v1794, %v1906
      %v1985 = vadd.f32 %v1795, %v1909
      %v1986 = vadd.f32 %v1796, %v1911
      %v1987 = vadd.f32 %v1797, %v1914
      %v1988 = vadd.f32 %v1798, %v1916
      %v1989 = vadd.f32 %v1799, %v1919
      %v1990 = vadd.f32 %v1800, %v1921
      %v1991 = vadd.f32 %v1801, %v1924
      %v1992 = vadd.f32 %v1802, %v1926
      %v1993 = vadd.f32 %v1803, %v1929
      %v1994 = vadd.f32 %v1804, %v1931
      %v1995 = vadd.f32 %v1805, %v1934
      %v1996 = vadd.f32 %v1806, %v1936
      %v1997 = vadd.f32 %v1807, %v1939
      %v1998 = vadd.f32 %v1808, %v1941
      %v1999 = vadd.f32 %v1809, %v1944
      %v2000 = vadd.f32 %v1810, %v1946
      %v2001 = vadd.f32 %v1811, %v1949
      %v2002 = vadd.f32 %v1812, %v1951
      %v2003 = vadd.f32 %v1813, %v1954
      %v2004 = vadd.f32 %v1814, %v1956
      %v2005 = vadd.f32 %v1815, %v1959
      %v2006 = vadd.f32 %v1816, %v1961
      %v2007 = vadd.f32 %v1817, %v1964
      %v2008 = vadd.f32 %v1818, %v1966
      %v2009 = vadd.f32 %v1819, %v1969
      %v2010 = vadd.f32 %v1820, %v1971
      %v2011 = vadd.f32 %v1821, %v1974
      %v2012 = vadd.f32 %v1822, %v1976
      %v2013 = vadd.f32 %v1823, %v1979
      %v2014 = vadd.f32 %v1824, %v1981
      %2015 = vst.msk [vmem:[#allocation3] sm:$0xff] %vm510, %v1983
      %2016 = vst.msk [vmem:[#allocation3 + $0x8] sm:$0xff] %vm510, %v1984
      %2017 = vst.msk [vmem:[#allocation3 + $0x10] sm:$0xff] %vm510, %v1985
      %2018 = vst.msk [vmem:[#allocation3 + $0x18] sm:$0xff] %vm510, %v1986
      %2019 = vst.msk [vmem:[#allocation3 + $0x20] sm:$0xff] %vm510, %v1987
      %2020 = vst.msk [vmem:[#allocation3 + $0x28] sm:$0xff] %vm510, %v1988
      %2021 = vst.msk [vmem:[#allocation3 + $0x30] sm:$0xff] %vm510, %v1989
      %2022 = vst.msk [vmem:[#allocation3 + $0x38] sm:$0xff] %vm510, %v1990
      %2023 = vst.msk [vmem:[#allocation3 + $0x40] sm:$0xff] %vm510, %v1991
      %2024 = vst.msk [vmem:[#allocation3 + $0x48] sm:$0xff] %vm510, %v1992
      %2025 = vst.msk [vmem:[#allocation3 + $0x50] sm:$0xff] %vm510, %v1993
      %2026 = vst.msk [vmem:[#allocation3 + $0x58] sm:$0xff] %vm510, %v1994
      %2027 = vst.msk [vmem:[#allocation3 + $0x60] sm:$0xff] %vm510, %v1995
      %2028 = vst.msk [vmem:[#allocation3 + $0x68] sm:$0xff] %vm510, %v1996
      %2029 = vst.msk [vmem:[#allocation3 + $0x70] sm:$0xff] %vm510, %v1997
      %2030 = vst.msk [vmem:[#allocation3 + $0x78] sm:$0xff] %vm510, %v1998
      %2031 = vst.msk [vmem:[#allocation3 + $0x80] sm:$0xff] %vm510, %v1999
      %2032 = vst.msk [vmem:[#allocation3 + $0x88] sm:$0xff] %vm510, %v2000
      %2033 = vst.msk [vmem:[#allocation3 + $0x90] sm:$0xff] %vm510, %v2001
      %2034 = vst.msk [vmem:[#allocation3 + $0x98] sm:$0xff] %vm510, %v2002
      %2035 = vst.msk [vmem:[#allocation3 + $0xa0] sm:$0xff] %vm510, %v2003
      %2036 = vst.msk [vmem:[#allocation3 + $0xa8] sm:$0xff] %vm510, %v2004
      %2037 = vst.msk [vmem:[#allocation3 + $0xb0] sm:$0xff] %vm510, %v2005
      %2038 = vst.msk [vmem:[#allocation3 + $0xb8] sm:$0xff] %vm510, %v2006
      %2039 = vst.msk [vmem:[#allocation3 + $0xc0] sm:$0xff] %vm510, %v2007
      %2040 = vst.msk [vmem:[#allocation3 + $0xc8] sm:$0xff] %vm510, %v2008
      %2041 = vst.msk [vmem:[#allocation3 + $0xd0] sm:$0xff] %vm510, %v2009
      %2042 = vst.msk [vmem:[#allocation3 + $0xd8] sm:$0xff] %vm510, %v2010
      %2043 = vst.msk [vmem:[#allocation3 + $0xe0] sm:$0xff] %vm510, %v2011
      %2044 = vst.msk [vmem:[#allocation3 + $0xe8] sm:$0xff] %vm510, %v2012
      %2045 = vst.msk [vmem:[#allocation3 + $0xf0] sm:$0xff] %vm510, %v2013
      %2046 = vst.msk [vmem:[#allocation3 + $0xf8] sm:$0xff] %vm510, %v2014
      %v2047 = vld [vmem:[%s552 + $0x9] sm:$0xff]
      %v2048 = vld [vmem:[%s552 + $0x11] sm:$0xff]
      %v2049 = vld [vmem:[%s552 + $0x29] sm:$0xff]
      %v2050 = vld [vmem:[%s552 + $0x31] sm:$0xff]
      %v2051 = vld [vmem:[%s552 + $0x49] sm:$0xff]
      %v2052 = vld [vmem:[%s552 + $0x51] sm:$0xff]
      %v2053 = vld [vmem:[%s552 + $0x69] sm:$0xff]
      %v2054 = vld [vmem:[%s552 + $0x71] sm:$0xff]
      %v2055 = vld [vmem:[%s552 + $0x89] sm:$0xff]
      %v2056 = vld [vmem:[%s552 + $0x91] sm:$0xff]
      %v2057 = vld [vmem:[%s552 + $0xa9] sm:$0xff]
      %v2058 = vld [vmem:[%s552 + $0xb1] sm:$0xff]
      %v2059 = vld [vmem:[%s552 + $0xc9] sm:$0xff]
      %v2060 = vld [vmem:[%s552 + $0xd1] sm:$0xff]
      %v2061 = vld [vmem:[%s552 + $0xe9] sm:$0xff]
      %v2062 = vld [vmem:[%s552 + $0xf1] sm:$0xff]
      %v2063 = vld [vmem:[%s552 + $0x109] sm:$0xff]
      %v2064 = vld [vmem:[%s552 + $0x111] sm:$0xff]
      %v2065 = vld [vmem:[%s552 + $0x129] sm:$0xff]
      %v2066 = vld [vmem:[%s552 + $0x131] sm:$0xff]
      %v2067 = vld [vmem:[%s552 + $0x149] sm:$0xff]
      %v2068 = vld [vmem:[%s552 + $0x151] sm:$0xff]
      %v2069 = vld [vmem:[%s552 + $0x169] sm:$0xff]
      %v2070 = vld [vmem:[%s552 + $0x171] sm:$0xff]
      %v2071 = vld [vmem:[%s552 + $0x189] sm:$0xff]
      %v2072 = vld [vmem:[%s552 + $0x191] sm:$0xff]
      %v2073 = vld [vmem:[%s552 + $0x1a9] sm:$0xff]
      %v2074 = vld [vmem:[%s552 + $0x1b1] sm:$0xff]
      %v2075 = vld [vmem:[%s552 + $0x1c9] sm:$0xff]
      %v2076 = vld [vmem:[%s552 + $0x1d1] sm:$0xff]
      %v2077 = vld [vmem:[%s552 + $0x1e9] sm:$0xff]
      %v2078 = vld [vmem:[%s552 + $0x1f1] sm:$0xff]
      %v2079 = vld [vmem:[#allocation3] sm:$0xff]
      %v2080 = vld [vmem:[#allocation3 + $0x8] sm:$0xff]
      %v2081 = vld [vmem:[#allocation3 + $0x10] sm:$0xff]
      %v2082 = vld [vmem:[#allocation3 + $0x18] sm:$0xff]
      %v2083 = vld [vmem:[#allocation3 + $0x20] sm:$0xff]
      %v2084 = vld [vmem:[#allocation3 + $0x28] sm:$0xff]
      %v2085 = vld [vmem:[#allocation3 + $0x30] sm:$0xff]
      %v2086 = vld [vmem:[#allocation3 + $0x38] sm:$0xff]
      %v2087 = vld [vmem:[#allocation3 + $0x40] sm:$0xff]
      %v2088 = vld [vmem:[#allocation3 + $0x48] sm:$0xff]
      %v2089 = vld [vmem:[#allocation3 + $0x50] sm:$0xff]
      %v2090 = vld [vmem:[#allocation3 + $0x58] sm:$0xff]
      %v2091 = vld [vmem:[#allocation3 + $0x60] sm:$0xff]
      %v2092 = vld [vmem:[#allocation3 + $0x68] sm:$0xff]
      %v2093 = vld [vmem:[#allocation3 + $0x70] sm:$0xff]
      %v2094 = vld [vmem:[#allocation3 + $0x78] sm:$0xff]
      %v2095 = vld [vmem:[#allocation3 + $0x80] sm:$0xff]
      %v2096 = vld [vmem:[#allocation3 + $0x88] sm:$0xff]
      %v2097 = vld [vmem:[#allocation3 + $0x90] sm:$0xff]
      %v2098 = vld [vmem:[#allocation3 + $0x98] sm:$0xff]
      %v2099 = vld [vmem:[#allocation3 + $0xa0] sm:$0xff]
      %v2100 = vld [vmem:[#allocation3 + $0xa8] sm:$0xff]
      %v2101 = vld [vmem:[#allocation3 + $0xb0] sm:$0xff]
      %v2102 = vld [vmem:[#allocation3 + $0xb8] sm:$0xff]
      %v2103 = vld [vmem:[#allocation3 + $0xc0] sm:$0xff]
      %v2104 = vld [vmem:[#allocation3 + $0xc8] sm:$0xff]
      %v2105 = vld [vmem:[#allocation3 + $0xd0] sm:$0xff]
      %v2106 = vld [vmem:[#allocation3 + $0xd8] sm:$0xff]
      %v2107 = vld [vmem:[#allocation3 + $0xe0] sm:$0xff]
      %v2108 = vld [vmem:[#allocation3 + $0xe8] sm:$0xff]
      %v2109 = vld [vmem:[#allocation3 + $0xf0] sm:$0xff]
      %v2110 = vld [vmem:[#allocation3 + $0xf8] sm:$0xff]
      %v2111 = vpack.c.bf16 %v2048, %v2047
      %v2112 = vpack.c.bf16 %v2050, %v2049
      %v2113 = vpack.c.bf16 %v2052, %v2051
      %v2114 = vpack.c.bf16 %v2054, %v2053
      %v2115 = vpack.c.bf16 %v2056, %v2055
      %v2116 = vpack.c.bf16 %v2058, %v2057
      %v2117 = vpack.c.bf16 %v2060, %v2059
      %v2118 = vpack.c.bf16 %v2062, %v2061
      %v2119 = vpack.c.bf16 %v2064, %v2063
      %v2120 = vpack.c.bf16 %v2066, %v2065
      %v2121 = vpack.c.bf16 %v2068, %v2067
      %v2122 = vpack.c.bf16 %v2070, %v2069
      %v2123 = vpack.c.bf16 %v2072, %v2071
      %v2124 = vpack.c.bf16 %v2074, %v2073
      %v2125 = vpack.c.bf16 %v2076, %v2075
      %v2126 = vpack.c.bf16 %v2078, %v2077
      %s2127 = scalar_lea.vmem %s3, 10
      %v2128 = vld [vmem:[%s2127] sm:$0x3]
      %v2130 = vsel %vm510, %v2111, 0
      %v2133 = vsel %vm510, %v2112, 0
      %v2136 = vsel %vm510, %v2113, 0
      %v2139 = vsel %vm510, %v2114, 0
      %v2142 = vsel %vm510, %v2115, 0
      %v2145 = vsel %vm510, %v2116, 0
      %v2148 = vsel %vm510, %v2117, 0
      %v2151 = vsel %vm510, %v2118, 0
      %v2154 = vsel %vm510, %v2119, 0
      %v2157 = vsel %vm510, %v2120, 0
      %v2160 = vsel %vm510, %v2121, 0
      %v2163 = vsel %vm510, %v2122, 0
      %v2166 = vsel %vm510, %v2123, 0
      %v2169 = vsel %vm510, %v2124, 0
      %v2172 = vsel %vm510, %v2125, 0
      %v2175 = vsel %vm510, %v2126, 0
      %v2178 = vsel %vm746, %v2128, 0
      %2180 = vmatpush.bf16.msra.mxu0 0
      %2181 = vmatpush.bf16.msra.mxu0 0
      %2182 = vmatpush.bf16.msra.mxu0 0
      %2183 = vmatpush.bf16.msra.mxu0 0
      %2184 = vmatpush.bf16.msra.mxu0 0
      %2185 = vmatpush.bf16.msra.mxu0 0
      %2186 = vmatpush.bf16.msra.mxu0 0
      %2187 = vmatpush.bf16.msra.mxu0 %v2178
      %2188 = vmatmul.bf16.gmra.mxu0 %v2130
      %v2189 = vpop.f32.mrf.mxu0
      %v2190 = vadd.f32 0.0, %v2189
      %v2191 = vpop.f32.mrf.mxu0
      %v2192 = vadd.f32 0.0, %v2191
      %2193 = vmatmul.bf16.gmra.mxu0 %v2133
      %v2194 = vpop.f32.mrf.mxu0
      %v2195 = vadd.f32 0.0, %v2194
      %v2196 = vpop.f32.mrf.mxu0
      %v2197 = vadd.f32 0.0, %v2196
      %2198 = vmatmul.bf16.gmra.mxu0 %v2136
      %v2199 = vpop.f32.mrf.mxu0
      %v2200 = vadd.f32 0.0, %v2199
      %v2201 = vpop.f32.mrf.mxu0
      %v2202 = vadd.f32 0.0, %v2201
      %2203 = vmatmul.bf16.gmra.mxu0 %v2139
      %v2204 = vpop.f32.mrf.mxu0
      %v2205 = vadd.f32 0.0, %v2204
      %v2206 = vpop.f32.mrf.mxu0
      %v2207 = vadd.f32 0.0, %v2206
      %2208 = vmatmul.bf16.gmra.mxu0 %v2142
      %v2209 = vpop.f32.mrf.mxu0
      %v2210 = vadd.f32 0.0, %v2209
      %v2211 = vpop.f32.mrf.mxu0
      %v2212 = vadd.f32 0.0, %v2211
      %2213 = vmatmul.bf16.gmra.mxu0 %v2145
      %v2214 = vpop.f32.mrf.mxu0
      %v2215 = vadd.f32 0.0, %v2214
      %v2216 = vpop.f32.mrf.mxu0
      %v2217 = vadd.f32 0.0, %v2216
      %2218 = vmatmul.bf16.gmra.mxu0 %v2148
      %v2219 = vpop.f32.mrf.mxu0
      %v2220 = vadd.f32 0.0, %v2219
      %v2221 = vpop.f32.mrf.mxu0
      %v2222 = vadd.f32 0.0, %v2221
      %2223 = vmatmul.bf16.gmra.mxu0 %v2151
      %v2224 = vpop.f32.mrf.mxu0
      %v2225 = vadd.f32 0.0, %v2224
      %v2226 = vpop.f32.mrf.mxu0
      %v2227 = vadd.f32 0.0, %v2226
      %2228 = vmatmul.bf16.gmra.mxu0 %v2154
      %v2229 = vpop.f32.mrf.mxu0
      %v2230 = vadd.f32 0.0, %v2229
      %v2231 = vpop.f32.mrf.mxu0
      %v2232 = vadd.f32 0.0, %v2231
      %2233 = vmatmul.bf16.gmra.mxu0 %v2157
      %v2234 = vpop.f32.mrf.mxu0
      %v2235 = vadd.f32 0.0, %v2234
      %v2236 = vpop.f32.mrf.mxu0
      %v2237 = vadd.f32 0.0, %v2236
      %2238 = vmatmul.bf16.gmra.mxu0 %v2160
      %v2239 = vpop.f32.mrf.mxu0
      %v2240 = vadd.f32 0.0, %v2239
      %v2241 = vpop.f32.mrf.mxu0
      %v2242 = vadd.f32 0.0, %v2241
      %2243 = vmatmul.bf16.gmra.mxu0 %v2163
      %v2244 = vpop.f32.mrf.mxu0
      %v2245 = vadd.f32 0.0, %v2244
      %v2246 = vpop.f32.mrf.mxu0
      %v2247 = vadd.f32 0.0, %v2246
      %2248 = vmatmul.bf16.gmra.mxu0 %v2166
      %v2249 = vpop.f32.mrf.mxu0
      %v2250 = vadd.f32 0.0, %v2249
      %v2251 = vpop.f32.mrf.mxu0
      %v2252 = vadd.f32 0.0, %v2251
      %2253 = vmatmul.bf16.gmra.mxu0 %v2169
      %v2254 = vpop.f32.mrf.mxu0
      %v2255 = vadd.f32 0.0, %v2254
      %v2256 = vpop.f32.mrf.mxu0
      %v2257 = vadd.f32 0.0, %v2256
      %2258 = vmatmul.bf16.gmra.mxu0 %v2172
      %v2259 = vpop.f32.mrf.mxu0
      %v2260 = vadd.f32 0.0, %v2259
      %v2261 = vpop.f32.mrf.mxu0
      %v2262 = vadd.f32 0.0, %v2261
      %2263 = vmatmul.bf16.gmra.mxu0 %v2175
      %v2264 = vpop.f32.mrf.mxu0
      %v2265 = vadd.f32 0.0, %v2264
      %v2266 = vpop.f32.mrf.mxu0
      %v2267 = vadd.f32 0.0, %v2266
      %2268 = vdwg.mxu0
      %v2269 = vadd.f32 %v2079, %v2190
      %v2270 = vadd.f32 %v2080, %v2192
      %v2271 = vadd.f32 %v2081, %v2195
      %v2272 = vadd.f32 %v2082, %v2197
      %v2273 = vadd.f32 %v2083, %v2200
      %v2274 = vadd.f32 %v2084, %v2202
      %v2275 = vadd.f32 %v2085, %v2205
      %v2276 = vadd.f32 %v2086, %v2207
      %v2277 = vadd.f32 %v2087, %v2210
      %v2278 = vadd.f32 %v2088, %v2212
      %v2279 = vadd.f32 %v2089, %v2215
      %v2280 = vadd.f32 %v2090, %v2217
      %v2281 = vadd.f32 %v2091, %v2220
      %v2282 = vadd.f32 %v2092, %v2222
      %v2283 = vadd.f32 %v2093, %v2225
      %v2284 = vadd.f32 %v2094, %v2227
      %v2285 = vadd.f32 %v2095, %v2230
      %v2286 = vadd.f32 %v2096, %v2232
      %v2287 = vadd.f32 %v2097, %v2235
      %v2288 = vadd.f32 %v2098, %v2237
      %v2289 = vadd.f32 %v2099, %v2240
      %v2290 = vadd.f32 %v2100, %v2242
      %v2291 = vadd.f32 %v2101, %v2245
      %v2292 = vadd.f32 %v2102, %v2247
      %v2293 = vadd.f32 %v2103, %v2250
      %v2294 = vadd.f32 %v2104, %v2252
      %v2295 = vadd.f32 %v2105, %v2255
      %v2296 = vadd.f32 %v2106, %v2257
      %v2297 = vadd.f32 %v2107, %v2260
      %v2298 = vadd.f32 %v2108, %v2262
      %v2299 = vadd.f32 %v2109, %v2265
      %v2300 = vadd.f32 %v2110, %v2267
      %2301 = vst.msk [vmem:[#allocation3] sm:$0xff] %vm510, %v2269
      %2302 = vst.msk [vmem:[#allocation3 + $0x8] sm:$0xff] %vm510, %v2270
      %2303 = vst.msk [vmem:[#allocation3 + $0x10] sm:$0xff] %vm510, %v2271
      %2304 = vst.msk [vmem:[#allocation3 + $0x18] sm:$0xff] %vm510, %v2272
      %2305 = vst.msk [vmem:[#allocation3 + $0x20] sm:$0xff] %vm510, %v2273
      %2306 = vst.msk [vmem:[#allocation3 + $0x28] sm:$0xff] %vm510, %v2274
      %2307 = vst.msk [vmem:[#allocation3 + $0x30] sm:$0xff] %vm510, %v2275
      %2308 = vst.msk [vmem:[#allocation3 + $0x38] sm:$0xff] %vm510, %v2276
      %2309 = vst.msk [vmem:[#allocation3 + $0x40] sm:$0xff] %vm510, %v2277
      %2310 = vst.msk [vmem:[#allocation3 + $0x48] sm:$0xff] %vm510, %v2278
      %2311 = vst.msk [vmem:[#allocation3 + $0x50] sm:$0xff] %vm510, %v2279
      %2312 = vst.msk [vmem:[#allocation3 + $0x58] sm:$0xff] %vm510, %v2280
      %2313 = vst.msk [vmem:[#allocation3 + $0x60] sm:$0xff] %vm510, %v2281
      %2314 = vst.msk [vmem:[#allocation3 + $0x68] sm:$0xff] %vm510, %v2282
      %2315 = vst.msk [vmem:[#allocation3 + $0x70] sm:$0xff] %vm510, %v2283
      %2316 = vst.msk [vmem:[#allocation3 + $0x78] sm:$0xff] %vm510, %v2284
      %2317 = vst.msk [vmem:[#allocation3 + $0x80] sm:$0xff] %vm510, %v2285
      %2318 = vst.msk [vmem:[#allocation3 + $0x88] sm:$0xff] %vm510, %v2286
      %2319 = vst.msk [vmem:[#allocation3 + $0x90] sm:$0xff] %vm510, %v2287
      %2320 = vst.msk [vmem:[#allocation3 + $0x98] sm:$0xff] %vm510, %v2288
      %2321 = vst.msk [vmem:[#allocation3 + $0xa0] sm:$0xff] %vm510, %v2289
      %2322 = vst.msk [vmem:[#allocation3 + $0xa8] sm:$0xff] %vm510, %v2290
      %2323 = vst.msk [vmem:[#allocation3 + $0xb0] sm:$0xff] %vm510, %v2291
      %2324 = vst.msk [vmem:[#allocation3 + $0xb8] sm:$0xff] %vm510, %v2292
      %2325 = vst.msk [vmem:[#allocation3 + $0xc0] sm:$0xff] %vm510, %v2293
      %2326 = vst.msk [vmem:[#allocation3 + $0xc8] sm:$0xff] %vm510, %v2294
      %2327 = vst.msk [vmem:[#allocation3 + $0xd0] sm:$0xff] %vm510, %v2295
      %2328 = vst.msk [vmem:[#allocation3 + $0xd8] sm:$0xff] %vm510, %v2296
      %2329 = vst.msk [vmem:[#allocation3 + $0xe0] sm:$0xff] %vm510, %v2297
      %2330 = vst.msk [vmem:[#allocation3 + $0xe8] sm:$0xff] %vm510, %v2298
      %2331 = vst.msk [vmem:[#allocation3 + $0xf0] sm:$0xff] %vm510, %v2299
      %2332 = vst.msk [vmem:[#allocation3 + $0xf8] sm:$0xff] %vm510, %v2300
      %s2333 = scalar_lea.vmem [#allocation2], 64
      %v2334 = vld [vmem:[%s2333 + $0x7] sm:$0xff]
      %v2335 = vld [vmem:[%s2333 + $0xf] sm:$0xff]
      %v2336 = vld [vmem:[%s2333 + $0x27] sm:$0xff]
      %v2337 = vld [vmem:[%s2333 + $0x2f] sm:$0xff]
      %v2338 = vld [vmem:[%s2333 + $0x47] sm:$0xff]
      %v2339 = vld [vmem:[%s2333 + $0x4f] sm:$0xff]
      %v2340 = vld [vmem:[%s2333 + $0x67] sm:$0xff]
      %v2341 = vld [vmem:[%s2333 + $0x6f] sm:$0xff]
      %v2342 = vld [vmem:[%s2333 + $0x87] sm:$0xff]
      %v2343 = vld [vmem:[%s2333 + $0x8f] sm:$0xff]
      %v2344 = vld [vmem:[%s2333 + $0xa7] sm:$0xff]
      %v2345 = vld [vmem:[%s2333 + $0xaf] sm:$0xff]
      %v2346 = vld [vmem:[%s2333 + $0xc7] sm:$0xff]
      %v2347 = vld [vmem:[%s2333 + $0xcf] sm:$0xff]
      %v2348 = vld [vmem:[%s2333 + $0xe7] sm:$0xff]
      %v2349 = vld [vmem:[%s2333 + $0xef] sm:$0xff]
      %v2350 = vld [vmem:[%s2333 + $0x107] sm:$0xff]
      %v2351 = vld [vmem:[%s2333 + $0x10f] sm:$0xff]
      %v2352 = vld [vmem:[%s2333 + $0x127] sm:$0xff]
      %v2353 = vld [vmem:[%s2333 + $0x12f] sm:$0xff]
      %v2354 = vld [vmem:[%s2333 + $0x147] sm:$0xff]
      %v2355 = vld [vmem:[%s2333 + $0x14f] sm:$0xff]
      %v2356 = vld [vmem:[%s2333 + $0x167] sm:$0xff]
      %v2357 = vld [vmem:[%s2333 + $0x16f] sm:$0xff]
      %v2358 = vld [vmem:[%s2333 + $0x187] sm:$0xff]
      %v2359 = vld [vmem:[%s2333 + $0x18f] sm:$0xff]
      %v2360 = vld [vmem:[%s2333 + $0x1a7] sm:$0xff]
      %v2361 = vld [vmem:[%s2333 + $0x1af] sm:$0xff]
      %v2362 = vld [vmem:[%s2333 + $0x1c7] sm:$0xff]
      %v2363 = vld [vmem:[%s2333 + $0x1cf] sm:$0xff]
      %v2364 = vld [vmem:[%s2333 + $0x1e7] sm:$0xff]
      %v2365 = vld [vmem:[%s2333 + $0x1ef] sm:$0xff]
      %v2366 = vld [vmem:[#allocation3] sm:$0xff]
      %v2367 = vld [vmem:[#allocation3 + $0x8] sm:$0xff]
      %v2368 = vld [vmem:[#allocation3 + $0x10] sm:$0xff]
      %v2369 = vld [vmem:[#allocation3 + $0x18] sm:$0xff]
      %v2370 = vld [vmem:[#allocation3 + $0x20] sm:$0xff]
      %v2371 = vld [vmem:[#allocation3 + $0x28] sm:$0xff]
      %v2372 = vld [vmem:[#allocation3 + $0x30] sm:$0xff]
      %v2373 = vld [vmem:[#allocation3 + $0x38] sm:$0xff]
      %v2374 = vld [vmem:[#allocation3 + $0x40] sm:$0xff]
      %v2375 = vld [vmem:[#allocation3 + $0x48] sm:$0xff]
      %v2376 = vld [vmem:[#allocation3 + $0x50] sm:$0xff]
      %v2377 = vld [vmem:[#allocation3 + $0x58] sm:$0xff]
      %v2378 = vld [vmem:[#allocation3 + $0x60] sm:$0xff]
      %v2379 = vld [vmem:[#allocation3 + $0x68] sm:$0xff]
      %v2380 = vld [vmem:[#allocation3 + $0x70] sm:$0xff]
      %v2381 = vld [vmem:[#allocation3 + $0x78] sm:$0xff]
      %v2382 = vld [vmem:[#allocation3 + $0x80] sm:$0xff]
      %v2383 = vld [vmem:[#allocation3 + $0x88] sm:$0xff]
      %v2384 = vld [vmem:[#allocation3 + $0x90] sm:$0xff]
      %v2385 = vld [vmem:[#allocation3 + $0x98] sm:$0xff]
      %v2386 = vld [vmem:[#allocation3 + $0xa0] sm:$0xff]
      %v2387 = vld [vmem:[#allocation3 + $0xa8] sm:$0xff]
      %v2388 = vld [vmem:[#allocation3 + $0xb0] sm:$0xff]
      %v2389 = vld [vmem:[#allocation3 + $0xb8] sm:$0xff]
      %v2390 = vld [vmem:[#allocation3 + $0xc0] sm:$0xff]
      %v2391 = vld [vmem:[#allocation3 + $0xc8] sm:$0xff]
      %v2392 = vld [vmem:[#allocation3 + $0xd0] sm:$0xff]
      %v2393 = vld [vmem:[#allocation3 + $0xd8] sm:$0xff]
      %v2394 = vld [vmem:[#allocation3 + $0xe0] sm:$0xff]
      %v2395 = vld [vmem:[#allocation3 + $0xe8] sm:$0xff]
      %v2396 = vld [vmem:[#allocation3 + $0xf0] sm:$0xff]
      %v2397 = vld [vmem:[#allocation3 + $0xf8] sm:$0xff]
      %v2398 = vpack.c.bf16 %v2335, %v2334
      %v2399 = vpack.c.bf16 %v2337, %v2336
      %v2400 = vpack.c.bf16 %v2339, %v2338
      %v2401 = vpack.c.bf16 %v2341, %v2340
      %v2402 = vpack.c.bf16 %v2343, %v2342
      %v2403 = vpack.c.bf16 %v2345, %v2344
      %v2404 = vpack.c.bf16 %v2347, %v2346
      %v2405 = vpack.c.bf16 %v2349, %v2348
      %v2406 = vpack.c.bf16 %v2351, %v2350
      %v2407 = vpack.c.bf16 %v2353, %v2352
      %v2408 = vpack.c.bf16 %v2355, %v2354
      %v2409 = vpack.c.bf16 %v2357, %v2356
      %v2410 = vpack.c.bf16 %v2359, %v2358
      %v2411 = vpack.c.bf16 %v2361, %v2360
      %v2412 = vpack.c.bf16 %v2363, %v2362
      %v2413 = vpack.c.bf16 %v2365, %v2364
      %s2414 = scalar_lea.vmem %s3, 12
      %v2415 = vld [vmem:[%s2414] sm:$0x3]
      %v2417 = vsel %vm510, %v2398, 0
      %v2420 = vsel %vm510, %v2399, 0
      %v2423 = vsel %vm510, %v2400, 0
      %v2426 = vsel %vm510, %v2401, 0
      %v2429 = vsel %vm510, %v2402, 0
      %v2432 = vsel %vm510, %v2403, 0
      %v2435 = vsel %vm510, %v2404, 0
      %v2438 = vsel %vm510, %v2405, 0
      %v2441 = vsel %vm510, %v2406, 0
      %v2444 = vsel %vm510, %v2407, 0
      %v2447 = vsel %vm510, %v2408, 0
      %v2450 = vsel %vm510, %v2409, 0
      %v2453 = vsel %vm510, %v2410, 0
      %v2456 = vsel %vm510, %v2411, 0
      %v2459 = vsel %vm510, %v2412, 0
      %v2462 = vsel %vm510, %v2413, 0
      %v2465 = vsel %vm746, %v2415, 0
      %2467 = vmatpush.bf16.msra.mxu0 0
      %2468 = vmatpush.bf16.msra.mxu0 0
      %2469 = vmatpush.bf16.msra.mxu0 0
      %2470 = vmatpush.bf16.msra.mxu0 0
      %2471 = vmatpush.bf16.msra.mxu0 0
      %2472 = vmatpush.bf16.msra.mxu0 0
      %2473 = vmatpush.bf16.msra.mxu0 0
      %2474 = vmatpush.bf16.msra.mxu0 %v2465
      %2475 = vmatmul.bf16.gmra.mxu0 %v2417
      %v2476 = vpop.f32.mrf.mxu0
      %v2477 = vadd.f32 0.0, %v2476
      %v2478 = vpop.f32.mrf.mxu0
      %v2479 = vadd.f32 0.0, %v2478
      %2480 = vmatmul.bf16.gmra.mxu0 %v2420
      %v2481 = vpop.f32.mrf.mxu0
      %v2482 = vadd.f32 0.0, %v2481
      %v2483 = vpop.f32.mrf.mxu0
      %v2484 = vadd.f32 0.0, %v2483
      %2485 = vmatmul.bf16.gmra.mxu0 %v2423
      %v2486 = vpop.f32.mrf.mxu0
      %v2487 = vadd.f32 0.0, %v2486
      %v2488 = vpop.f32.mrf.mxu0
      %v2489 = vadd.f32 0.0, %v2488
      %2490 = vmatmul.bf16.gmra.mxu0 %v2426
      %v2491 = vpop.f32.mrf.mxu0
      %v2492 = vadd.f32 0.0, %v2491
      %v2493 = vpop.f32.mrf.mxu0
      %v2494 = vadd.f32 0.0, %v2493
      %2495 = vmatmul.bf16.gmra.mxu0 %v2429
      %v2496 = vpop.f32.mrf.mxu0
      %v2497 = vadd.f32 0.0, %v2496
      %v2498 = vpop.f32.mrf.mxu0
      %v2499 = vadd.f32 0.0, %v2498
      %2500 = vmatmul.bf16.gmra.mxu0 %v2432
      %v2501 = vpop.f32.mrf.mxu0
      %v2502 = vadd.f32 0.0, %v2501
      %v2503 = vpop.f32.mrf.mxu0
      %v2504 = vadd.f32 0.0, %v2503
      %2505 = vmatmul.bf16.gmra.mxu0 %v2435
      %v2506 = vpop.f32.mrf.mxu0
      %v2507 = vadd.f32 0.0, %v2506
      %v2508 = vpop.f32.mrf.mxu0
      %v2509 = vadd.f32 0.0, %v2508
      %2510 = vmatmul.bf16.gmra.mxu0 %v2438
      %v2511 = vpop.f32.mrf.mxu0
      %v2512 = vadd.f32 0.0, %v2511
      %v2513 = vpop.f32.mrf.mxu0
      %v2514 = vadd.f32 0.0, %v2513
      %2515 = vmatmul.bf16.gmra.mxu0 %v2441
      %v2516 = vpop.f32.mrf.mxu0
      %v2517 = vadd.f32 0.0, %v2516
      %v2518 = vpop.f32.mrf.mxu0
      %v2519 = vadd.f32 0.0, %v2518
      %2520 = vmatmul.bf16.gmra.mxu0 %v2444
      %v2521 = vpop.f32.mrf.mxu0
      %v2522 = vadd.f32 0.0, %v2521
      %v2523 = vpop.f32.mrf.mxu0
      %v2524 = vadd.f32 0.0, %v2523
      %2525 = vmatmul.bf16.gmra.mxu0 %v2447
      %v2526 = vpop.f32.mrf.mxu0
      %v2527 = vadd.f32 0.0, %v2526
      %v2528 = vpop.f32.mrf.mxu0
      %v2529 = vadd.f32 0.0, %v2528
      %2530 = vmatmul.bf16.gmra.mxu0 %v2450
      %v2531 = vpop.f32.mrf.mxu0
      %v2532 = vadd.f32 0.0, %v2531
      %v2533 = vpop.f32.mrf.mxu0
      %v2534 = vadd.f32 0.0, %v2533
      %2535 = vmatmul.bf16.gmra.mxu0 %v2453
      %v2536 = vpop.f32.mrf.mxu0
      %v2537 = vadd.f32 0.0, %v2536
      %v2538 = vpop.f32.mrf.mxu0
      %v2539 = vadd.f32 0.0, %v2538
      %2540 = vmatmul.bf16.gmra.mxu0 %v2456
      %v2541 = vpop.f32.mrf.mxu0
      %v2542 = vadd.f32 0.0, %v2541
      %v2543 = vpop.f32.mrf.mxu0
      %v2544 = vadd.f32 0.0, %v2543
      %2545 = vmatmul.bf16.gmra.mxu0 %v2459
      %v2546 = vpop.f32.mrf.mxu0
      %v2547 = vadd.f32 0.0, %v2546
      %v2548 = vpop.f32.mrf.mxu0
      %v2549 = vadd.f32 0.0, %v2548
      %2550 = vmatmul.bf16.gmra.mxu0 %v2462
      %v2551 = vpop.f32.mrf.mxu0
      %v2552 = vadd.f32 0.0, %v2551
      %v2553 = vpop.f32.mrf.mxu0
      %v2554 = vadd.f32 0.0, %v2553
      %2555 = vdwg.mxu0
      %v2556 = vadd.f32 %v2366, %v2477
      %v2557 = vadd.f32 %v2367, %v2479
      %v2558 = vadd.f32 %v2368, %v2482
      %v2559 = vadd.f32 %v2369, %v2484
      %v2560 = vadd.f32 %v2370, %v2487
      %v2561 = vadd.f32 %v2371, %v2489
      %v2562 = vadd.f32 %v2372, %v2492
      %v2563 = vadd.f32 %v2373, %v2494
      %v2564 = vadd.f32 %v2374, %v2497
      %v2565 = vadd.f32 %v2375, %v2499
      %v2566 = vadd.f32 %v2376, %v2502
      %v2567 = vadd.f32 %v2377, %v2504
      %v2568 = vadd.f32 %v2378, %v2507
      %v2569 = vadd.f32 %v2379, %v2509
      %v2570 = vadd.f32 %v2380, %v2512
      %v2571 = vadd.f32 %v2381, %v2514
      %v2572 = vadd.f32 %v2382, %v2517
      %v2573 = vadd.f32 %v2383, %v2519
      %v2574 = vadd.f32 %v2384, %v2522
      %v2575 = vadd.f32 %v2385, %v2524
      %v2576 = vadd.f32 %v2386, %v2527
      %v2577 = vadd.f32 %v2387, %v2529
      %v2578 = vadd.f32 %v2388, %v2532
      %v2579 = vadd.f32 %v2389, %v2534
      %v2580 = vadd.f32 %v2390, %v2537
      %v2581 = vadd.f32 %v2391, %v2539
      %v2582 = vadd.f32 %v2392, %v2542
      %v2583 = vadd.f32 %v2393, %v2544
      %v2584 = vadd.f32 %v2394, %v2547
      %v2585 = vadd.f32 %v2395, %v2549
      %v2586 = vadd.f32 %v2396, %v2552
      %v2587 = vadd.f32 %v2397, %v2554
      %2588 = vst.msk [vmem:[#allocation3] sm:$0xff] %vm510, %v2556
      %2589 = vst.msk [vmem:[#allocation3 + $0x8] sm:$0xff] %vm510, %v2557
      %2590 = vst.msk [vmem:[#allocation3 + $0x10] sm:$0xff] %vm510, %v2558
      %2591 = vst.msk [vmem:[#allocation3 + $0x18] sm:$0xff] %vm510, %v2559
      %2592 = vst.msk [vmem:[#allocation3 + $0x20] sm:$0xff] %vm510, %v2560
      %2593 = vst.msk [vmem:[#allocation3 + $0x28] sm:$0xff] %vm510, %v2561
      %2594 = vst.msk [vmem:[#allocation3 + $0x30] sm:$0xff] %vm510, %v2562
      %2595 = vst.msk [vmem:[#allocation3 + $0x38] sm:$0xff] %vm510, %v2563
      %2596 = vst.msk [vmem:[#allocation3 + $0x40] sm:$0xff] %vm510, %v2564
      %2597 = vst.msk [vmem:[#allocation3 + $0x48] sm:$0xff] %vm510, %v2565
      %2598 = vst.msk [vmem:[#allocation3 + $0x50] sm:$0xff] %vm510, %v2566
      %2599 = vst.msk [vmem:[#allocation3 + $0x58] sm:$0xff] %vm510, %v2567
      %2600 = vst.msk [vmem:[#allocation3 + $0x60] sm:$0xff] %vm510, %v2568
      %2601 = vst.msk [vmem:[#allocation3 + $0x68] sm:$0xff] %vm510, %v2569
      %2602 = vst.msk [vmem:[#allocation3 + $0x70] sm:$0xff] %vm510, %v2570
      %2603 = vst.msk [vmem:[#allocation3 + $0x78] sm:$0xff] %vm510, %v2571
      %2604 = vst.msk [vmem:[#allocation3 + $0x80] sm:$0xff] %vm510, %v2572
      %2605 = vst.msk [vmem:[#allocation3 + $0x88] sm:$0xff] %vm510, %v2573
      %2606 = vst.msk [vmem:[#allocation3 + $0x90] sm:$0xff] %vm510, %v2574
      %2607 = vst.msk [vmem:[#allocation3 + $0x98] sm:$0xff] %vm510, %v2575
      %2608 = vst.msk [vmem:[#allocation3 + $0xa0] sm:$0xff] %vm510, %v2576
      %2609 = vst.msk [vmem:[#allocation3 + $0xa8] sm:$0xff] %vm510, %v2577
      %2610 = vst.msk [vmem:[#allocation3 + $0xb0] sm:$0xff] %vm510, %v2578
      %2611 = vst.msk [vmem:[#allocation3 + $0xb8] sm:$0xff] %vm510, %v2579
      %2612 = vst.msk [vmem:[#allocation3 + $0xc0] sm:$0xff] %vm510, %v2580
      %2613 = vst.msk [vmem:[#allocation3 + $0xc8] sm:$0xff] %vm510, %v2581
      %2614 = vst.msk [vmem:[#allocation3 + $0xd0] sm:$0xff] %vm510, %v2582
      %2615 = vst.msk [vmem:[#allocation3 + $0xd8] sm:$0xff] %vm510, %v2583
      %2616 = vst.msk [vmem:[#allocation3 + $0xe0] sm:$0xff] %vm510, %v2584
      %2617 = vst.msk [vmem:[#allocation3 + $0xe8] sm:$0xff] %vm510, %v2585
      %2618 = vst.msk [vmem:[#allocation3 + $0xf0] sm:$0xff] %vm510, %v2586
      %2619 = vst.msk [vmem:[#allocation3 + $0xf8] sm:$0xff] %vm510, %v2587
      %v2620 = vld [vmem:[%s2333 + $0x8] sm:$0xff]
      %v2621 = vld [vmem:[%s2333 + $0x10] sm:$0xff]
      %v2622 = vld [vmem:[%s2333 + $0x28] sm:$0xff]
      %v2623 = vld [vmem:[%s2333 + $0x30] sm:$0xff]
      %v2624 = vld [vmem:[%s2333 + $0x48] sm:$0xff]
      %v2625 = vld [vmem:[%s2333 + $0x50] sm:$0xff]
      %v2626 = vld [vmem:[%s2333 + $0x68] sm:$0xff]
      %v2627 = vld [vmem:[%s2333 + $0x70] sm:$0xff]
      %v2628 = vld [vmem:[%s2333 + $0x88] sm:$0xff]
      %v2629 = vld [vmem:[%s2333 + $0x90] sm:$0xff]
      %v2630 = vld [vmem:[%s2333 + $0xa8] sm:$0xff]
      %v2631 = vld [vmem:[%s2333 + $0xb0] sm:$0xff]
      %v2632 = vld [vmem:[%s2333 + $0xc8] sm:$0xff]
      %v2633 = vld [vmem:[%s2333 + $0xd0] sm:$0xff]
      %v2634 = vld [vmem:[%s2333 + $0xe8] sm:$0xff]
      %v2635 = vld [vmem:[%s2333 + $0xf0] sm:$0xff]
      %v2636 = vld [vmem:[%s2333 + $0x108] sm:$0xff]
      %v2637 = vld [vmem:[%s2333 + $0x110] sm:$0xff]
      %v2638 = vld [vmem:[%s2333 + $0x128] sm:$0xff]
      %v2639 = vld [vmem:[%s2333 + $0x130] sm:$0xff]
      %v2640 = vld [vmem:[%s2333 + $0x148] sm:$0xff]
      %v2641 = vld [vmem:[%s2333 + $0x150] sm:$0xff]
      %v2642 = vld [vmem:[%s2333 + $0x168] sm:$0xff]
      %v2643 = vld [vmem:[%s2333 + $0x170] sm:$0xff]
      %v2644 = vld [vmem:[%s2333 + $0x188] sm:$0xff]
      %v2645 = vld [vmem:[%s2333 + $0x190] sm:$0xff]
      %v2646 = vld [vmem:[%s2333 + $0x1a8] sm:$0xff]
      %v2647 = vld [vmem:[%s2333 + $0x1b0] sm:$0xff]
      %v2648 = vld [vmem:[%s2333 + $0x1c8] sm:$0xff]
      %v2649 = vld [vmem:[%s2333 + $0x1d0] sm:$0xff]
      %v2650 = vld [vmem:[%s2333 + $0x1e8] sm:$0xff]
      %v2651 = vld [vmem:[%s2333 + $0x1f0] sm:$0xff]
      %v2652 = vld [vmem:[#allocation3] sm:$0xff]
      %v2653 = vld [vmem:[#allocation3 + $0x8] sm:$0xff]
      %v2654 = vld [vmem:[#allocation3 + $0x10] sm:$0xff]
      %v2655 = vld [vmem:[#allocation3 + $0x18] sm:$0xff]
      %v2656 = vld [vmem:[#allocation3 + $0x20] sm:$0xff]
      %v2657 = vld [vmem:[#allocation3 + $0x28] sm:$0xff]
      %v2658 = vld [vmem:[#allocation3 + $0x30] sm:$0xff]
      %v2659 = vld [vmem:[#allocation3 + $0x38] sm:$0xff]
      %v2660 = vld [vmem:[#allocation3 + $0x40] sm:$0xff]
      %v2661 = vld [vmem:[#allocation3 + $0x48] sm:$0xff]
      %v2662 = vld [vmem:[#allocation3 + $0x50] sm:$0xff]
      %v2663 = vld [vmem:[#allocation3 + $0x58] sm:$0xff]
      %v2664 = vld [vmem:[#allocation3 + $0x60] sm:$0xff]
      %v2665 = vld [vmem:[#allocation3 + $0x68] sm:$0xff]
      %v2666 = vld [vmem:[#allocation3 + $0x70] sm:$0xff]
      %v2667 = vld [vmem:[#allocation3 + $0x78] sm:$0xff]
      %v2668 = vld [vmem:[#allocation3 + $0x80] sm:$0xff]
      %v2669 = vld [vmem:[#allocation3 + $0x88] sm:$0xff]
      %v2670 = vld [vmem:[#allocation3 + $0x90] sm:$0xff]
      %v2671 = vld [vmem:[#allocation3 + $0x98] sm:$0xff]
      %v2672 = vld [vmem:[#allocation3 + $0xa0] sm:$0xff]
      %v2673 = vld [vmem:[#allocation3 + $0xa8] sm:$0xff]
      %v2674 = vld [vmem:[#allocation3 + $0xb0] sm:$0xff]
      %v2675 = vld [vmem:[#allocation3 + $0xb8] sm:$0xff]
      %v2676 = vld [vmem:[#allocation3 + $0xc0] sm:$0xff]
      %v2677 = vld [vmem:[#allocation3 + $0xc8] sm:$0xff]
      %v2678 = vld [vmem:[#allocation3 + $0xd0] sm:$0xff]
      %v2679 = vld [vmem:[#allocation3 + $0xd8] sm:$0xff]
      %v2680 = vld [vmem:[#allocation3 + $0xe0] sm:$0xff]
      %v2681 = vld [vmem:[#allocation3 + $0xe8] sm:$0xff]
      %v2682 = vld [vmem:[#allocation3 + $0xf0] sm:$0xff]
      %v2683 = vld [vmem:[#allocation3 + $0xf8] sm:$0xff]
      %v2684 = vpack.c.bf16 %v2621, %v2620
      %v2685 = vpack.c.bf16 %v2623, %v2622
      %v2686 = vpack.c.bf16 %v2625, %v2624
      %v2687 = vpack.c.bf16 %v2627, %v2626
      %v2688 = vpack.c.bf16 %v2629, %v2628
      %v2689 = vpack.c.bf16 %v2631, %v2630
      %v2690 = vpack.c.bf16 %v2633, %v2632
      %v2691 = vpack.c.bf16 %v2635, %v2634
      %v2692 = vpack.c.bf16 %v2637, %v2636
      %v2693 = vpack.c.bf16 %v2639, %v2638
      %v2694 = vpack.c.bf16 %v2641, %v2640
      %v2695 = vpack.c.bf16 %v2643, %v2642
      %v2696 = vpack.c.bf16 %v2645, %v2644
      %v2697 = vpack.c.bf16 %v2647, %v2646
      %v2698 = vpack.c.bf16 %v2649, %v2648
      %v2699 = vpack.c.bf16 %v2651, %v2650
      %s2700 = scalar_lea.vmem %s3, 14
      %v2701 = vld [vmem:[%s2700] sm:$0x3]
      %v2703 = vsel %vm510, %v2684, 0
      %v2706 = vsel %vm510, %v2685, 0
      %v2709 = vsel %vm510, %v2686, 0
      %v2712 = vsel %vm510, %v2687, 0
      %v2715 = vsel %vm510, %v2688, 0
      %v2718 = vsel %vm510, %v2689, 0
      %v2721 = vsel %vm510, %v2690, 0
      %v2724 = vsel %vm510, %v2691, 0
      %v2727 = vsel %vm510, %v2692, 0
      %v2730 = vsel %vm510, %v2693, 0
      %v2733 = vsel %vm510, %v2694, 0
      %v2736 = vsel %vm510, %v2695, 0
      %v2739 = vsel %vm510, %v2696, 0
      %v2742 = vsel %vm510, %v2697, 0
      %v2745 = vsel %vm510, %v2698, 0
      %v2748 = vsel %vm510, %v2699, 0
      %v2751 = vsel %vm746, %v2701, 0
      %2753 = vmatpush.bf16.msra.mxu0 0
      %2754 = vmatpush.bf16.msra.mxu0 0
      %2755 = vmatpush.bf16.msra.mxu0 0
      %2756 = vmatpush.bf16.msra.mxu0 0
      %2757 = vmatpush.bf16.msra.mxu0 0
      %2758 = vmatpush.bf16.msra.mxu0 0
      %2759 = vmatpush.bf16.msra.mxu0 0
      %2760 = vmatpush.bf16.msra.mxu0 %v2751
      %2761 = vmatmul.bf16.gmra.mxu0 %v2703
      %v2762 = vpop.f32.mrf.mxu0
      %v2763 = vadd.f32 0.0, %v2762
      %v2764 = vpop.f32.mrf.mxu0
      %v2765 = vadd.f32 0.0, %v2764
      %2766 = vmatmul.bf16.gmra.mxu0 %v2706
      %v2767 = vpop.f32.mrf.mxu0
      %v2768 = vadd.f32 0.0, %v2767
      %v2769 = vpop.f32.mrf.mxu0
      %v2770 = vadd.f32 0.0, %v2769
      %2771 = vmatmul.bf16.gmra.mxu0 %v2709
      %v2772 = vpop.f32.mrf.mxu0
      %v2773 = vadd.f32 0.0, %v2772
      %v2774 = vpop.f32.mrf.mxu0
      %v2775 = vadd.f32 0.0, %v2774
      %2776 = vmatmul.bf16.gmra.mxu0 %v2712
      %v2777 = vpop.f32.mrf.mxu0
      %v2778 = vadd.f32 0.0, %v2777
      %v2779 = vpop.f32.mrf.mxu0
      %v2780 = vadd.f32 0.0, %v2779
      %2781 = vmatmul.bf16.gmra.mxu0 %v2715
      %v2782 = vpop.f32.mrf.mxu0
      %v2783 = vadd.f32 0.0, %v2782
      %v2784 = vpop.f32.mrf.mxu0
      %v2785 = vadd.f32 0.0, %v2784
      %2786 = vmatmul.bf16.gmra.mxu0 %v2718
      %v2787 = vpop.f32.mrf.mxu0
      %v2788 = vadd.f32 0.0, %v2787
      %v2789 = vpop.f32.mrf.mxu0
      %v2790 = vadd.f32 0.0, %v2789
      %2791 = vmatmul.bf16.gmra.mxu0 %v2721
      %v2792 = vpop.f32.mrf.mxu0
      %v2793 = vadd.f32 0.0, %v2792
      %v2794 = vpop.f32.mrf.mxu0
      %v2795 = vadd.f32 0.0, %v2794
      %2796 = vmatmul.bf16.gmra.mxu0 %v2724
      %v2797 = vpop.f32.mrf.mxu0
      %v2798 = vadd.f32 0.0, %v2797
      %v2799 = vpop.f32.mrf.mxu0
      %v2800 = vadd.f32 0.0, %v2799
      %2801 = vmatmul.bf16.gmra.mxu0 %v2727
      %v2802 = vpop.f32.mrf.mxu0
      %v2803 = vadd.f32 0.0, %v2802
      %v2804 = vpop.f32.mrf.mxu0
      %v2805 = vadd.f32 0.0, %v2804
      %2806 = vmatmul.bf16.gmra.mxu0 %v2730
      %v2807 = vpop.f32.mrf.mxu0
      %v2808 = vadd.f32 0.0, %v2807
      %v2809 = vpop.f32.mrf.mxu0
      %v2810 = vadd.f32 0.0, %v2809
      %2811 = vmatmul.bf16.gmra.mxu0 %v2733
      %v2812 = vpop.f32.mrf.mxu0
      %v2813 = vadd.f32 0.0, %v2812
      %v2814 = vpop.f32.mrf.mxu0
      %v2815 = vadd.f32 0.0, %v2814
      %2816 = vmatmul.bf16.gmra.mxu0 %v2736
      %v2817 = vpop.f32.mrf.mxu0
      %v2818 = vadd.f32 0.0, %v2817
      %v2819 = vpop.f32.mrf.mxu0
      %v2820 = vadd.f32 0.0, %v2819
      %2821 = vmatmul.bf16.gmra.mxu0 %v2739
      %v2822 = vpop.f32.mrf.mxu0
      %v2823 = vadd.f32 0.0, %v2822
      %v2824 = vpop.f32.mrf.mxu0
      %v2825 = vadd.f32 0.0, %v2824
      %2826 = vmatmul.bf16.gmra.mxu0 %v2742
      %v2827 = vpop.f32.mrf.mxu0
      %v2828 = vadd.f32 0.0, %v2827
      %v2829 = vpop.f32.mrf.mxu0
      %v2830 = vadd.f32 0.0, %v2829
      %2831 = vmatmul.bf16.gmra.mxu0 %v2745
      %v2832 = vpop.f32.mrf.mxu0
      %v2833 = vadd.f32 0.0, %v2832
      %v2834 = vpop.f32.mrf.mxu0
      %v2835 = vadd.f32 0.0, %v2834
      %2836 = vmatmul.bf16.gmra.mxu0 %v2748
      %v2837 = vpop.f32.mrf.mxu0
      %v2838 = vadd.f32 0.0, %v2837
      %v2839 = vpop.f32.mrf.mxu0
      %v2840 = vadd.f32 0.0, %v2839
      %2841 = vdwg.mxu0
      %v2842 = vadd.f32 %v2652, %v2763
      %v2843 = vadd.f32 %v2653, %v2765
      %v2844 = vadd.f32 %v2654, %v2768
      %v2845 = vadd.f32 %v2655, %v2770
      %v2846 = vadd.f32 %v2656, %v2773
      %v2847 = vadd.f32 %v2657, %v2775
      %v2848 = vadd.f32 %v2658, %v2778
      %v2849 = vadd.f32 %v2659, %v2780
      %v2850 = vadd.f32 %v2660, %v2783
      %v2851 = vadd.f32 %v2661, %v2785
      %v2852 = vadd.f32 %v2662, %v2788
      %v2853 = vadd.f32 %v2663, %v2790
      %v2854 = vadd.f32 %v2664, %v2793
      %v2855 = vadd.f32 %v2665, %v2795
      %v2856 = vadd.f32 %v2666, %v2798
      %v2857 = vadd.f32 %v2667, %v2800
      %v2858 = vadd.f32 %v2668, %v2803
      %v2859 = vadd.f32 %v2669, %v2805
      %v2860 = vadd.f32 %v2670, %v2808
      %v2861 = vadd.f32 %v2671, %v2810
      %v2862 = vadd.f32 %v2672, %v2813
      %v2863 = vadd.f32 %v2673, %v2815
      %v2864 = vadd.f32 %v2674, %v2818
      %v2865 = vadd.f32 %v2675, %v2820
      %v2866 = vadd.f32 %v2676, %v2823
      %v2867 = vadd.f32 %v2677, %v2825
      %v2868 = vadd.f32 %v2678, %v2828
      %v2869 = vadd.f32 %v2679, %v2830
      %v2870 = vadd.f32 %v2680, %v2833
      %v2871 = vadd.f32 %v2681, %v2835
      %v2872 = vadd.f32 %v2682, %v2838
      %v2873 = vadd.f32 %v2683, %v2840
      %2874 = vst.msk [vmem:[#allocation3] sm:$0xff] %vm510, %v2842
      %2875 = vst.msk [vmem:[#allocation3 + $0x8] sm:$0xff] %vm510, %v2843
      %2876 = vst.msk [vmem:[#allocation3 + $0x10] sm:$0xff] %vm510, %v2844
      %2877 = vst.msk [vmem:[#allocation3 + $0x18] sm:$0xff] %vm510, %v2845
      %2878 = vst.msk [vmem:[#allocation3 + $0x20] sm:$0xff] %vm510, %v2846
      %2879 = vst.msk [vmem:[#allocation3 + $0x28] sm:$0xff] %vm510, %v2847
      %2880 = vst.msk [vmem:[#allocation3 + $0x30] sm:$0xff] %vm510, %v2848
      %2881 = vst.msk [vmem:[#allocation3 + $0x38] sm:$0xff] %vm510, %v2849
      %2882 = vst.msk [vmem:[#allocation3 + $0x40] sm:$0xff] %vm510, %v2850
      %2883 = vst.msk [vmem:[#allocation3 + $0x48] sm:$0xff] %vm510, %v2851
      %2884 = vst.msk [vmem:[#allocation3 + $0x50] sm:$0xff] %vm510, %v2852
      %2885 = vst.msk [vmem:[#allocation3 + $0x58] sm:$0xff] %vm510, %v2853
      %2886 = vst.msk [vmem:[#allocation3 + $0x60] sm:$0xff] %vm510, %v2854
      %2887 = vst.msk [vmem:[#allocation3 + $0x68] sm:$0xff] %vm510, %v2855
      %2888 = vst.msk [vmem:[#allocation3 + $0x70] sm:$0xff] %vm510, %v2856
      %2889 = vst.msk [vmem:[#allocation3 + $0x78] sm:$0xff] %vm510, %v2857
      %2890 = vst.msk [vmem:[#allocation3 + $0x80] sm:$0xff] %vm510, %v2858
      %2891 = vst.msk [vmem:[#allocation3 + $0x88] sm:$0xff] %vm510, %v2859
      %2892 = vst.msk [vmem:[#allocation3 + $0x90] sm:$0xff] %vm510, %v2860
      %2893 = vst.msk [vmem:[#allocation3 + $0x98] sm:$0xff] %vm510, %v2861
      %2894 = vst.msk [vmem:[#allocation3 + $0xa0] sm:$0xff] %vm510, %v2862
      %2895 = vst.msk [vmem:[#allocation3 + $0xa8] sm:$0xff] %vm510, %v2863
      %2896 = vst.msk [vmem:[#allocation3 + $0xb0] sm:$0xff] %vm510, %v2864
      %2897 = vst.msk [vmem:[#allocation3 + $0xb8] sm:$0xff] %vm510, %v2865
      %2898 = vst.msk [vmem:[#allocation3 + $0xc0] sm:$0xff] %vm510, %v2866
      %2899 = vst.msk [vmem:[#allocation3 + $0xc8] sm:$0xff] %vm510, %v2867
      %2900 = vst.msk [vmem:[#allocation3 + $0xd0] sm:$0xff] %vm510, %v2868
      %2901 = vst.msk [vmem:[#allocation3 + $0xd8] sm:$0xff] %vm510, %v2869
      %2902 = vst.msk [vmem:[#allocation3 + $0xe0] sm:$0xff] %vm510, %v2870
      %2903 = vst.msk [vmem:[#allocation3 + $0xe8] sm:$0xff] %vm510, %v2871
      %2904 = vst.msk [vmem:[#allocation3 + $0xf0] sm:$0xff] %vm510, %v2872
      %2905 = vst.msk [vmem:[#allocation3 + $0xf8] sm:$0xff] %vm510, %v2873
      %v2906 = vld [vmem:[%s2333 + $0x9] sm:$0xff]
      %v2907 = vld [vmem:[%s2333 + $0x11] sm:$0xff]
      %v2908 = vld [vmem:[%s2333 + $0x29] sm:$0xff]
      %v2909 = vld [vmem:[%s2333 + $0x31] sm:$0xff]
      %v2910 = vld [vmem:[%s2333 + $0x49] sm:$0xff]
      %v2911 = vld [vmem:[%s2333 + $0x51] sm:$0xff]
      %v2912 = vld [vmem:[%s2333 + $0x69] sm:$0xff]
      %v2913 = vld [vmem:[%s2333 + $0x71] sm:$0xff]
      %v2914 = vld [vmem:[%s2333 + $0x89] sm:$0xff]
      %v2915 = vld [vmem:[%s2333 + $0x91] sm:$0xff]
      %v2916 = vld [vmem:[%s2333 + $0xa9] sm:$0xff]
      %v2917 = vld [vmem:[%s2333 + $0xb1] sm:$0xff]
      %v2918 = vld [vmem:[%s2333 + $0xc9] sm:$0xff]
      %v2919 = vld [vmem:[%s2333 + $0xd1] sm:$0xff]
      %v2920 = vld [vmem:[%s2333 + $0xe9] sm:$0xff]
      %v2921 = vld [vmem:[%s2333 + $0xf1] sm:$0xff]
      %v2922 = vld [vmem:[%s2333 + $0x109] sm:$0xff]
      %v2923 = vld [vmem:[%s2333 + $0x111] sm:$0xff]
      %v2924 = vld [vmem:[%s2333 + $0x129] sm:$0xff]
      %v2925 = vld [vmem:[%s2333 + $0x131] sm:$0xff]
      %v2926 = vld [vmem:[%s2333 + $0x149] sm:$0xff]
      %v2927 = vld [vmem:[%s2333 + $0x151] sm:$0xff]
      %v2928 = vld [vmem:[%s2333 + $0x169] sm:$0xff]
      %v2929 = vld [vmem:[%s2333 + $0x171] sm:$0xff]
      %v2930 = vld [vmem:[%s2333 + $0x189] sm:$0xff]
      %v2931 = vld [vmem:[%s2333 + $0x191] sm:$0xff]
      %v2932 = vld [vmem:[%s2333 + $0x1a9] sm:$0xff]
      %v2933 = vld [vmem:[%s2333 + $0x1b1] sm:$0xff]
      %v2934 = vld [vmem:[%s2333 + $0x1c9] sm:$0xff]
      %v2935 = vld [vmem:[%s2333 + $0x1d1] sm:$0xff]
      %v2936 = vld [vmem:[%s2333 + $0x1e9] sm:$0xff]
      %v2937 = vld [vmem:[%s2333 + $0x1f1] sm:$0xff]
      %v2938 = vld [vmem:[#allocation3] sm:$0xff]
      %v2939 = vld [vmem:[#allocation3 + $0x8] sm:$0xff]
      %v2940 = vld [vmem:[#allocation3 + $0x10] sm:$0xff]
      %v2941 = vld [vmem:[#allocation3 + $0x18] sm:$0xff]
      %v2942 = vld [vmem:[#allocation3 + $0x20] sm:$0xff]
      %v2943 = vld [vmem:[#allocation3 + $0x28] sm:$0xff]
      %v2944 = vld [vmem:[#allocation3 + $0x30] sm:$0xff]
      %v2945 = vld [vmem:[#allocation3 + $0x38] sm:$0xff]
      %v2946 = vld [vmem:[#allocation3 + $0x40] sm:$0xff]
      %v2947 = vld [vmem:[#allocation3 + $0x48] sm:$0xff]
      %v2948 = vld [vmem:[#allocation3 + $0x50] sm:$0xff]
      %v2949 = vld [vmem:[#allocation3 + $0x58] sm:$0xff]
      %v2950 = vld [vmem:[#allocation3 + $0x60] sm:$0xff]
      %v2951 = vld [vmem:[#allocation3 + $0x68] sm:$0xff]
      %v2952 = vld [vmem:[#allocation3 + $0x70] sm:$0xff]
      %v2953 = vld [vmem:[#allocation3 + $0x78] sm:$0xff]
      %v2954 = vld [vmem:[#allocation3 + $0x80] sm:$0xff]
      %v2955 = vld [vmem:[#allocation3 + $0x88] sm:$0xff]
      %v2956 = vld [vmem:[#allocation3 + $0x90] sm:$0xff]
      %v2957 = vld [vmem:[#allocation3 + $0x98] sm:$0xff]
      %v2958 = vld [vmem:[#allocation3 + $0xa0] sm:$0xff]
      %v2959 = vld [vmem:[#allocation3 + $0xa8] sm:$0xff]
      %v2960 = vld [vmem:[#allocation3 + $0xb0] sm:$0xff]
      %v2961 = vld [vmem:[#allocation3 + $0xb8] sm:$0xff]
      %v2962 = vld [vmem:[#allocation3 + $0xc0] sm:$0xff]
      %v2963 = vld [vmem:[#allocation3 + $0xc8] sm:$0xff]
      %v2964 = vld [vmem:[#allocation3 + $0xd0] sm:$0xff]
      %v2965 = vld [vmem:[#allocation3 + $0xd8] sm:$0xff]
      %v2966 = vld [vmem:[#allocation3 + $0xe0] sm:$0xff]
      %v2967 = vld [vmem:[#allocation3 + $0xe8] sm:$0xff]
      %v2968 = vld [vmem:[#allocation3 + $0xf0] sm:$0xff]
      %v2969 = vld [vmem:[#allocation3 + $0xf8] sm:$0xff]
      %v2970 = vpack.c.bf16 %v2907, %v2906
      %v2971 = vpack.c.bf16 %v2909, %v2908
      %v2972 = vpack.c.bf16 %v2911, %v2910
      %v2973 = vpack.c.bf16 %v2913, %v2912
      %v2974 = vpack.c.bf16 %v2915, %v2914
      %v2975 = vpack.c.bf16 %v2917, %v2916
      %v2976 = vpack.c.bf16 %v2919, %v2918
      %v2977 = vpack.c.bf16 %v2921, %v2920
      %v2978 = vpack.c.bf16 %v2923, %v2922
      %v2979 = vpack.c.bf16 %v2925, %v2924
      %v2980 = vpack.c.bf16 %v2927, %v2926
      %v2981 = vpack.c.bf16 %v2929, %v2928
      %v2982 = vpack.c.bf16 %v2931, %v2930
      %v2983 = vpack.c.bf16 %v2933, %v2932
      %v2984 = vpack.c.bf16 %v2935, %v2934
      %v2985 = vpack.c.bf16 %v2937, %v2936
      %s2986 = scalar_lea.vmem %s3, 16
      %v2987 = vld [vmem:[%s2986] sm:$0x3]
      %v2989 = vsel %vm510, %v2970, 0
      %v2992 = vsel %vm510, %v2971, 0
      %v2995 = vsel %vm510, %v2972, 0
      %v2998 = vsel %vm510, %v2973, 0
      %v3001 = vsel %vm510, %v2974, 0
      %v3004 = vsel %vm510, %v2975, 0
      %v3007 = vsel %vm510, %v2976, 0
      %v3010 = vsel %vm510, %v2977, 0
      %v3013 = vsel %vm510, %v2978, 0
      %v3016 = vsel %vm510, %v2979, 0
      %v3019 = vsel %vm510, %v2980, 0
      %v3022 = vsel %vm510, %v2981, 0
      %v3025 = vsel %vm510, %v2982, 0
      %v3028 = vsel %vm510, %v2983, 0
      %v3031 = vsel %vm510, %v2984, 0
      %v3034 = vsel %vm510, %v2985, 0
      %v3037 = vsel %vm746, %v2987, 0
      %3039 = vmatpush.bf16.msra.mxu0 0
      %3040 = vmatpush.bf16.msra.mxu0 0
      %3041 = vmatpush.bf16.msra.mxu0 0
      %3042 = vmatpush.bf16.msra.mxu0 0
      %3043 = vmatpush.bf16.msra.mxu0 0
      %3044 = vmatpush.bf16.msra.mxu0 0
      %3045 = vmatpush.bf16.msra.mxu0 0
      %3046 = vmatpush.bf16.msra.mxu0 %v3037
      %3047 = vmatmul.bf16.gmra.mxu0 %v2989
      %v3048 = vpop.f32.mrf.mxu0
      %v3049 = vadd.f32 0.0, %v3048
      %v3050 = vpop.f32.mrf.mxu0
      %v3051 = vadd.f32 0.0, %v3050
      %3052 = vmatmul.bf16.gmra.mxu0 %v2992
      %v3053 = vpop.f32.mrf.mxu0
      %v3054 = vadd.f32 0.0, %v3053
      %v3055 = vpop.f32.mrf.mxu0
      %v3056 = vadd.f32 0.0, %v3055
      %3057 = vmatmul.bf16.gmra.mxu0 %v2995
      %v3058 = vpop.f32.mrf.mxu0
      %v3059 = vadd.f32 0.0, %v3058
      %v3060 = vpop.f32.mrf.mxu0
      %v3061 = vadd.f32 0.0, %v3060
      %3062 = vmatmul.bf16.gmra.mxu0 %v2998
      %v3063 = vpop.f32.mrf.mxu0
      %v3064 = vadd.f32 0.0, %v3063
      %v3065 = vpop.f32.mrf.mxu0
      %v3066 = vadd.f32 0.0, %v3065
      %3067 = vmatmul.bf16.gmra.mxu0 %v3001
      %v3068 = vpop.f32.mrf.mxu0
      %v3069 = vadd.f32 0.0, %v3068
      %v3070 = vpop.f32.mrf.mxu0
      %v3071 = vadd.f32 0.0, %v3070
      %3072 = vmatmul.bf16.gmra.mxu0 %v3004
      %v3073 = vpop.f32.mrf.mxu0
      %v3074 = vadd.f32 0.0, %v3073
      %v3075 = vpop.f32.mrf.mxu0
      %v3076 = vadd.f32 0.0, %v3075
      %3077 = vmatmul.bf16.gmra.mxu0 %v3007
      %v3078 = vpop.f32.mrf.mxu0
      %v3079 = vadd.f32 0.0, %v3078
      %v3080 = vpop.f32.mrf.mxu0
      %v3081 = vadd.f32 0.0, %v3080
      %3082 = vmatmul.bf16.gmra.mxu0 %v3010
      %v3083 = vpop.f32.mrf.mxu0
      %v3084 = vadd.f32 0.0, %v3083
      %v3085 = vpop.f32.mrf.mxu0
      %v3086 = vadd.f32 0.0, %v3085
      %3087 = vmatmul.bf16.gmra.mxu0 %v3013
      %v3088 = vpop.f32.mrf.mxu0
      %v3089 = vadd.f32 0.0, %v3088
      %v3090 = vpop.f32.mrf.mxu0
      %v3091 = vadd.f32 0.0, %v3090
      %3092 = vmatmul.bf16.gmra.mxu0 %v3016
      %v3093 = vpop.f32.mrf.mxu0
      %v3094 = vadd.f32 0.0, %v3093
      %v3095 = vpop.f32.mrf.mxu0
      %v3096 = vadd.f32 0.0, %v3095
      %3097 = vmatmul.bf16.gmra.mxu0 %v3019
      %v3098 = vpop.f32.mrf.mxu0
      %v3099 = vadd.f32 0.0, %v3098
      %v3100 = vpop.f32.mrf.mxu0
      %v3101 = vadd.f32 0.0, %v3100
      %3102 = vmatmul.bf16.gmra.mxu0 %v3022
      %v3103 = vpop.f32.mrf.mxu0
      %v3104 = vadd.f32 0.0, %v3103
      %v3105 = vpop.f32.mrf.mxu0
      %v3106 = vadd.f32 0.0, %v3105
      %3107 = vmatmul.bf16.gmra.mxu0 %v3025
      %v3108 = vpop.f32.mrf.mxu0
      %v3109 = vadd.f32 0.0, %v3108
      %v3110 = vpop.f32.mrf.mxu0
      %v3111 = vadd.f32 0.0, %v3110
      %3112 = vmatmul.bf16.gmra.mxu0 %v3028
      %v3113 = vpop.f32.mrf.mxu0
      %v3114 = vadd.f32 0.0, %v3113
      %v3115 = vpop.f32.mrf.mxu0
      %v3116 = vadd.f32 0.0, %v3115
      %3117 = vmatmul.bf16.gmra.mxu0 %v3031
      %v3118 = vpop.f32.mrf.mxu0
      %v3119 = vadd.f32 0.0, %v3118
      %v3120 = vpop.f32.mrf.mxu0
      %v3121 = vadd.f32 0.0, %v3120
      %3122 = vmatmul.bf16.gmra.mxu0 %v3034
      %v3123 = vpop.f32.mrf.mxu0
      %v3124 = vadd.f32 0.0, %v3123
      %v3125 = vpop.f32.mrf.mxu0
      %v3126 = vadd.f32 0.0, %v3125
      %3127 = vdwg.mxu0
      %v3128 = vadd.f32 %v2938, %v3049
      %v3129 = vadd.f32 %v2939, %v3051
      %v3130 = vadd.f32 %v2940, %v3054
      %v3131 = vadd.f32 %v2941, %v3056
      %v3132 = vadd.f32 %v2942, %v3059
      %v3133 = vadd.f32 %v2943, %v3061
      %v3134 = vadd.f32 %v2944, %v3064
      %v3135 = vadd.f32 %v2945, %v3066
      %v3136 = vadd.f32 %v2946, %v3069
      %v3137 = vadd.f32 %v2947, %v3071
      %v3138 = vadd.f32 %v2948, %v3074
      %v3139 = vadd.f32 %v2949, %v3076
      %v3140 = vadd.f32 %v2950, %v3079
      %v3141 = vadd.f32 %v2951, %v3081
      %v3142 = vadd.f32 %v2952, %v3084
      %v3143 = vadd.f32 %v2953, %v3086
      %v3144 = vadd.f32 %v2954, %v3089
      %v3145 = vadd.f32 %v2955, %v3091
      %v3146 = vadd.f32 %v2956, %v3094
      %v3147 = vadd.f32 %v2957, %v3096
      %v3148 = vadd.f32 %v2958, %v3099
      %v3149 = vadd.f32 %v2959, %v3101
      %v3150 = vadd.f32 %v2960, %v3104
      %v3151 = vadd.f32 %v2961, %v3106
      %v3152 = vadd.f32 %v2962, %v3109
      %v3153 = vadd.f32 %v2963, %v3111
      %v3154 = vadd.f32 %v2964, %v3114
      %v3155 = vadd.f32 %v2965, %v3116
      %v3156 = vadd.f32 %v2966, %v3119
      %v3157 = vadd.f32 %v2967, %v3121
      %v3158 = vadd.f32 %v2968, %v3124
      %v3159 = vadd.f32 %v2969, %v3126
      %3160 = vst.msk [vmem:[#allocation3] sm:$0xff] %vm510, %v3128
      %3161 = vst.msk [vmem:[#allocation3 + $0x8] sm:$0xff] %vm510, %v3129
      %3162 = vst.msk [vmem:[#allocation3 + $0x10] sm:$0xff] %vm510, %v3130
      %3163 = vst.msk [vmem:[#allocation3 + $0x18] sm:$0xff] %vm510, %v3131
      %3164 = vst.msk [vmem:[#allocation3 + $0x20] sm:$0xff] %vm510, %v3132
      %3165 = vst.msk [vmem:[#allocation3 + $0x28] sm:$0xff] %vm510, %v3133
      %3166 = vst.msk [vmem:[#allocation3 + $0x30] sm:$0xff] %vm510, %v3134
      %3167 = vst.msk [vmem:[#allocation3 + $0x38] sm:$0xff] %vm510, %v3135
      %3168 = vst.msk [vmem:[#allocation3 + $0x40] sm:$0xff] %vm510, %v3136
      %3169 = vst.msk [vmem:[#allocation3 + $0x48] sm:$0xff] %vm510, %v3137
      %3170 = vst.msk [vmem:[#allocation3 + $0x50] sm:$0xff] %vm510, %v3138
      %3171 = vst.msk [vmem:[#allocation3 + $0x58] sm:$0xff] %vm510, %v3139
      %3172 = vst.msk [vmem:[#allocation3 + $0x60] sm:$0xff] %vm510, %v3140
      %3173 = vst.msk [vmem:[#allocation3 + $0x68] sm:$0xff] %vm510, %v3141
      %3174 = vst.msk [vmem:[#allocation3 + $0x70] sm:$0xff] %vm510, %v3142
      %3175 = vst.msk [vmem:[#allocation3 + $0x78] sm:$0xff] %vm510, %v3143
      %3176 = vst.msk [vmem:[#allocation3 + $0x80] sm:$0xff] %vm510, %v3144
      %3177 = vst.msk [vmem:[#allocation3 + $0x88] sm:$0xff] %vm510, %v3145
      %3178 = vst.msk [vmem:[#allocation3 + $0x90] sm:$0xff] %vm510, %v3146
      %3179 = vst.msk [vmem:[#allocation3 + $0x98] sm:$0xff] %vm510, %v3147
      %3180 = vst.msk [vmem:[#allocation3 + $0xa0] sm:$0xff] %vm510, %v3148
      %3181 = vst.msk [vmem:[#allocation3 + $0xa8] sm:$0xff] %vm510, %v3149
      %3182 = vst.msk [vmem:[#allocation3 + $0xb0] sm:$0xff] %vm510, %v3150
      %3183 = vst.msk [vmem:[#allocation3 + $0xb8] sm:$0xff] %vm510, %v3151
      %3184 = vst.msk [vmem:[#allocation3 + $0xc0] sm:$0xff] %vm510, %v3152
      %3185 = vst.msk [vmem:[#allocation3 + $0xc8] sm:$0xff] %vm510, %v3153
      %3186 = vst.msk [vmem:[#allocation3 + $0xd0] sm:$0xff] %vm510, %v3154
      %3187 = vst.msk [vmem:[#allocation3 + $0xd8] sm:$0xff] %vm510, %v3155
      %3188 = vst.msk [vmem:[#allocation3 + $0xe0] sm:$0xff] %vm510, %v3156
      %3189 = vst.msk [vmem:[#allocation3 + $0xe8] sm:$0xff] %vm510, %v3157
      %3190 = vst.msk [vmem:[#allocation3 + $0xf0] sm:$0xff] %vm510, %v3158
      %3191 = vst.msk [vmem:[#allocation3 + $0xf8] sm:$0xff] %vm510, %v3159
      %v3192 = vld [vmem:[#allocation3] sm:$0xff]
      %v3193 = vld [vmem:[#allocation3 + $0x8] sm:$0xff]
      %v3194 = vld [vmem:[#allocation3 + $0x10] sm:$0xff]
      %v3195 = vld [vmem:[#allocation3 + $0x18] sm:$0xff]
      %v3196 = vld [vmem:[#allocation3 + $0x20] sm:$0xff]
      %v3197 = vld [vmem:[#allocation3 + $0x28] sm:$0xff]
      %v3198 = vld [vmem:[#allocation3 + $0x30] sm:$0xff]
      %v3199 = vld [vmem:[#allocation3 + $0x38] sm:$0xff]
      %v3200 = vld [vmem:[#allocation3 + $0x40] sm:$0xff]
      %v3201 = vld [vmem:[#allocation3 + $0x48] sm:$0xff]
      %v3202 = vld [vmem:[#allocation3 + $0x50] sm:$0xff]
      %v3203 = vld [vmem:[#allocation3 + $0x58] sm:$0xff]
      %v3204 = vld [vmem:[#allocation3 + $0x60] sm:$0xff]
      %v3205 = vld [vmem:[#allocation3 + $0x68] sm:$0xff]
      %v3206 = vld [vmem:[#allocation3 + $0x70] sm:$0xff]
      %v3207 = vld [vmem:[#allocation3 + $0x78] sm:$0xff]
      %v3208 = vld [vmem:[#allocation3 + $0x80] sm:$0xff]
      %v3209 = vld [vmem:[#allocation3 + $0x88] sm:$0xff]
      %v3210 = vld [vmem:[#allocation3 + $0x90] sm:$0xff]
      %v3211 = vld [vmem:[#allocation3 + $0x98] sm:$0xff]
      %v3212 = vld [vmem:[#allocation3 + $0xa0] sm:$0xff]
      %v3213 = vld [vmem:[#allocation3 + $0xa8] sm:$0xff]
      %v3214 = vld [vmem:[#allocation3 + $0xb0] sm:$0xff]
      %v3215 = vld [vmem:[#allocation3 + $0xb8] sm:$0xff]
      %v3216 = vld [vmem:[#allocation3 + $0xc0] sm:$0xff]
      %v3217 = vld [vmem:[#allocation3 + $0xc8] sm:$0xff]
      %v3218 = vld [vmem:[#allocation3 + $0xd0] sm:$0xff]
      %v3219 = vld [vmem:[#allocation3 + $0xd8] sm:$0xff]
      %v3220 = vld [vmem:[#allocation3 + $0xe0] sm:$0xff]
      %v3221 = vld [vmem:[#allocation3 + $0xe8] sm:$0xff]
      %v3222 = vld [vmem:[#allocation3 + $0xf0] sm:$0xff]
      %v3223 = vld [vmem:[#allocation3 + $0xf8] sm:$0xff]
      %v3224 = vld [vmem:[%s4] sm:$0x1]
      %v3226 = vperm.slane %v3224, 0
      %v3228 = vadd.f32 %v3192, %v3226
      %v3229 = vadd.f32 %v3193, %v3226
      %v3230 = vadd.f32 %v3194, %v3226
      %v3231 = vadd.f32 %v3195, %v3226
      %v3232 = vadd.f32 %v3196, %v3226
      %v3233 = vadd.f32 %v3197, %v3226
      %v3234 = vadd.f32 %v3198, %v3226
      %v3235 = vadd.f32 %v3199, %v3226
      %v3236 = vadd.f32 %v3200, %v3226
      %v3237 = vadd.f32 %v3201, %v3226
      %v3238 = vadd.f32 %v3202, %v3226
      %v3239 = vadd.f32 %v3203, %v3226
      %v3240 = vadd.f32 %v3204, %v3226
      %v3241 = vadd.f32 %v3205, %v3226
      %v3242 = vadd.f32 %v3206, %v3226
      %v3243 = vadd.f32 %v3207, %v3226
      %v3244 = vadd.f32 %v3208, %v3226
      %v3245 = vadd.f32 %v3209, %v3226
      %v3246 = vadd.f32 %v3210, %v3226
      %v3247 = vadd.f32 %v3211, %v3226
      %v3248 = vadd.f32 %v3212, %v3226
      %v3249 = vadd.f32 %v3213, %v3226
      %v3250 = vadd.f32 %v3214, %v3226
      %v3251 = vadd.f32 %v3215, %v3226
      %v3252 = vadd.f32 %v3216, %v3226
      %v3253 = vadd.f32 %v3217, %v3226
      %v3254 = vadd.f32 %v3218, %v3226
      %v3255 = vadd.f32 %v3219, %v3226
      %v3256 = vadd.f32 %v3220, %v3226
      %v3257 = vadd.f32 %v3221, %v3226
      %v3258 = vadd.f32 %v3222, %v3226
      %v3259 = vadd.f32 %v3223, %v3226
      %v3260 = vmax.f32 %v3228, 0.0
      %v3261 = vmax.f32 %v3229, 0.0
      %v3262 = vmax.f32 %v3230, 0.0
      %v3263 = vmax.f32 %v3231, 0.0
      %v3264 = vmax.f32 %v3232, 0.0
      %v3265 = vmax.f32 %v3233, 0.0
      %v3266 = vmax.f32 %v3234, 0.0
      %v3267 = vmax.f32 %v3235, 0.0
      %v3268 = vmax.f32 %v3236, 0.0
      %v3269 = vmax.f32 %v3237, 0.0
      %v3270 = vmax.f32 %v3238, 0.0
      %v3271 = vmax.f32 %v3239, 0.0
      %v3272 = vmax.f32 %v3240, 0.0
      %v3273 = vmax.f32 %v3241, 0.0
      %v3274 = vmax.f32 %v3242, 0.0
      %v3275 = vmax.f32 %v3243, 0.0
      %v3276 = vmax.f32 %v3244, 0.0
      %v3277 = vmax.f32 %v3245, 0.0
      %v3278 = vmax.f32 %v3246, 0.0
      %v3279 = vmax.f32 %v3247, 0.0
      %v3280 = vmax.f32 %v3248, 0.0
      %v3281 = vmax.f32 %v3249, 0.0
      %v3282 = vmax.f32 %v3250, 0.0
      %v3283 = vmax.f32 %v3251, 0.0
      %v3284 = vmax.f32 %v3252, 0.0
      %v3285 = vmax.f32 %v3253, 0.0
      %v3286 = vmax.f32 %v3254, 0.0
      %v3287 = vmax.f32 %v3255, 0.0
      %v3288 = vmax.f32 %v3256, 0.0
      %v3289 = vmax.f32 %v3257, 0.0
      %v3290 = vmax.f32 %v3258, 0.0
      %v3291 = vmax.f32 %v3259, 0.0
      %v3292 = vpack.c.bf16 %v3261, %v3260
      %v3293 = vpack.c.bf16 %v3263, %v3262
      %v3294 = vpack.c.bf16 %v3265, %v3264
      %v3295 = vpack.c.bf16 %v3267, %v3266
      %v3296 = vpack.c.bf16 %v3269, %v3268
      %v3297 = vpack.c.bf16 %v3271, %v3270
      %v3298 = vpack.c.bf16 %v3273, %v3272
      %v3299 = vpack.c.bf16 %v3275, %v3274
      %v3300 = vpack.c.bf16 %v3277, %v3276
      %v3301 = vpack.c.bf16 %v3279, %v3278
      %v3302 = vpack.c.bf16 %v3281, %v3280
      %v3303 = vpack.c.bf16 %v3283, %v3282
      %v3304 = vpack.c.bf16 %v3285, %v3284
      %v3305 = vpack.c.bf16 %v3287, %v3286
      %v3306 = vpack.c.bf16 %v3289, %v3288
      %v3307 = vpack.c.bf16 %v3291, %v3290
      %v3308 = vld [vmem:[%s5] sm:$0x3]
      %v3309 = vld [vmem:[%s6] sm:$0x1]
      %v3311 = vperm.slane %v3309, 0
      %v3314 = vsel %vm510, %v3292, 0
      %v3317 = vsel %vm510, %v3293, 0
      %v3320 = vsel %vm510, %v3294, 0
      %v3323 = vsel %vm510, %v3295, 0
      %v3326 = vsel %vm510, %v3296, 0
      %v3329 = vsel %vm510, %v3297, 0
      %v3332 = vsel %vm510, %v3298, 0
      %v3335 = vsel %vm510, %v3299, 0
      %v3338 = vsel %vm510, %v3300, 0
      %v3341 = vsel %vm510, %v3301, 0
      %v3344 = vsel %vm510, %v3302, 0
      %v3347 = vsel %vm510, %v3303, 0
      %v3350 = vsel %vm510, %v3304, 0
      %v3353 = vsel %vm510, %v3305, 0
      %v3356 = vsel %vm510, %v3306, 0
      %v3359 = vsel %vm510, %v3307, 0
      %v3362 = vsel %vm746, %v3308, 0
      %3364 = vmatpush.bf16.msra.mxu0 0
      %3365 = vmatpush.bf16.msra.mxu0 0
      %3366 = vmatpush.bf16.msra.mxu0 0
      %3367 = vmatpush.bf16.msra.mxu0 0
      %3368 = vmatpush.bf16.msra.mxu0 0
      %3369 = vmatpush.bf16.msra.mxu0 0
      %3370 = vmatpush.bf16.msra.mxu0 0
      %3371 = vmatpush.bf16.msra.mxu0 %v3362
      %3372 = vmatmul.bf16.gmra.mxu0 %v3314
      %v3373 = vpop.f32.mrf.mxu0
      %v3374 = vadd.f32 %v3311, %v3373
      %v3375 = vpop.f32.mrf.mxu0
      %v3376 = vadd.f32 %v3311, %v3375
      %3377 = vmatmul.bf16.gmra.mxu0 %v3317
      %v3378 = vpop.f32.mrf.mxu0
      %v3379 = vadd.f32 %v3311, %v3378
      %v3380 = vpop.f32.mrf.mxu0
      %v3381 = vadd.f32 %v3311, %v3380
      %3382 = vmatmul.bf16.gmra.mxu0 %v3320
      %v3383 = vpop.f32.mrf.mxu0
      %v3384 = vadd.f32 %v3311, %v3383
      %v3385 = vpop.f32.mrf.mxu0
      %v3386 = vadd.f32 %v3311, %v3385
      %3387 = vmatmul.bf16.gmra.mxu0 %v3323
      %v3388 = vpop.f32.mrf.mxu0
      %v3389 = vadd.f32 %v3311, %v3388
      %v3390 = vpop.f32.mrf.mxu0
      %v3391 = vadd.f32 %v3311, %v3390
      %3392 = vmatmul.bf16.gmra.mxu0 %v3326
      %v3393 = vpop.f32.mrf.mxu0
      %v3394 = vadd.f32 %v3311, %v3393
      %v3395 = vpop.f32.mrf.mxu0
      %v3396 = vadd.f32 %v3311, %v3395
      %3397 = vmatmul.bf16.gmra.mxu0 %v3329
      %v3398 = vpop.f32.mrf.mxu0
      %v3399 = vadd.f32 %v3311, %v3398
      %v3400 = vpop.f32.mrf.mxu0
      %v3401 = vadd.f32 %v3311, %v3400
      %3402 = vmatmul.bf16.gmra.mxu0 %v3332
      %v3403 = vpop.f32.mrf.mxu0
      %v3404 = vadd.f32 %v3311, %v3403
      %v3405 = vpop.f32.mrf.mxu0
      %v3406 = vadd.f32 %v3311, %v3405
      %3407 = vmatmul.bf16.gmra.mxu0 %v3335
      %v3408 = vpop.f32.mrf.mxu0
      %v3409 = vadd.f32 %v3311, %v3408
      %v3410 = vpop.f32.mrf.mxu0
      %v3411 = vadd.f32 %v3311, %v3410
      %3412 = vmatmul.bf16.gmra.mxu0 %v3338
      %v3413 = vpop.f32.mrf.mxu0
      %v3414 = vadd.f32 %v3311, %v3413
      %v3415 = vpop.f32.mrf.mxu0
      %v3416 = vadd.f32 %v3311, %v3415
      %3417 = vmatmul.bf16.gmra.mxu0 %v3341
      %v3418 = vpop.f32.mrf.mxu0
      %v3419 = vadd.f32 %v3311, %v3418
      %v3420 = vpop.f32.mrf.mxu0
      %v3421 = vadd.f32 %v3311, %v3420
      %3422 = vmatmul.bf16.gmra.mxu0 %v3344
      %v3423 = vpop.f32.mrf.mxu0
      %v3424 = vadd.f32 %v3311, %v3423
      %v3425 = vpop.f32.mrf.mxu0
      %v3426 = vadd.f32 %v3311, %v3425
      %3427 = vmatmul.bf16.gmra.mxu0 %v3347
      %v3428 = vpop.f32.mrf.mxu0
      %v3429 = vadd.f32 %v3311, %v3428
      %v3430 = vpop.f32.mrf.mxu0
      %v3431 = vadd.f32 %v3311, %v3430
      %3432 = vmatmul.bf16.gmra.mxu0 %v3350
      %v3433 = vpop.f32.mrf.mxu0
      %v3434 = vadd.f32 %v3311, %v3433
      %v3435 = vpop.f32.mrf.mxu0
      %v3436 = vadd.f32 %v3311, %v3435
      %3437 = vmatmul.bf16.gmra.mxu0 %v3353
      %v3438 = vpop.f32.mrf.mxu0
      %v3439 = vadd.f32 %v3311, %v3438
      %v3440 = vpop.f32.mrf.mxu0
      %v3441 = vadd.f32 %v3311, %v3440
      %3442 = vmatmul.bf16.gmra.mxu0 %v3356
      %v3443 = vpop.f32.mrf.mxu0
      %v3444 = vadd.f32 %v3311, %v3443
      %v3445 = vpop.f32.mrf.mxu0
      %v3446 = vadd.f32 %v3311, %v3445
      %3447 = vmatmul.bf16.gmra.mxu0 %v3359
      %v3448 = vpop.f32.mrf.mxu0
      %v3449 = vadd.f32 %v3311, %v3448
      %v3450 = vpop.f32.mrf.mxu0
      %v3451 = vadd.f32 %v3311, %v3450
      %3452 = vdwg.mxu0
      %v3453 = vadd.f32 %v3374, %v280
      %v3454 = vadd.f32 %v3376, %v281
      %v3455 = vadd.f32 %v3379, %v282
      %v3456 = vadd.f32 %v3381, %v283
      %v3457 = vadd.f32 %v3384, %v284
      %v3458 = vadd.f32 %v3386, %v285
      %v3459 = vadd.f32 %v3389, %v286
      %v3460 = vadd.f32 %v3391, %v287
      %v3461 = vadd.f32 %v3394, %v288
      %v3462 = vadd.f32 %v3396, %v289
      %v3463 = vadd.f32 %v3399, %v290
      %v3464 = vadd.f32 %v3401, %v291
      %v3465 = vadd.f32 %v3404, %v292
      %v3466 = vadd.f32 %v3406, %v293
      %v3467 = vadd.f32 %v3409, %v294
      %v3468 = vadd.f32 %v3411, %v295
      %v3469 = vadd.f32 %v3414, %v296
      %v3470 = vadd.f32 %v3416, %v297
      %v3471 = vadd.f32 %v3419, %v298
      %v3472 = vadd.f32 %v3421, %v299
      %v3473 = vadd.f32 %v3424, %v300
      %v3474 = vadd.f32 %v3426, %v301
      %v3475 = vadd.f32 %v3429, %v302
      %v3476 = vadd.f32 %v3431, %v303
      %v3477 = vadd.f32 %v3434, %v304
      %v3478 = vadd.f32 %v3436, %v305
      %v3479 = vadd.f32 %v3439, %v306
      %v3480 = vadd.f32 %v3441, %v307
      %v3481 = vadd.f32 %v3444, %v308
      %v3482 = vadd.f32 %v3446, %v309
      %v3483 = vadd.f32 %v3449, %v310
      %v3484 = vadd.f32 %v3451, %v311
      %v3485 = vmax.f32 %v3453, 0.0
      %v3486 = vmax.f32 %v3454, 0.0
      %v3487 = vmax.f32 %v3455, 0.0
      %v3488 = vmax.f32 %v3456, 0.0
      %v3489 = vmax.f32 %v3457, 0.0
      %v3490 = vmax.f32 %v3458, 0.0
      %v3491 = vmax.f32 %v3459, 0.0
      %v3492 = vmax.f32 %v3460, 0.0
      %v3493 = vmax.f32 %v3461, 0.0
      %v3494 = vmax.f32 %v3462, 0.0
      %v3495 = vmax.f32 %v3463, 0.0
      %v3496 = vmax.f32 %v3464, 0.0
      %v3497 = vmax.f32 %v3465, 0.0
      %v3498 = vmax.f32 %v3466, 0.0
      %v3499 = vmax.f32 %v3467, 0.0
      %v3500 = vmax.f32 %v3468, 0.0
      %v3501 = vmax.f32 %v3469, 0.0
      %v3502 = vmax.f32 %v3470, 0.0
      %v3503 = vmax.f32 %v3471, 0.0
      %v3504 = vmax.f32 %v3472, 0.0
      %v3505 = vmax.f32 %v3473, 0.0
      %v3506 = vmax.f32 %v3474, 0.0
      %v3507 = vmax.f32 %v3475, 0.0
      %v3508 = vmax.f32 %v3476, 0.0
      %v3509 = vmax.f32 %v3477, 0.0
      %v3510 = vmax.f32 %v3478, 0.0
      %v3511 = vmax.f32 %v3479, 0.0
      %v3512 = vmax.f32 %v3480, 0.0
      %v3513 = vmax.f32 %v3481, 0.0
      %v3514 = vmax.f32 %v3482, 0.0
      %v3515 = vmax.f32 %v3483, 0.0
      %v3516 = vmax.f32 %v3484, 0.0
      %3517 = vst.msk [vmem:[%s278] sm:$0xff] %vm340, %v3485
      %3518 = vst.msk [vmem:[%s278 + $0x8] sm:$0xff] %vm340, %v3486
      %3519 = vst.msk [vmem:[%s278 + $0x10] sm:$0xff] %vm340, %v3487
      %3520 = vst.msk [vmem:[%s278 + $0x18] sm:$0xff] %vm340, %v3488
      %3521 = vst.msk [vmem:[%s278 + $0x20] sm:$0xff] %vm340, %v3489
      %3522 = vst.msk [vmem:[%s278 + $0x28] sm:$0xff] %vm340, %v3490
      %3523 = vst.msk [vmem:[%s278 + $0x30] sm:$0xff] %vm340, %v3491
      %3524 = vst.msk [vmem:[%s278 + $0x38] sm:$0xff] %vm340, %v3492
      %3525 = vst.msk [vmem:[%s278 + $0x40] sm:$0xff] %vm340, %v3493
      %3526 = vst.msk [vmem:[%s278 + $0x48] sm:$0xff] %vm340, %v3494
      %3527 = vst.msk [vmem:[%s278 + $0x50] sm:$0xff] %vm340, %v3495
      %3528 = vst.msk [vmem:[%s278 + $0x58] sm:$0xff] %vm340, %v3496
      %3529 = vst.msk [vmem:[%s278 + $0x60] sm:$0xff] %vm340, %v3497
      %3530 = vst.msk [vmem:[%s278 + $0x68] sm:$0xff] %vm340, %v3498
      %3531 = vst.msk [vmem:[%s278 + $0x70] sm:$0xff] %vm340, %v3499
      %3532 = vst.msk [vmem:[%s278 + $0x78] sm:$0xff] %vm340, %v3500
      %3533 = vst.msk [vmem:[%s278 + $0x80] sm:$0xff] %vm340, %v3501
      %3534 = vst.msk [vmem:[%s278 + $0x88] sm:$0xff] %vm340, %v3502
      %3535 = vst.msk [vmem:[%s278 + $0x90] sm:$0xff] %vm340, %v3503
      %3536 = vst.msk [vmem:[%s278 + $0x98] sm:$0xff] %vm340, %v3504
      %3537 = vst.msk [vmem:[%s278 + $0xa0] sm:$0xff] %vm340, %v3505
      %3538 = vst.msk [vmem:[%s278 + $0xa8] sm:$0xff] %vm340, %v3506
      %3539 = vst.msk [vmem:[%s278 + $0xb0] sm:$0xff] %vm340, %v3507
      %3540 = vst.msk [vmem:[%s278 + $0xb8] sm:$0xff] %vm340, %v3508
      %3541 = vst.msk [vmem:[%s278 + $0xc0] sm:$0xff] %vm340, %v3509
      %3542 = vst.msk [vmem:[%s278 + $0xc8] sm:$0xff] %vm340, %v3510
      %3543 = vst.msk [vmem:[%s278 + $0xd0] sm:$0xff] %vm340, %v3511
      %3544 = vst.msk [vmem:[%s278 + $0xd8] sm:$0xff] %vm340, %v3512
      %3545 = vst.msk [vmem:[%s278 + $0xe0] sm:$0xff] %vm340, %v3513
      %3546 = vst.msk [vmem:[%s278 + $0xe8] sm:$0xff] %vm340, %v3514
      %3547 = vst.msk [vmem:[%s278 + $0xf0] sm:$0xff] %vm340, %v3515
      %3548 = vst.msk [vmem:[%s278 + $0xf8] sm:$0xff] %vm340, %v3516
      %p3549 = scmp.lt.s32.totalorder %s18, 1
      %s3550 = scalar_select %p3549, %s18, 1
      %s3551 = smul.addr %s3550, 32
      %s3552 = smul.addr %s3551, 8
      %s3553 = scalar_lea.vmem %s7, %s3552
      // Predicated region
      $region49: #{bottleneck_block.1} parent=47 // pred_check
        %p3554 = pneg %p188
      $region50: #{bottleneck_block.1} parent=47 // pred_check_branch
        %3556 = sbr.rel (%p3554) target = $region52
      $region51: #{bottleneck_block.1} parent=47 // pred_region
        _
      $region52: #{bottleneck_block.1} parent=47 // pred_fallthru
        _
    $region48: #{bottleneck_block.1} parent=5 // pred_fallthru
      _
    %p3557 = scmp.le.s32.totalorder 2, %s13
    // Predicated region
    $region53: #{bottleneck_block.1} parent=5 // pred_check
      %p3558 = pneg %p3557
    $region54: #{bottleneck_block.1} parent=5 // pred_check_branch
      %3560 = sbr.rel (%p3558) target = $region56
    $region55: #{bottleneck_block.1} parent=5 // pred_region
      %s3561 = ssub.s32 %s13, 2
      // Predicated region
      $region57: #{bottleneck_block.1} parent=55 // pred_check
        %p3562 = pneg %p194
      $region58: #{bottleneck_block.1} parent=55 // pred_check_branch
        %3564 = sbr.rel (%p3562) target = $region60
      $region59: #{bottleneck_block.1} parent=55 // pred_region
        %p3565 = scmp.lt.s32.totalorder %s19, 1
        %s3566 = scalar_select %p3565, %s19, 1
        %s3567 = smul.addr %s3566, 32
        %s3568 = smul.addr %s3567, 8
        %s3569 = scalar_lea.vmem %s7, %s3568
      $region60: #{bottleneck_block.1} parent=55 // pred_fallthru
        _
    $region56: #{bottleneck_block.1} parent=5 // pred_fallthru
      _
  $region6: #{bottleneck_block.1} parent=0 // loop_footer
    %s17 = sadd.s32 1, %s13
  $region7: #{bottleneck_block.1} parent=0 // loop_footer_branch
    %12 = sbr.rel target = $region3
  $region8: #{bottleneck_block.1} parent=0 // loop_exit
    _

</llo_original>
